<compile_context>
chip_gen: v7x
topology: tpu7x:2x2x1
jax: 0.10.0
libtpu: 0.0.40
codegen_flags: <defaults>
</compile_context>

<pallas_src>
import math
import functools

import jax
import jax.numpy as jnp
import numpy as np
from jax.experimental import pallas as pl
from jax.experimental.pallas import tpu as pltpu


# ----------------------------------------------------------------------------
# Fused decoder-layer kernel
# ----------------------------------------------------------------------------

def _decoder_kernel(x_ref, mem_ref, pe_ref, msk_self_ref, msk_cross_ref,
                    aw_ref, ab_ref, w1_ref, fb1_ref, w2_ref, fb2_ref, nrm_ref,
                    o_ref, ctx_scr, *, num_heads):
    f32 = jnp.float32

    x = x_ref[...]                 # [N*T, E]   (batch folded into rows)
    mem = mem_ref[...]             # [N*S, E]
    pe = pe_ref[...]               # [N*T, E]
    msk_self = msk_self_ref[...]   # [N*T, N*T] additive block-diag mask (0 / -1e30)
    msk_cross = msk_cross_ref[...] # [N*T, N*S]
    aw = aw_ref[...]               # [3, E, 4E]  per attn: [wq/sqrt(hd) | wk | wv | wo]
    ab = ab_ref[...]               # [3, 4E]     per attn: [bq/sqrt(hd) | bk | bv | bo]
    w1 = w1_ref[...]               # [E, F]
    fb1 = fb1_ref[...]             # [1, F]
    w2 = w2_ref[...]               # [F, E]
    fb2 = fb2_ref[...]             # [1, E]
    nrm = nrm_ref[...]             # [8, E]      rows: g1,b1,g2,b2,g3,b3,g4,b4

    E = x.shape[-1]
    H = num_heads
    hd = E // H
    sqrt_e = math.sqrt(E)

    def attn(q_in, kv_in, idx, mask, fused_qkv):
        """MHA over batch-folded rows; cross-batch attention removed by `mask`."""
        w = aw[idx]                       # [E, 4E]  (static leading index)
        b = ab[idx:idx + 1]               # [1, 4E]
        if fused_qkv:                     # q = k = v input: one fused QKV matmul
            qkv = jnp.dot(q_in, w[:, :3 * E], preferred_element_type=f32) + b[:, :3 * E]
            q, k, v = qkv[:, :E], qkv[:, E:2 * E], qkv[:, 2 * E:3 * E]
        else:                             # cross attention: fused K/V matmul
            q = jnp.dot(q_in, w[:, :E], preferred_element_type=f32) + b[:, :E]
            kv = jnp.dot(kv_in, w[:, E:3 * E], preferred_element_type=f32) + b[:, E:3 * E]
            k, v = kv[:, :E], kv[:, E:]

        # Per-head scores / context (static hd-wide lane slices of q/k/v).
        for h in range(H):
            sl = slice(h * hd, (h + 1) * hd)
            s = jax.lax.dot_general(q[:, sl], k[:, sl], (((1,), (1,)), ((), ())),
                                    preferred_element_type=f32)      # [rows_q, rows_kv]
            s = s + mask
            s = s - jnp.max(s, axis=-1, keepdims=True)
            p = jnp.exp(s)
            p = p / jnp.sum(p, axis=-1, keepdims=True)                # exact softmax
            ctx_scr[:, sl] = jnp.dot(p, v[:, sl], preferred_element_type=f32)

        # Fused output projection: single K = H*hd = E contraction.
        return jnp.dot(ctx_scr[...], w[:, 3 * E:], preferred_element_type=f32) + b[:, 3 * E:]

    def add_norm(xv, yv, idx):
        """LayerNorm(x + y) over the embedding axis (eps = 1e-5)."""
        g = nrm[2 * idx:2 * idx + 1]      # [1, E]
        bb = nrm[2 * idx + 1:2 * idx + 2]
        z = xv + yv
        mu = jnp.mean(z, axis=-1, keepdims=True)
        var = jnp.mean((z - mu) ** 2, axis=-1, keepdims=True)
        return (z - mu) * jax.lax.rsqrt(var + 1e-5) * g + bb

    # 1. self attention + residual + norm1
    x = add_norm(x, attn(x, x, 0, msk_self, True), 0)
    # 2. positional attention (pos-encoded q = k = v) + residual + norm2
    xp = x * sqrt_e + pe
    x = add_norm(x, attn(xp, xp, 1, msk_self, True), 1)
    # 3. cross attention over memory + residual + norm3
    x = add_norm(x, attn(x, mem, 2, msk_cross, False), 2)
    # 4. feed-forward + residual + norm4
    h = jnp.maximum(jnp.dot(x, w1, preferred_element_type=f32) + fb1, 0.0)
    f = jnp.dot(h, w2, preferred_element_type=f32) + fb2
    x = add_norm(x, f, 3)

    o_ref[...] = x.astype(o_ref.dtype)    # single lane-dense [N*T, E] store


# ----------------------------------------------------------------------------
# Wrapper: pack weights, present batch-folded layouts, call the fused kernel
# ----------------------------------------------------------------------------

@functools.partial(jax.jit, static_argnames=("d_embed", "nhead"))
def decoder_layer(tgt, memory, params, d_embed, nhead):
    """tgt: [T, N, E], memory: [S, N, E]  (PyTorch seq-first convention)."""
    T, N, E = tgt.shape
    S = memory.shape[0]
    hd = E // nhead
    inv_s = jnp.float32(1.0 / math.sqrt(hd))

    # Batch-folded, lane-dense activation layouts (all reshapes outside the kernel).
    x2 = jnp.transpose(tgt.astype(jnp.float32), (1, 0, 2)).reshape(N * T, E)
    m2 = jnp.transpose(memory.astype(jnp.float32), (1, 0, 2)).reshape(N * S, E)
    pe2 = jnp.tile(params["pe"][:T].astype(jnp.float32), (N, 1))          # [N*T, E]

    # Block-diagonal additive masks: each batch element only attends to itself.
    qid = jnp.repeat(jnp.arange(N, dtype=jnp.int32), T)
    kid_t = jnp.repeat(jnp.arange(N, dtype=jnp.int32), T)
    kid_s = jnp.repeat(jnp.arange(N, dtype=jnp.int32), S)
    msk_self = jnp.where(qid[:, None] == kid_t[None, :], 0.0, -1e30).astype(jnp.float32)
    msk_cross = jnp.where(qid[:, None] == kid_s[None, :], 0.0, -1e30).astype(jnp.float32)

    # Pack per-attention weights: [wq/sqrt(hd) | wk | wv | wo], biases likewise.
    ws, bs = [], []
    for name in ("self_attn", "pos_attn", "inter_attn"):
        p = params[name]
        ws.append(jnp.concatenate([p["wq_t"] * inv_s, p["wk_t"], p["wv_t"], p["wo_t"]], axis=1))
        bs.append(jnp.concatenate([p["bq"] * inv_s, p["bk"], p["bv"], p["bo"]], axis=1))
    aw = jnp.stack(ws, axis=0)                     # [3, E, 4E]
    ab = jnp.concatenate(bs, axis=0)               # [3, 4E]
    nrm = jnp.concatenate(
        [jnp.concatenate([params[f"norm{i}"]["gamma"], params[f"norm{i}"]["beta"]], axis=0)
         for i in range(1, 5)], axis=0)            # [8, E]
    f = params["ffn"]

    vmem = pl.BlockSpec(memory_space=pltpu.MemorySpace.VMEM)
    out2 = pl.pallas_call(
        functools.partial(_decoder_kernel, num_heads=nhead),
        out_shape=jax.ShapeDtypeStruct((N * T, E), jnp.float32),
        in_specs=[vmem] * 12,
        out_specs=vmem,
        scratch_shapes=[pltpu.VMEM((N * T, E), jnp.float32)],
        # TODO(synk): when scaling to production sizes, add a ("parallel",) grid
        # over batch / query tiles (uses v7x's 2nd TensorCore) and budget the
        # resident working set against v7x's 64 MiB VMEM via vmem_limit_bytes;
        # also cast matmul operands to bf16 (f32 accumulate) for real shapes.
    )(x2, m2, pe2, msk_self, msk_cross, aw, ab,
      f["w1_t"], f["b1"], f["w2_t"], f["b2"], nrm)

    return jnp.transpose(out2.reshape(N, T, E), (1, 0, 2))                # [T, N, E]


# ----------------------------------------------------------------------------
# Parameter construction (deterministic, synthetic; pre-transposed: y = x @ W_t + b)
# ----------------------------------------------------------------------------

def make_pe_table(max_seq_len, d_embed):
    # Replicates the (quirky) PositionalEncoding.__init__ formula exactly.
    pe = np.zeros((max_seq_len, d_embed), np.float32)
    for pos in range(max_seq_len):
        for i in range(0, d_embed, 2):
            pe[pos, i] = math.sin(pos / 10000 ** (2 * i / d_embed))
            pe[pos, i + 1] = math.cos(pos / 10000 ** (2 * (i + 1) / d_embed))
    return jnp.asarray(pe)


def init_params(key, d_embed, dim_feedforward, max_seq_len):
    E, F = d_embed, dim_feedforward

    def w(k, shape, scale=0.1):
        return jax.random.normal(k, shape, jnp.float32) * scale

    def attn(k):
        ks = jax.random.split(k, 8)
        return dict(wq_t=w(ks[0], (E, E)), wk_t=w(ks[1], (E, E)), wv_t=w(ks[2], (E, E)),
                    bq=w(ks[3], (1, E)), bk=w(ks[4], (1, E)), bv=w(ks[5], (1, E)),
                    wo_t=w(ks[6], (E, E)), bo=w(ks[7], (1, E)))

    def ln():
        return dict(gamma=jnp.ones((1, E), jnp.float32),
                    beta=jnp.zeros((1, E), jnp.float32))

    ks = jax.random.split(key, 8)
    return dict(
        self_attn=attn(ks[0]),
        pos_attn=attn(ks[1]),
        inter_attn=attn(ks[2]),
        ffn=dict(w1_t=w(ks[3], (E, F)), b1=w(ks[4], (1, F)),
                 w2_t=w(ks[5], (F, E)), b2=w(ks[6], (1, E))),
        norm1=ln(), norm2=ln(), norm3=ln(), norm4=ln(),
        pe=make_pe_table(max_seq_len, E),
    )


# ----------------------------------------------------------------------------
# Pure-JAX reference (standard MHA math, for correctness check)
# ----------------------------------------------------------------------------

def _ref_mha(q, kv, p, num_heads):
    N, T, E = q.shape
    S = kv.shape[1]
    hd = E // num_heads
    qp = q @ p["wq_t"] + p["bq"]
    kp = kv @ p["wk_t"] + p["bk"]
    vp = kv @ p["wv_t"] + p["bv"]
    qh = qp.reshape(N, T, num_heads, hd).transpose(0, 2, 1, 3) / math.sqrt(hd)
    kh = kp.reshape(N, S, num_heads, hd).transpose(0, 2, 1, 3)
    vh = vp.reshape(N, S, num_heads, hd).transpose(0, 2, 1, 3)
    s = jnp.einsum("nhtd,nhsd->nhts", qh, kh)
    pr = jax.nn.softmax(s, axis=-1)
    ctx = jnp.einsum("nhts,nhsd->nhtd", pr, vh).transpose(0, 2, 1, 3).reshape(N, T, E)
    return ctx @ p["wo_t"] + p["bo"]


def _ref_ln(z, p):
    mean = jnp.mean(z, axis=-1, keepdims=True)
    var = jnp.mean((z - mean) ** 2, axis=-1, keepdims=True)
    return (z - mean) / jnp.sqrt(var + 1e-5) * p["gamma"] + p["beta"]


def ref_decoder_layer(tgt, memory, params, d_embed, nhead):
    T = tgt.shape[0]
    x = jnp.transpose(tgt, (1, 0, 2))
    mem = jnp.transpose(memory, (1, 0, 2))
    x = _ref_ln(x + _ref_mha(x, x, params["self_attn"], nhead), params["norm1"])
    xp = x * math.sqrt(d_embed) + params["pe"][:T]
    x = _ref_ln(x + _ref_mha(xp, xp, params["pos_attn"], nhead), params["norm2"])
    x = _ref_ln(x + _ref_mha(x, mem, params["inter_attn"], nhead), params["norm3"])
    f = jnp.maximum(x @ params["ffn"]["w1_t"] + params["ffn"]["b1"], 0.0)
    f = f @ params["ffn"]["w2_t"] + params["ffn"]["b2"]
    x = _ref_ln(x + f, params["norm4"])
    return jnp.transpose(x, (1, 0, 2))


# ----------------------------------------------------------------------------
# Main
# ----------------------------------------------------------------------------

if __name__ == "__main__":
    d_embed = 32
    nhead = 4
    dim_feedforward = 64
    max_seq_len = 16
    T, S, N = 8, 8, 2

    key = jax.random.PRNGKey(0)
    k_p, k_t, k_m = jax.random.split(key, 3)
    params = init_params(k_p, d_embed, dim_feedforward, max_seq_len)

    tgt = jax.random.normal(k_t, (T, N, d_embed), jnp.float32)      # [T, N, E]
    memory = jax.random.normal(k_m, (S, N, d_embed), jnp.float32)   # [S, N, E]

    out = decoder_layer(tgt, memory, params, d_embed, nhead)
    out = jax.block_until_ready(out)

    ref = jax.block_until_ready(ref_decoder_layer(tgt, memory, params, d_embed, nhead))
    assert out.shape == (T, N, d_embed), out.shape
    # Tightened tolerance vs. previous version (exact softmax divide, all-f32 math).
    np.testing.assert_allclose(np.asarray(out), np.asarray(ref), rtol=2e-4, atol=2e-4)

    print("KERNEL_OK")
</pallas_src>

<mosaic_0001>
module attributes {stable_mosaic.version = 11 : i64} {
  func.func @_decoder_kernel(%arg0: memref<16x32xf32, #tpu.memory_space<vmem>>, %arg1: memref<16x32xf32, #tpu.memory_space<vmem>>, %arg2: memref<16x32xf32, #tpu.memory_space<vmem>>, %arg3: memref<16x16xf32, #tpu.memory_space<vmem>>, %arg4: memref<16x16xf32, #tpu.memory_space<vmem>>, %arg5: memref<3x32x128xf32, #tpu.memory_space<vmem>>, %arg6: memref<3x128xf32, #tpu.memory_space<vmem>>, %arg7: memref<32x64xf32, #tpu.memory_space<vmem>>, %arg8: memref<1x64xf32, #tpu.memory_space<vmem>>, %arg9: memref<64x32xf32, #tpu.memory_space<vmem>>, %arg10: memref<1x32xf32, #tpu.memory_space<vmem>>, %arg11: memref<8x32xf32, #tpu.memory_space<vmem>>, %arg12: memref<16x32xf32, #tpu.memory_space<vmem>>, %arg13: memref<16x32xf32, #tpu.memory_space<vmem>>) attributes {dimension_semantics = [], scalar_prefetch = 0 : i64, scratch_operands = 1 : i64, tpu.core_type = #tpu.core_type<tc>} {
    %c0 = arith.constant 0 : index
    %c0_0 = arith.constant 0 : index
    %0 = vector.load %arg0[%c0, %c0_0] : memref<16x32xf32, #tpu.memory_space<vmem>>, vector<16x32xf32>
    %c0_1 = arith.constant 0 : index
    %c0_2 = arith.constant 0 : index
    %1 = vector.load %arg1[%c0_1, %c0_2] : memref<16x32xf32, #tpu.memory_space<vmem>>, vector<16x32xf32>
    %c0_3 = arith.constant 0 : index
    %c0_4 = arith.constant 0 : index
    %2 = vector.load %arg2[%c0_3, %c0_4] : memref<16x32xf32, #tpu.memory_space<vmem>>, vector<16x32xf32>
    %c0_5 = arith.constant 0 : index
    %c0_6 = arith.constant 0 : index
    %3 = vector.load %arg3[%c0_5, %c0_6] : memref<16x16xf32, #tpu.memory_space<vmem>>, vector<16x16xf32>
    %c0_7 = arith.constant 0 : index
    %c0_8 = arith.constant 0 : index
    %4 = vector.load %arg4[%c0_7, %c0_8] : memref<16x16xf32, #tpu.memory_space<vmem>>, vector<16x16xf32>
    %c0_9 = arith.constant 0 : index
    %c0_10 = arith.constant 0 : index
    %c0_11 = arith.constant 0 : index
    %5 = vector.load %arg5[%c0_9, %c0_10, %c0_11] : memref<3x32x128xf32, #tpu.memory_space<vmem>>, vector<3x32x128xf32>
    %c0_12 = arith.constant 0 : index
    %c0_13 = arith.constant 0 : index
    %6 = vector.load %arg6[%c0_12, %c0_13] : memref<3x128xf32, #tpu.memory_space<vmem>>, vector<3x128xf32>
    %c0_14 = arith.constant 0 : index
    %c0_15 = arith.constant 0 : index
    %7 = vector.load %arg7[%c0_14, %c0_15] : memref<32x64xf32, #tpu.memory_space<vmem>>, vector<32x64xf32>
    %c0_16 = arith.constant 0 : index
    %c0_17 = arith.constant 0 : index
    %8 = vector.load %arg8[%c0_16, %c0_17] : memref<1x64xf32, #tpu.memory_space<vmem>>, vector<1x64xf32>
    %c0_18 = arith.constant 0 : index
    %c0_19 = arith.constant 0 : index
    %9 = vector.load %arg9[%c0_18, %c0_19] : memref<64x32xf32, #tpu.memory_space<vmem>>, vector<64x32xf32>
    %c0_20 = arith.constant 0 : index
    %c0_21 = arith.constant 0 : index
    %10 = vector.load %arg10[%c0_20, %c0_21] : memref<1x32xf32, #tpu.memory_space<vmem>>, vector<1x32xf32>
    %c0_22 = arith.constant 0 : index
    %c0_23 = arith.constant 0 : index
    %11 = vector.load %arg11[%c0_22, %c0_23] : memref<8x32xf32, #tpu.memory_space<vmem>>, vector<8x32xf32>
    %12 = vector.extract_strided_slice %5 {offsets = [0, 0, 0], sizes = [1, 32, 128], strides = [1, 1, 1]} : vector<3x32x128xf32> to vector<1x32x128xf32>
    %13 = vector.shape_cast %12 : vector<1x32x128xf32> to vector<32x128xf32>
    %14 = vector.extract_strided_slice %6 {offsets = [0, 0], sizes = [1, 128], strides = [1, 1]} : vector<3x128xf32> to vector<1x128xf32>
    %15 = vector.extract_strided_slice %13 {offsets = [0, 0], sizes = [32, 96], strides = [1, 1]} : vector<32x128xf32> to vector<32x96xf32>
    %cst = arith.constant dense<0.000000e+00> : vector<16x96xf32>
    %16 = tpu.matmul %0, %15, %cst {dimension_numbers = #tpu.dot_dimension_numbers<[1], [0], [0], [1], [0, 0, 1, 1], [], []>} : vector<16x32xf32>, vector<32x96xf32>, vector<16x96xf32> -> vector<16x96xf32>
    %17 = vector.extract_strided_slice %14 {offsets = [0, 0], sizes = [1, 96], strides = [1, 1]} : vector<1x128xf32> to vector<1x96xf32>
    %18 = vector.broadcast %17 : vector<1x96xf32> to vector<16x96xf32>
    %19 = arith.addf %16, %18 : vector<16x96xf32>
    %20 = vector.extract_strided_slice %19 {offsets = [0, 0], sizes = [16, 32], strides = [1, 1]} : vector<16x96xf32> to vector<16x32xf32>
    %21 = vector.extract_strided_slice %19 {offsets = [0, 32], sizes = [16, 32], strides = [1, 1]} : vector<16x96xf32> to vector<16x32xf32>
    %22 = vector.extract_strided_slice %19 {offsets = [0, 64], sizes = [16, 32], strides = [1, 1]} : vector<16x96xf32> to vector<16x32xf32>
    %23 = vector.extract_strided_slice %20 {offsets = [0, 0], sizes = [16, 8], strides = [1, 1]} : vector<16x32xf32> to vector<16x8xf32>
    %24 = vector.extract_strided_slice %21 {offsets = [0, 0], sizes = [16, 8], strides = [1, 1]} : vector<16x32xf32> to vector<16x8xf32>
    %cst_24 = arith.constant dense<0.000000e+00> : vector<16x16xf32>
    %25 = tpu.matmul %23, %24, %cst_24 {dimension_numbers = #tpu.dot_dimension_numbers<[1], [1], [0], [0], [0, 0, 1, 0], [], []>} : vector<16x8xf32>, vector<16x8xf32>, vector<16x16xf32> -> vector<16x16xf32>
    %26 = arith.addf %25, %3 : vector<16x16xf32>
    %cst_25 = arith.constant dense<0xFF800000> : vector<16xf32>
    %27 = vector.multi_reduction <maximumf>, %26, %cst_25 [1] : vector<16x16xf32> to vector<16xf32>
    %28 = vector.shape_cast %27 : vector<16xf32> to vector<16x1xf32>
    %29 = vector.broadcast %28 : vector<16x1xf32> to vector<16x16xf32>
    %30 = arith.subf %26, %29 : vector<16x16xf32>
    %31 = math.exp %30 : vector<16x16xf32>
    %cst_26 = arith.constant dense<0.000000e+00> : vector<16xf32>
    %32 = vector.multi_reduction <add>, %31, %cst_26 [1] : vector<16x16xf32> to vector<16xf32>
    %33 = vector.shape_cast %32 : vector<16xf32> to vector<16x1xf32>
    %34 = vector.broadcast %33 : vector<16x1xf32> to vector<16x16xf32>
    %35 = arith.divf %31, %34 : vector<16x16xf32>
    %36 = vector.extract_strided_slice %22 {offsets = [0, 0], sizes = [16, 8], strides = [1, 1]} : vector<16x32xf32> to vector<16x8xf32>
    %cst_27 = arith.constant dense<0.000000e+00> : vector<16x8xf32>
    %37 = tpu.matmul %35, %36, %cst_27 {dimension_numbers = #tpu.dot_dimension_numbers<[1], [0], [0], [1], [0, 0, 1, 1], [], []>} : vector<16x16xf32>, vector<16x8xf32>, vector<16x8xf32> -> vector<16x8xf32>
    %c0_28 = arith.constant 0 : index
    %c0_29 = arith.constant 0 : index
    %38 = vector.load %arg13[%c0_28, %c0_29] : memref<16x32xf32, #tpu.memory_space<vmem>>, vector<16x8xf32>
    tpu.vector_store %arg13[%c0_28, %c0_29], %37 {strides = array<i32>} : memref<16x32xf32, #tpu.memory_space<vmem>>, vector<16x8xf32>,
    %39 = vector.extract_strided_slice %20 {offsets = [0, 8], sizes = [16, 8], strides = [1, 1]} : vector<16x32xf32> to vector<16x8xf32>
    %40 = vector.extract_strided_slice %21 {offsets = [0, 8], sizes = [16, 8], strides = [1, 1]} : vector<16x32xf32> to vector<16x8xf32>
    %cst_30 = arith.constant dense<0.000000e+00> : vector<16x16xf32>
    %41 = tpu.matmul %39, %40, %cst_30 {dimension_numbers = #tpu.dot_dimension_numbers<[1], [1], [0], [0], [0, 0, 1, 0], [], []>} : vector<16x8xf32>, vector<16x8xf32>, vector<16x16xf32> -> vector<16x16xf32>
    %42 = arith.addf %41, %3 : vector<16x16xf32>
    %cst_31 = arith.constant dense<0xFF800000> : vector<16xf32>
    %43 = vector.multi_reduction <maximumf>, %42, %cst_31 [1] : vector<16x16xf32> to vector<16xf32>
    %44 = vector.shape_cast %43 : vector<16xf32> to vector<16x1xf32>
    %45 = vector.broadcast %44 : vector<16x1xf32> to vector<16x16xf32>
    %46 = arith.subf %42, %45 : vector<16x16xf32>
    %47 = math.exp %46 : vector<16x16xf32>
    %cst_32 = arith.constant dense<0.000000e+00> : vector<16xf32>
    %48 = vector.multi_reduction <add>, %47, %cst_32 [1] : vector<16x16xf32> to vector<16xf32>
    %49 = vector.shape_cast %48 : vector<16xf32> to vector<16x1xf32>
    %50 = vector.broadcast %49 : vector<16x1xf32> to vector<16x16xf32>
    %51 = arith.divf %47, %50 : vector<16x16xf32>
    %52 = vector.extract_strided_slice %22 {offsets = [0, 8], sizes = [16, 8], strides = [1, 1]} : vector<16x32xf32> to vector<16x8xf32>
    %cst_33 = arith.constant dense<0.000000e+00> : vector<16x8xf32>
    %53 = tpu.matmul %51, %52, %cst_33 {dimension_numbers = #tpu.dot_dimension_numbers<[1], [0], [0], [1], [0, 0, 1, 1], [], []>} : vector<16x16xf32>, vector<16x8xf32>, vector<16x8xf32> -> vector<16x8xf32>
    %c0_34 = arith.constant 0 : index
    %c8 = arith.constant 8 : index
    %54 = vector.load %arg13[%c0_34, %c8] : memref<16x32xf32, #tpu.memory_space<vmem>>, vector<16x8xf32>
    tpu.vector_store %arg13[%c0_34, %c8], %53 {strides = array<i32>} : memref<16x32xf32, #tpu.memory_space<vmem>>, vector<16x8xf32>,
    %55 = vector.extract_strided_slice %20 {offsets = [0, 16], sizes = [16, 8], strides = [1, 1]} : vector<16x32xf32> to vector<16x8xf32>
    %56 = vector.extract_strided_slice %21 {offsets = [0, 16], sizes = [16, 8], strides = [1, 1]} : vector<16x32xf32> to vector<16x8xf32>
    %cst_35 = arith.constant dense<0.000000e+00> : vector<16x16xf32>
    %57 = tpu.matmul %55, %56, %cst_35 {dimension_numbers = #tpu.dot_dimension_numbers<[1], [1], [0], [0], [0, 0, 1, 0], [], []>} : vector<16x8xf32>, vector<16x8xf32>, vector<16x16xf32> -> vector<16x16xf32>
    %58 = arith.addf %57, %3 : vector<16x16xf32>
    %cst_36 = arith.constant dense<0xFF800000> : vector<16xf32>
    %59 = vector.multi_reduction <maximumf>, %58, %cst_36 [1] : vector<16x16xf32> to vector<16xf32>
    %60 = vector.shape_cast %59 : vector<16xf32> to vector<16x1xf32>
    %61 = vector.broadcast %60 : vector<16x1xf32> to vector<16x16xf32>
    %62 = arith.subf %58, %61 : vector<16x16xf32>
    %63 = math.exp %62 : vector<16x16xf32>
    %cst_37 = arith.constant dense<0.000000e+00> : vector<16xf32>
    %64 = vector.multi_reduction <add>, %63, %cst_37 [1] : vector<16x16xf32> to vector<16xf32>
    %65 = vector.shape_cast %64 : vector<16xf32> to vector<16x1xf32>
    %66 = vector.broadcast %65 : vector<16x1xf32> to vector<16x16xf32>
    %67 = arith.divf %63, %66 : vector<16x16xf32>
    %68 = vector.extract_strided_slice %22 {offsets = [0, 16], sizes = [16, 8], strides = [1, 1]} : vector<16x32xf32> to vector<16x8xf32>
    %cst_38 = arith.constant dense<0.000000e+00> : vector<16x8xf32>
    %69 = tpu.matmul %67, %68, %cst_38 {dimension_numbers = #tpu.dot_dimension_numbers<[1], [0], [0], [1], [0, 0, 1, 1], [], []>} : vector<16x16xf32>, vector<16x8xf32>, vector<16x8xf32> -> vector<16x8xf32>
    %c0_39 = arith.constant 0 : index
    %c16 = arith.constant 16 : index
    %70 = vector.load %arg13[%c0_39, %c16] : memref<16x32xf32, #tpu.memory_space<vmem>>, vector<16x8xf32>
    tpu.vector_store %arg13[%c0_39, %c16], %69 {strides = array<i32>} : memref<16x32xf32, #tpu.memory_space<vmem>>, vector<16x8xf32>,
    %71 = vector.extract_strided_slice %20 {offsets = [0, 24], sizes = [16, 8], strides = [1, 1]} : vector<16x32xf32> to vector<16x8xf32>
    %72 = vector.extract_strided_slice %21 {offsets = [0, 24], sizes = [16, 8], strides = [1, 1]} : vector<16x32xf32> to vector<16x8xf32>
    %cst_40 = arith.constant dense<0.000000e+00> : vector<16x16xf32>
    %73 = tpu.matmul %71, %72, %cst_40 {dimension_numbers = #tpu.dot_dimension_numbers<[1], [1], [0], [0], [0, 0, 1, 0], [], []>} : vector<16x8xf32>, vector<16x8xf32>, vector<16x16xf32> -> vector<16x16xf32>
    %74 = arith.addf %73, %3 : vector<16x16xf32>
    %cst_41 = arith.constant dense<0xFF800000> : vector<16xf32>
    %75 = vector.multi_reduction <maximumf>, %74, %cst_41 [1] : vector<16x16xf32> to vector<16xf32>
    %76 = vector.shape_cast %75 : vector<16xf32> to vector<16x1xf32>
    %77 = vector.broadcast %76 : vector<16x1xf32> to vector<16x16xf32>
    %78 = arith.subf %74, %77 : vector<16x16xf32>
    %79 = math.exp %78 : vector<16x16xf32>
    %cst_42 = arith.constant dense<0.000000e+00> : vector<16xf32>
    %80 = vector.multi_reduction <add>, %79, %cst_42 [1] : vector<16x16xf32> to vector<16xf32>
    %81 = vector.shape_cast %80 : vector<16xf32> to vector<16x1xf32>
    %82 = vector.broadcast %81 : vector<16x1xf32> to vector<16x16xf32>
    %83 = arith.divf %79, %82 : vector<16x16xf32>
    %84 = vector.extract_strided_slice %22 {offsets = [0, 24], sizes = [16, 8], strides = [1, 1]} : vector<16x32xf32> to vector<16x8xf32>
    %cst_43 = arith.constant dense<0.000000e+00> : vector<16x8xf32>
    %85 = tpu.matmul %83, %84, %cst_43 {dimension_numbers = #tpu.dot_dimension_numbers<[1], [0], [0], [1], [0, 0, 1, 1], [], []>} : vector<16x16xf32>, vector<16x8xf32>, vector<16x8xf32> -> vector<16x8xf32>
    %c0_44 = arith.constant 0 : index
    %c24 = arith.constant 24 : index
    %86 = vector.load %arg13[%c0_44, %c24] : memref<16x32xf32, #tpu.memory_space<vmem>>, vector<16x8xf32>
    tpu.vector_store %arg13[%c0_44, %c24], %85 {strides = array<i32>} : memref<16x32xf32, #tpu.memory_space<vmem>>, vector<16x8xf32>,
    %c0_45 = arith.constant 0 : index
    %c0_46 = arith.constant 0 : index
    %87 = vector.load %arg13[%c0_45, %c0_46] : memref<16x32xf32, #tpu.memory_space<vmem>>, vector<16x32xf32>
    %88 = vector.extract_strided_slice %13 {offsets = [0, 96], sizes = [32, 32], strides = [1, 1]} : vector<32x128xf32> to vector<32x32xf32>
    %cst_47 = arith.constant dense<0.000000e+00> : vector<16x32xf32>
    %89 = tpu.matmul %87, %88, %cst_47 {dimension_numbers = #tpu.dot_dimension_numbers<[1], [0], [0], [1], [0, 0, 1, 1], [], []>} : vector<16x32xf32>, vector<32x32xf32>, vector<16x32xf32> -> vector<16x32xf32>
    %90 = vector.extract_strided_slice %14 {offsets = [0, 96], sizes = [1, 32], strides = [1, 1]} : vector<1x128xf32> to vector<1x32xf32>
    %91 = vector.broadcast %90 : vector<1x32xf32> to vector<16x32xf32>
    %92 = arith.addf %89, %91 : vector<16x32xf32>
    %93 = vector.extract_strided_slice %11 {offsets = [0, 0], sizes = [1, 32], strides = [1, 1]} : vector<8x32xf32> to vector<1x32xf32>
    %94 = vector.extract_strided_slice %11 {offsets = [1, 0], sizes = [1, 32], strides = [1, 1]} : vector<8x32xf32> to vector<1x32xf32>
    %95 = arith.addf %0, %92 : vector<16x32xf32>
    %cst_48 = arith.constant dense<0.000000e+00> : vector<16xf32>
    %96 = vector.multi_reduction <add>, %95, %cst_48 [1] : vector<16x32xf32> to vector<16xf32>
    %97 = vector.shape_cast %96 : vector<16xf32> to vector<16x1xf32>
    %cst_49 = arith.constant 3.200000e+01 : f32
    %98 = vector.broadcast %cst_49 : f32 to vector<16x1xf32>
    %99 = arith.divf %97, %98 : vector<16x1xf32>
    %100 = vector.broadcast %99 : vector<16x1xf32> to vector<16x32xf32>
    %101 = arith.subf %95, %100 : vector<16x32xf32>
    %102 = arith.mulf %101, %101 : vector<16x32xf32>
    %cst_50 = arith.constant dense<0.000000e+00> : vector<16xf32>
    %103 = vector.multi_reduction <add>, %102, %cst_50 [1] : vector<16x32xf32> to vector<16xf32>
    %104 = vector.shape_cast %103 : vector<16xf32> to vector<16x1xf32>
    %cst_51 = arith.constant 3.200000e+01 : f32
    %105 = vector.broadcast %cst_51 : f32 to vector<16x1xf32>
    %106 = arith.divf %104, %105 : vector<16x1xf32>
    %107 = vector.broadcast %99 : vector<16x1xf32> to vector<16x32xf32>
    %108 = arith.subf %95, %107 : vector<16x32xf32>
    %cst_52 = arith.constant 9.99999974E-6 : f32
    %109 = vector.broadcast %cst_52 : f32 to vector<16x1xf32>
    %110 = arith.addf %106, %109 : vector<16x1xf32>
    %111 = math.rsqrt %110 : vector<16x1xf32>
    %112 = vector.broadcast %111 : vector<16x1xf32> to vector<16x32xf32>
    %113 = arith.mulf %108, %112 : vector<16x32xf32>
    %114 = vector.broadcast %93 : vector<1x32xf32> to vector<16x32xf32>
    %115 = arith.mulf %113, %114 : vector<16x32xf32>
    %116 = vector.broadcast %94 : vector<1x32xf32> to vector<16x32xf32>
    %117 = arith.addf %115, %116 : vector<16x32xf32>
    %cst_53 = arith.constant 5.65685415 : f32
    %118 = vector.broadcast %cst_53 : f32 to vector<16x32xf32>
    %119 = arith.mulf %117, %118 : vector<16x32xf32>
    %120 = arith.addf %119, %2 : vector<16x32xf32>
    %121 = vector.extract_strided_slice %5 {offsets = [1, 0, 0], sizes = [1, 32, 128], strides = [1, 1, 1]} : vector<3x32x128xf32> to vector<1x32x128xf32>
    %122 = vector.shape_cast %121 : vector<1x32x128xf32> to vector<32x128xf32>
    %123 = vector.extract_strided_slice %6 {offsets = [1, 0], sizes = [1, 128], strides = [1, 1]} : vector<3x128xf32> to vector<1x128xf32>
    %124 = vector.extract_strided_slice %122 {offsets = [0, 0], sizes = [32, 96], strides = [1, 1]} : vector<32x128xf32> to vector<32x96xf32>
    %cst_54 = arith.constant dense<0.000000e+00> : vector<16x96xf32>
    %125 = tpu.matmul %120, %124, %cst_54 {dimension_numbers = #tpu.dot_dimension_numbers<[1], [0], [0], [1], [0, 0, 1, 1], [], []>} : vector<16x32xf32>, vector<32x96xf32>, vector<16x96xf32> -> vector<16x96xf32>
    %126 = vector.extract_strided_slice %123 {offsets = [0, 0], sizes = [1, 96], strides = [1, 1]} : vector<1x128xf32> to vector<1x96xf32>
    %127 = vector.broadcast %126 : vector<1x96xf32> to vector<16x96xf32>
    %128 = arith.addf %125, %127 : vector<16x96xf32>
    %129 = vector.extract_strided_slice %128 {offsets = [0, 0], sizes = [16, 32], strides = [1, 1]} : vector<16x96xf32> to vector<16x32xf32>
    %130 = vector.extract_strided_slice %128 {offsets = [0, 32], sizes = [16, 32], strides = [1, 1]} : vector<16x96xf32> to vector<16x32xf32>
    %131 = vector.extract_strided_slice %128 {offsets = [0, 64], sizes = [16, 32], strides = [1, 1]} : vector<16x96xf32> to vector<16x32xf32>
    %132 = vector.extract_strided_slice %129 {offsets = [0, 0], sizes = [16, 8], strides = [1, 1]} : vector<16x32xf32> to vector<16x8xf32>
    %133 = vector.extract_strided_slice %130 {offsets = [0, 0], sizes = [16, 8], strides = [1, 1]} : vector<16x32xf32> to vector<16x8xf32>
    %cst_55 = arith.constant dense<0.000000e+00> : vector<16x16xf32>
    %134 = tpu.matmul %132, %133, %cst_55 {dimension_numbers = #tpu.dot_dimension_numbers<[1], [1], [0], [0], [0, 0, 1, 0], [], []>} : vector<16x8xf32>, vector<16x8xf32>, vector<16x16xf32> -> vector<16x16xf32>
    %135 = arith.addf %134, %3 : vector<16x16xf32>
    %cst_56 = arith.constant dense<0xFF800000> : vector<16xf32>
    %136 = vector.multi_reduction <maximumf>, %135, %cst_56 [1] : vector<16x16xf32> to vector<16xf32>
    %137 = vector.shape_cast %136 : vector<16xf32> to vector<16x1xf32>
    %138 = vector.broadcast %137 : vector<16x1xf32> to vector<16x16xf32>
    %139 = arith.subf %135, %138 : vector<16x16xf32>
    %140 = math.exp %139 : vector<16x16xf32>
    %cst_57 = arith.constant dense<0.000000e+00> : vector<16xf32>
    %141 = vector.multi_reduction <add>, %140, %cst_57 [1] : vector<16x16xf32> to vector<16xf32>
    %142 = vector.shape_cast %141 : vector<16xf32> to vector<16x1xf32>
    %143 = vector.broadcast %142 : vector<16x1xf32> to vector<16x16xf32>
    %144 = arith.divf %140, %143 : vector<16x16xf32>
    %145 = vector.extract_strided_slice %131 {offsets = [0, 0], sizes = [16, 8], strides = [1, 1]} : vector<16x32xf32> to vector<16x8xf32>
    %cst_58 = arith.constant dense<0.000000e+00> : vector<16x8xf32>
    %146 = tpu.matmul %144, %145, %cst_58 {dimension_numbers = #tpu.dot_dimension_numbers<[1], [0], [0], [1], [0, 0, 1, 1], [], []>} : vector<16x16xf32>, vector<16x8xf32>, vector<16x8xf32> -> vector<16x8xf32>
    %c0_59 = arith.constant 0 : index
    %c0_60 = arith.constant 0 : index
    %147 = vector.load %arg13[%c0_59, %c0_60] : memref<16x32xf32, #tpu.memory_space<vmem>>, vector<16x8xf32>
    tpu.vector_store %arg13[%c0_59, %c0_60], %146 {strides = array<i32>} : memref<16x32xf32, #tpu.memory_space<vmem>>, vector<16x8xf32>,
    %148 = vector.extract_strided_slice %129 {offsets = [0, 8], sizes = [16, 8], strides = [1, 1]} : vector<16x32xf32> to vector<16x8xf32>
    %149 = vector.extract_strided_slice %130 {offsets = [0, 8], sizes = [16, 8], strides = [1, 1]} : vector<16x32xf32> to vector<16x8xf32>
    %cst_61 = arith.constant dense<0.000000e+00> : vector<16x16xf32>
    %150 = tpu.matmul %148, %149, %cst_61 {dimension_numbers = #tpu.dot_dimension_numbers<[1], [1], [0], [0], [0, 0, 1, 0], [], []>} : vector<16x8xf32>, vector<16x8xf32>, vector<16x16xf32> -> vector<16x16xf32>
    %151 = arith.addf %150, %3 : vector<16x16xf32>
    %cst_62 = arith.constant dense<0xFF800000> : vector<16xf32>
    %152 = vector.multi_reduction <maximumf>, %151, %cst_62 [1] : vector<16x16xf32> to vector<16xf32>
    %153 = vector.shape_cast %152 : vector<16xf32> to vector<16x1xf32>
    %154 = vector.broadcast %153 : vector<16x1xf32> to vector<16x16xf32>
    %155 = arith.subf %151, %154 : vector<16x16xf32>
    %156 = math.exp %155 : vector<16x16xf32>
    %cst_63 = arith.constant dense<0.000000e+00> : vector<16xf32>
    %157 = vector.multi_reduction <add>, %156, %cst_63 [1] : vector<16x16xf32> to vector<16xf32>
    %158 = vector.shape_cast %157 : vector<16xf32> to vector<16x1xf32>
    %159 = vector.broadcast %158 : vector<16x1xf32> to vector<16x16xf32>
    %160 = arith.divf %156, %159 : vector<16x16xf32>
    %161 = vector.extract_strided_slice %131 {offsets = [0, 8], sizes = [16, 8], strides = [1, 1]} : vector<16x32xf32> to vector<16x8xf32>
    %cst_64 = arith.constant dense<0.000000e+00> : vector<16x8xf32>
    %162 = tpu.matmul %160, %161, %cst_64 {dimension_numbers = #tpu.dot_dimension_numbers<[1], [0], [0], [1], [0, 0, 1, 1], [], []>} : vector<16x16xf32>, vector<16x8xf32>, vector<16x8xf32> -> vector<16x8xf32>
    %c0_65 = arith.constant 0 : index
    %c8_66 = arith.constant 8 : index
    %163 = vector.load %arg13[%c0_65, %c8_66] : memref<16x32xf32, #tpu.memory_space<vmem>>, vector<16x8xf32>
    tpu.vector_store %arg13[%c0_65, %c8_66], %162 {strides = array<i32>} : memref<16x32xf32, #tpu.memory_space<vmem>>, vector<16x8xf32>,
    %164 = vector.extract_strided_slice %129 {offsets = [0, 16], sizes = [16, 8], strides = [1, 1]} : vector<16x32xf32> to vector<16x8xf32>
    %165 = vector.extract_strided_slice %130 {offsets = [0, 16], sizes = [16, 8], strides = [1, 1]} : vector<16x32xf32> to vector<16x8xf32>
    %cst_67 = arith.constant dense<0.000000e+00> : vector<16x16xf32>
    %166 = tpu.matmul %164, %165, %cst_67 {dimension_numbers = #tpu.dot_dimension_numbers<[1], [1], [0], [0], [0, 0, 1, 0], [], []>} : vector<16x8xf32>, vector<16x8xf32>, vector<16x16xf32> -> vector<16x16xf32>
    %167 = arith.addf %166, %3 : vector<16x16xf32>
    %cst_68 = arith.constant dense<0xFF800000> : vector<16xf32>
    %168 = vector.multi_reduction <maximumf>, %167, %cst_68 [1] : vector<16x16xf32> to vector<16xf32>
    %169 = vector.shape_cast %168 : vector<16xf32> to vector<16x1xf32>
    %170 = vector.broadcast %169 : vector<16x1xf32> to vector<16x16xf32>
    %171 = arith.subf %167, %170 : vector<16x16xf32>
    %172 = math.exp %171 : vector<16x16xf32>
    %cst_69 = arith.constant dense<0.000000e+00> : vector<16xf32>
    %173 = vector.multi_reduction <add>, %172, %cst_69 [1] : vector<16x16xf32> to vector<16xf32>
    %174 = vector.shape_cast %173 : vector<16xf32> to vector<16x1xf32>
    %175 = vector.broadcast %174 : vector<16x1xf32> to vector<16x16xf32>
    %176 = arith.divf %172, %175 : vector<16x16xf32>
    %177 = vector.extract_strided_slice %131 {offsets = [0, 16], sizes = [16, 8], strides = [1, 1]} : vector<16x32xf32> to vector<16x8xf32>
    %cst_70 = arith.constant dense<0.000000e+00> : vector<16x8xf32>
    %178 = tpu.matmul %176, %177, %cst_70 {dimension_numbers = #tpu.dot_dimension_numbers<[1], [0], [0], [1], [0, 0, 1, 1], [], []>} : vector<16x16xf32>, vector<16x8xf32>, vector<16x8xf32> -> vector<16x8xf32>
    %c0_71 = arith.constant 0 : index
    %c16_72 = arith.constant 16 : index
    %179 = vector.load %arg13[%c0_71, %c16_72] : memref<16x32xf32, #tpu.memory_space<vmem>>, vector<16x8xf32>
    tpu.vector_store %arg13[%c0_71, %c16_72], %178 {strides = array<i32>} : memref<16x32xf32, #tpu.memory_space<vmem>>, vector<16x8xf32>,
    %180 = vector.extract_strided_slice %129 {offsets = [0, 24], sizes = [16, 8], strides = [1, 1]} : vector<16x32xf32> to vector<16x8xf32>
    %181 = vector.extract_strided_slice %130 {offsets = [0, 24], sizes = [16, 8], strides = [1, 1]} : vector<16x32xf32> to vector<16x8xf32>
    %cst_73 = arith.constant dense<0.000000e+00> : vector<16x16xf32>
    %182 = tpu.matmul %180, %181, %cst_73 {dimension_numbers = #tpu.dot_dimension_numbers<[1], [1], [0], [0], [0, 0, 1, 0], [], []>} : vector<16x8xf32>, vector<16x8xf32>, vector<16x16xf32> -> vector<16x16xf32>
    %183 = arith.addf %182, %3 : vector<16x16xf32>
    %cst_74 = arith.constant dense<0xFF800000> : vector<16xf32>
    %184 = vector.multi_reduction <maximumf>, %183, %cst_74 [1] : vector<16x16xf32> to vector<16xf32>
    %185 = vector.shape_cast %184 : vector<16xf32> to vector<16x1xf32>
    %186 = vector.broadcast %185 : vector<16x1xf32> to vector<16x16xf32>
    %187 = arith.subf %183, %186 : vector<16x16xf32>
    %188 = math.exp %187 : vector<16x16xf32>
    %cst_75 = arith.constant dense<0.000000e+00> : vector<16xf32>
    %189 = vector.multi_reduction <add>, %188, %cst_75 [1] : vector<16x16xf32> to vector<16xf32>
    %190 = vector.shape_cast %189 : vector<16xf32> to vector<16x1xf32>
    %191 = vector.broadcast %190 : vector<16x1xf32> to vector<16x16xf32>
    %192 = arith.divf %188, %191 : vector<16x16xf32>
    %193 = vector.extract_strided_slice %131 {offsets = [0, 24], sizes = [16, 8], strides = [1, 1]} : vector<16x32xf32> to vector<16x8xf32>
    %cst_76 = arith.constant dense<0.000000e+00> : vector<16x8xf32>
    %194 = tpu.matmul %192, %193, %cst_76 {dimension_numbers = #tpu.dot_dimension_numbers<[1], [0], [0], [1], [0, 0, 1, 1], [], []>} : vector<16x16xf32>, vector<16x8xf32>, vector<16x8xf32> -> vector<16x8xf32>
    %c0_77 = arith.constant 0 : index
    %c24_78 = arith.constant 24 : index
    %195 = vector.load %arg13[%c0_77, %c24_78] : memref<16x32xf32, #tpu.memory_space<vmem>>, vector<16x8xf32>
    tpu.vector_store %arg13[%c0_77, %c24_78], %194 {strides = array<i32>} : memref<16x32xf32, #tpu.memory_space<vmem>>, vector<16x8xf32>,
    %c0_79 = arith.constant 0 : index
    %c0_80 = arith.constant 0 : index
    %196 = vector.load %arg13[%c0_79, %c0_80] : memref<16x32xf32, #tpu.memory_space<vmem>>, vector<16x32xf32>
    %197 = vector.extract_strided_slice %122 {offsets = [0, 96], sizes = [32, 32], strides = [1, 1]} : vector<32x128xf32> to vector<32x32xf32>
    %cst_81 = arith.constant dense<0.000000e+00> : vector<16x32xf32>
    %198 = tpu.matmul %196, %197, %cst_81 {dimension_numbers = #tpu.dot_dimension_numbers<[1], [0], [0], [1], [0, 0, 1, 1], [], []>} : vector<16x32xf32>, vector<32x32xf32>, vector<16x32xf32> -> vector<16x32xf32>
    %199 = vector.extract_strided_slice %123 {offsets = [0, 96], sizes = [1, 32], strides = [1, 1]} : vector<1x128xf32> to vector<1x32xf32>
    %200 = vector.broadcast %199 : vector<1x32xf32> to vector<16x32xf32>
    %201 = arith.addf %198, %200 : vector<16x32xf32>
    %202 = vector.extract_strided_slice %11 {offsets = [2, 0], sizes = [1, 32], strides = [1, 1]} : vector<8x32xf32> to vector<1x32xf32>
    %203 = vector.extract_strided_slice %11 {offsets = [3, 0], sizes = [1, 32], strides = [1, 1]} : vector<8x32xf32> to vector<1x32xf32>
    %204 = arith.addf %117, %201 : vector<16x32xf32>
    %cst_82 = arith.constant dense<0.000000e+00> : vector<16xf32>
    %205 = vector.multi_reduction <add>, %204, %cst_82 [1] : vector<16x32xf32> to vector<16xf32>
    %206 = vector.shape_cast %205 : vector<16xf32> to vector<16x1xf32>
    %cst_83 = arith.constant 3.200000e+01 : f32
    %207 = vector.broadcast %cst_83 : f32 to vector<16x1xf32>
    %208 = arith.divf %206, %207 : vector<16x1xf32>
    %209 = vector.broadcast %208 : vector<16x1xf32> to vector<16x32xf32>
    %210 = arith.subf %204, %209 : vector<16x32xf32>
    %211 = arith.mulf %210, %210 : vector<16x32xf32>
    %cst_84 = arith.constant dense<0.000000e+00> : vector<16xf32>
    %212 = vector.multi_reduction <add>, %211, %cst_84 [1] : vector<16x32xf32> to vector<16xf32>
    %213 = vector.shape_cast %212 : vector<16xf32> to vector<16x1xf32>
    %cst_85 = arith.constant 3.200000e+01 : f32
    %214 = vector.broadcast %cst_85 : f32 to vector<16x1xf32>
    %215 = arith.divf %213, %214 : vector<16x1xf32>
    %216 = vector.broadcast %208 : vector<16x1xf32> to vector<16x32xf32>
    %217 = arith.subf %204, %216 : vector<16x32xf32>
    %cst_86 = arith.constant 9.99999974E-6 : f32
    %218 = vector.broadcast %cst_86 : f32 to vector<16x1xf32>
    %219 = arith.addf %215, %218 : vector<16x1xf32>
    %220 = math.rsqrt %219 : vector<16x1xf32>
    %221 = vector.broadcast %220 : vector<16x1xf32> to vector<16x32xf32>
    %222 = arith.mulf %217, %221 : vector<16x32xf32>
    %223 = vector.broadcast %202 : vector<1x32xf32> to vector<16x32xf32>
    %224 = arith.mulf %222, %223 : vector<16x32xf32>
    %225 = vector.broadcast %203 : vector<1x32xf32> to vector<16x32xf32>
    %226 = arith.addf %224, %225 : vector<16x32xf32>
    %227 = vector.extract_strided_slice %5 {offsets = [2, 0, 0], sizes = [1, 32, 128], strides = [1, 1, 1]} : vector<3x32x128xf32> to vector<1x32x128xf32>
    %228 = vector.shape_cast %227 : vector<1x32x128xf32> to vector<32x128xf32>
    %229 = vector.extract_strided_slice %6 {offsets = [2, 0], sizes = [1, 128], strides = [1, 1]} : vector<3x128xf32> to vector<1x128xf32>
    %230 = vector.extract_strided_slice %228 {offsets = [0, 0], sizes = [32, 32], strides = [1, 1]} : vector<32x128xf32> to vector<32x32xf32>
    %cst_87 = arith.constant dense<0.000000e+00> : vector<16x32xf32>
    %231 = tpu.matmul %226, %230, %cst_87 {dimension_numbers = #tpu.dot_dimension_numbers<[1], [0], [0], [1], [0, 0, 1, 1], [], []>} : vector<16x32xf32>, vector<32x32xf32>, vector<16x32xf32> -> vector<16x32xf32>
    %232 = vector.extract_strided_slice %229 {offsets = [0, 0], sizes = [1, 32], strides = [1, 1]} : vector<1x128xf32> to vector<1x32xf32>
    %233 = vector.broadcast %232 : vector<1x32xf32> to vector<16x32xf32>
    %234 = arith.addf %231, %233 : vector<16x32xf32>
    %235 = vector.extract_strided_slice %228 {offsets = [0, 32], sizes = [32, 64], strides = [1, 1]} : vector<32x128xf32> to vector<32x64xf32>
    %cst_88 = arith.constant dense<0.000000e+00> : vector<16x64xf32>
    %236 = tpu.matmul %1, %235, %cst_88 {dimension_numbers = #tpu.dot_dimension_numbers<[1], [0], [0], [1], [0, 0, 1, 1], [], []>} : vector<16x32xf32>, vector<32x64xf32>, vector<16x64xf32> -> vector<16x64xf32>
    %237 = vector.extract_strided_slice %229 {offsets = [0, 32], sizes = [1, 64], strides = [1, 1]} : vector<1x128xf32> to vector<1x64xf32>
    %238 = vector.broadcast %237 : vector<1x64xf32> to vector<16x64xf32>
    %239 = arith.addf %236, %238 : vector<16x64xf32>
    %240 = vector.extract_strided_slice %239 {offsets = [0, 0], sizes = [16, 32], strides = [1, 1]} : vector<16x64xf32> to vector<16x32xf32>
    %241 = vector.extract_strided_slice %239 {offsets = [0, 32], sizes = [16, 32], strides = [1, 1]} : vector<16x64xf32> to vector<16x32xf32>
    %242 = vector.extract_strided_slice %234 {offsets = [0, 0], sizes = [16, 8], strides = [1, 1]} : vector<16x32xf32> to vector<16x8xf32>
    %243 = vector.extract_strided_slice %240 {offsets = [0, 0], sizes = [16, 8], strides = [1, 1]} : vector<16x32xf32> to vector<16x8xf32>
    %cst_89 = arith.constant dense<0.000000e+00> : vector<16x16xf32>
    %244 = tpu.matmul %242, %243, %cst_89 {dimension_numbers = #tpu.dot_dimension_numbers<[1], [1], [0], [0], [0, 0, 1, 0], [], []>} : vector<16x8xf32>, vector<16x8xf32>, vector<16x16xf32> -> vector<16x16xf32>
    %245 = arith.addf %244, %4 : vector<16x16xf32>
    %cst_90 = arith.constant dense<0xFF800000> : vector<16xf32>
    %246 = vector.multi_reduction <maximumf>, %245, %cst_90 [1] : vector<16x16xf32> to vector<16xf32>
    %247 = vector.shape_cast %246 : vector<16xf32> to vector<16x1xf32>
    %248 = vector.broadcast %247 : vector<16x1xf32> to vector<16x16xf32>
    %249 = arith.subf %245, %248 : vector<16x16xf32>
    %250 = math.exp %249 : vector<16x16xf32>
    %cst_91 = arith.constant dense<0.000000e+00> : vector<16xf32>
    %251 = vector.multi_reduction <add>, %250, %cst_91 [1] : vector<16x16xf32> to vector<16xf32>
    %252 = vector.shape_cast %251 : vector<16xf32> to vector<16x1xf32>
    %253 = vector.broadcast %252 : vector<16x1xf32> to vector<16x16xf32>
    %254 = arith.divf %250, %253 : vector<16x16xf32>
    %255 = vector.extract_strided_slice %241 {offsets = [0, 0], sizes = [16, 8], strides = [1, 1]} : vector<16x32xf32> to vector<16x8xf32>
    %cst_92 = arith.constant dense<0.000000e+00> : vector<16x8xf32>
    %256 = tpu.matmul %254, %255, %cst_92 {dimension_numbers = #tpu.dot_dimension_numbers<[1], [0], [0], [1], [0, 0, 1, 1], [], []>} : vector<16x16xf32>, vector<16x8xf32>, vector<16x8xf32> -> vector<16x8xf32>
    %c0_93 = arith.constant 0 : index
    %c0_94 = arith.constant 0 : index
    %257 = vector.load %arg13[%c0_93, %c0_94] : memref<16x32xf32, #tpu.memory_space<vmem>>, vector<16x8xf32>
    tpu.vector_store %arg13[%c0_93, %c0_94], %256 {strides = array<i32>} : memref<16x32xf32, #tpu.memory_space<vmem>>, vector<16x8xf32>,
    %258 = vector.extract_strided_slice %234 {offsets = [0, 8], sizes = [16, 8], strides = [1, 1]} : vector<16x32xf32> to vector<16x8xf32>
    %259 = vector.extract_strided_slice %240 {offsets = [0, 8], sizes = [16, 8], strides = [1, 1]} : vector<16x32xf32> to vector<16x8xf32>
    %cst_95 = arith.constant dense<0.000000e+00> : vector<16x16xf32>
    %260 = tpu.matmul %258, %259, %cst_95 {dimension_numbers = #tpu.dot_dimension_numbers<[1], [1], [0], [0], [0, 0, 1, 0], [], []>} : vector<16x8xf32>, vector<16x8xf32>, vector<16x16xf32> -> vector<16x16xf32>
    %261 = arith.addf %260, %4 : vector<16x16xf32>
    %cst_96 = arith.constant dense<0xFF800000> : vector<16xf32>
    %262 = vector.multi_reduction <maximumf>, %261, %cst_96 [1] : vector<16x16xf32> to vector<16xf32>
    %263 = vector.shape_cast %262 : vector<16xf32> to vector<16x1xf32>
    %264 = vector.broadcast %263 : vector<16x1xf32> to vector<16x16xf32>
    %265 = arith.subf %261, %264 : vector<16x16xf32>
    %266 = math.exp %265 : vector<16x16xf32>
    %cst_97 = arith.constant dense<0.000000e+00> : vector<16xf32>
    %267 = vector.multi_reduction <add>, %266, %cst_97 [1] : vector<16x16xf32> to vector<16xf32>
    %268 = vector.shape_cast %267 : vector<16xf32> to vector<16x1xf32>
    %269 = vector.broadcast %268 : vector<16x1xf32> to vector<16x16xf32>
    %270 = arith.divf %266, %269 : vector<16x16xf32>
    %271 = vector.extract_strided_slice %241 {offsets = [0, 8], sizes = [16, 8], strides = [1, 1]} : vector<16x32xf32> to vector<16x8xf32>
    %cst_98 = arith.constant dense<0.000000e+00> : vector<16x8xf32>
    %272 = tpu.matmul %270, %271, %cst_98 {dimension_numbers = #tpu.dot_dimension_numbers<[1], [0], [0], [1], [0, 0, 1, 1], [], []>} : vector<16x16xf32>, vector<16x8xf32>, vector<16x8xf32> -> vector<16x8xf32>
    %c0_99 = arith.constant 0 : index
    %c8_100 = arith.constant 8 : index
    %273 = vector.load %arg13[%c0_99, %c8_100] : memref<16x32xf32, #tpu.memory_space<vmem>>, vector<16x8xf32>
    tpu.vector_store %arg13[%c0_99, %c8_100], %272 {strides = array<i32>} : memref<16x32xf32, #tpu.memory_space<vmem>>, vector<16x8xf32>,
    %274 = vector.extract_strided_slice %234 {offsets = [0, 16], sizes = [16, 8], strides = [1, 1]} : vector<16x32xf32> to vector<16x8xf32>
    %275 = vector.extract_strided_slice %240 {offsets = [0, 16], sizes = [16, 8], strides = [1, 1]} : vector<16x32xf32> to vector<16x8xf32>
    %cst_101 = arith.constant dense<0.000000e+00> : vector<16x16xf32>
    %276 = tpu.matmul %274, %275, %cst_101 {dimension_numbers = #tpu.dot_dimension_numbers<[1], [1], [0], [0], [0, 0, 1, 0], [], []>} : vector<16x8xf32>, vector<16x8xf32>, vector<16x16xf32> -> vector<16x16xf32>
    %277 = arith.addf %276, %4 : vector<16x16xf32>
    %cst_102 = arith.constant dense<0xFF800000> : vector<16xf32>
    %278 = vector.multi_reduction <maximumf>, %277, %cst_102 [1] : vector<16x16xf32> to vector<16xf32>
    %279 = vector.shape_cast %278 : vector<16xf32> to vector<16x1xf32>
    %280 = vector.broadcast %279 : vector<16x1xf32> to vector<16x16xf32>
    %281 = arith.subf %277, %280 : vector<16x16xf32>
    %282 = math.exp %281 : vector<16x16xf32>
    %cst_103 = arith.constant dense<0.000000e+00> : vector<16xf32>
    %283 = vector.multi_reduction <add>, %282, %cst_103 [1] : vector<16x16xf32> to vector<16xf32>
    %284 = vector.shape_cast %283 : vector<16xf32> to vector<16x1xf32>
    %285 = vector.broadcast %284 : vector<16x1xf32> to vector<16x16xf32>
    %286 = arith.divf %282, %285 : vector<16x16xf32>
    %287 = vector.extract_strided_slice %241 {offsets = [0, 16], sizes = [16, 8], strides = [1, 1]} : vector<16x32xf32> to vector<16x8xf32>
    %cst_104 = arith.constant dense<0.000000e+00> : vector<16x8xf32>
    %288 = tpu.matmul %286, %287, %cst_104 {dimension_numbers = #tpu.dot_dimension_numbers<[1], [0], [0], [1], [0, 0, 1, 1], [], []>} : vector<16x16xf32>, vector<16x8xf32>, vector<16x8xf32> -> vector<16x8xf32>
    %c0_105 = arith.constant 0 : index
    %c16_106 = arith.constant 16 : index
    %289 = vector.load %arg13[%c0_105, %c16_106] : memref<16x32xf32, #tpu.memory_space<vmem>>, vector<16x8xf32>
    tpu.vector_store %arg13[%c0_105, %c16_106], %288 {strides = array<i32>} : memref<16x32xf32, #tpu.memory_space<vmem>>, vector<16x8xf32>,
    %290 = vector.extract_strided_slice %234 {offsets = [0, 24], sizes = [16, 8], strides = [1, 1]} : vector<16x32xf32> to vector<16x8xf32>
    %291 = vector.extract_strided_slice %240 {offsets = [0, 24], sizes = [16, 8], strides = [1, 1]} : vector<16x32xf32> to vector<16x8xf32>
    %cst_107 = arith.constant dense<0.000000e+00> : vector<16x16xf32>
    %292 = tpu.matmul %290, %291, %cst_107 {dimension_numbers = #tpu.dot_dimension_numbers<[1], [1], [0], [0], [0, 0, 1, 0], [], []>} : vector<16x8xf32>, vector<16x8xf32>, vector<16x16xf32> -> vector<16x16xf32>
    %293 = arith.addf %292, %4 : vector<16x16xf32>
    %cst_108 = arith.constant dense<0xFF800000> : vector<16xf32>
    %294 = vector.multi_reduction <maximumf>, %293, %cst_108 [1] : vector<16x16xf32> to vector<16xf32>
    %295 = vector.shape_cast %294 : vector<16xf32> to vector<16x1xf32>
    %296 = vector.broadcast %295 : vector<16x1xf32> to vector<16x16xf32>
    %297 = arith.subf %293, %296 : vector<16x16xf32>
    %298 = math.exp %297 : vector<16x16xf32>
    %cst_109 = arith.constant dense<0.000000e+00> : vector<16xf32>
    %299 = vector.multi_reduction <add>, %298, %cst_109 [1] : vector<16x16xf32> to vector<16xf32>
    %300 = vector.shape_cast %299 : vector<16xf32> to vector<16x1xf32>
    %301 = vector.broadcast %300 : vector<16x1xf32> to vector<16x16xf32>
    %302 = arith.divf %298, %301 : vector<16x16xf32>
    %303 = vector.extract_strided_slice %241 {offsets = [0, 24], sizes = [16, 8], strides = [1, 1]} : vector<16x32xf32> to vector<16x8xf32>
    %cst_110 = arith.constant dense<0.000000e+00> : vector<16x8xf32>
    %304 = tpu.matmul %302, %303, %cst_110 {dimension_numbers = #tpu.dot_dimension_numbers<[1], [0], [0], [1], [0, 0, 1, 1], [], []>} : vector<16x16xf32>, vector<16x8xf32>, vector<16x8xf32> -> vector<16x8xf32>
    %c0_111 = arith.constant 0 : index
    %c24_112 = arith.constant 24 : index
    %305 = vector.load %arg13[%c0_111, %c24_112] : memref<16x32xf32, #tpu.memory_space<vmem>>, vector<16x8xf32>
    tpu.vector_store %arg13[%c0_111, %c24_112], %304 {strides = array<i32>} : memref<16x32xf32, #tpu.memory_space<vmem>>, vector<16x8xf32>,
    %c0_113 = arith.constant 0 : index
    %c0_114 = arith.constant 0 : index
    %306 = vector.load %arg13[%c0_113, %c0_114] : memref<16x32xf32, #tpu.memory_space<vmem>>, vector<16x32xf32>
    %307 = vector.extract_strided_slice %228 {offsets = [0, 96], sizes = [32, 32], strides = [1, 1]} : vector<32x128xf32> to vector<32x32xf32>
    %cst_115 = arith.constant dense<0.000000e+00> : vector<16x32xf32>
    %308 = tpu.matmul %306, %307, %cst_115 {dimension_numbers = #tpu.dot_dimension_numbers<[1], [0], [0], [1], [0, 0, 1, 1], [], []>} : vector<16x32xf32>, vector<32x32xf32>, vector<16x32xf32> -> vector<16x32xf32>
    %309 = vector.extract_strided_slice %229 {offsets = [0, 96], sizes = [1, 32], strides = [1, 1]} : vector<1x128xf32> to vector<1x32xf32>
    %310 = vector.broadcast %309 : vector<1x32xf32> to vector<16x32xf32>
    %311 = arith.addf %308, %310 : vector<16x32xf32>
    %312 = vector.extract_strided_slice %11 {offsets = [4, 0], sizes = [1, 32], strides = [1, 1]} : vector<8x32xf32> to vector<1x32xf32>
    %313 = vector.extract_strided_slice %11 {offsets = [5, 0], sizes = [1, 32], strides = [1, 1]} : vector<8x32xf32> to vector<1x32xf32>
    %314 = arith.addf %226, %311 : vector<16x32xf32>
    %cst_116 = arith.constant dense<0.000000e+00> : vector<16xf32>
    %315 = vector.multi_reduction <add>, %314, %cst_116 [1] : vector<16x32xf32> to vector<16xf32>
    %316 = vector.shape_cast %315 : vector<16xf32> to vector<16x1xf32>
    %cst_117 = arith.constant 3.200000e+01 : f32
    %317 = vector.broadcast %cst_117 : f32 to vector<16x1xf32>
    %318 = arith.divf %316, %317 : vector<16x1xf32>
    %319 = vector.broadcast %318 : vector<16x1xf32> to vector<16x32xf32>
    %320 = arith.subf %314, %319 : vector<16x32xf32>
    %321 = arith.mulf %320, %320 : vector<16x32xf32>
    %cst_118 = arith.constant dense<0.000000e+00> : vector<16xf32>
    %322 = vector.multi_reduction <add>, %321, %cst_118 [1] : vector<16x32xf32> to vector<16xf32>
    %323 = vector.shape_cast %322 : vector<16xf32> to vector<16x1xf32>
    %cst_119 = arith.constant 3.200000e+01 : f32
    %324 = vector.broadcast %cst_119 : f32 to vector<16x1xf32>
    %325 = arith.divf %323, %324 : vector<16x1xf32>
    %326 = vector.broadcast %318 : vector<16x1xf32> to vector<16x32xf32>
    %327 = arith.subf %314, %326 : vector<16x32xf32>
    %cst_120 = arith.constant 9.99999974E-6 : f32
    %328 = vector.broadcast %cst_120 : f32 to vector<16x1xf32>
    %329 = arith.addf %325, %328 : vector<16x1xf32>
    %330 = math.rsqrt %329 : vector<16x1xf32>
    %331 = vector.broadcast %330 : vector<16x1xf32> to vector<16x32xf32>
    %332 = arith.mulf %327, %331 : vector<16x32xf32>
    %333 = vector.broadcast %312 : vector<1x32xf32> to vector<16x32xf32>
    %334 = arith.mulf %332, %333 : vector<16x32xf32>
    %335 = vector.broadcast %313 : vector<1x32xf32> to vector<16x32xf32>
    %336 = arith.addf %334, %335 : vector<16x32xf32>
    %cst_121 = arith.constant dense<0.000000e+00> : vector<16x64xf32>
    %337 = tpu.matmul %336, %7, %cst_121 {dimension_numbers = #tpu.dot_dimension_numbers<[1], [0], [0], [1], [0, 0, 1, 1], [], []>} : vector<16x32xf32>, vector<32x64xf32>, vector<16x64xf32> -> vector<16x64xf32>
    %338 = vector.broadcast %8 : vector<1x64xf32> to vector<16x64xf32>
    %339 = arith.addf %337, %338 : vector<16x64xf32>
    %cst_122 = arith.constant 0.000000e+00 : f32
    %340 = vector.broadcast %cst_122 : f32 to vector<16x64xf32>
    %341 = arith.maximumf %339, %340 : vector<16x64xf32>
    %cst_123 = arith.constant dense<0.000000e+00> : vector<16x32xf32>
    %342 = tpu.matmul %341, %9, %cst_123 {dimension_numbers = #tpu.dot_dimension_numbers<[1], [0], [0], [1], [0, 0, 1, 1], [], []>} : vector<16x64xf32>, vector<64x32xf32>, vector<16x32xf32> -> vector<16x32xf32>
    %343 = vector.broadcast %10 : vector<1x32xf32> to vector<16x32xf32>
    %344 = arith.addf %342, %343 : vector<16x32xf32>
    %345 = vector.extract_strided_slice %11 {offsets = [6, 0], sizes = [1, 32], strides = [1, 1]} : vector<8x32xf32> to vector<1x32xf32>
    %346 = vector.extract_strided_slice %11 {offsets = [7, 0], sizes = [1, 32], strides = [1, 1]} : vector<8x32xf32> to vector<1x32xf32>
    %347 = arith.addf %336, %344 : vector<16x32xf32>
    %cst_124 = arith.constant dense<0.000000e+00> : vector<16xf32>
    %348 = vector.multi_reduction <add>, %347, %cst_124 [1] : vector<16x32xf32> to vector<16xf32>
    %349 = vector.shape_cast %348 : vector<16xf32> to vector<16x1xf32>
    %cst_125 = arith.constant 3.200000e+01 : f32
    %350 = vector.broadcast %cst_125 : f32 to vector<16x1xf32>
    %351 = arith.divf %349, %350 : vector<16x1xf32>
    %352 = vector.broadcast %351 : vector<16x1xf32> to vector<16x32xf32>
    %353 = arith.subf %347, %352 : vector<16x32xf32>
    %354 = arith.mulf %353, %353 : vector<16x32xf32>
    %cst_126 = arith.constant dense<0.000000e+00> : vector<16xf32>
    %355 = vector.multi_reduction <add>, %354, %cst_126 [1] : vector<16x32xf32> to vector<16xf32>
    %356 = vector.shape_cast %355 : vector<16xf32> to vector<16x1xf32>
    %cst_127 = arith.constant 3.200000e+01 : f32
    %357 = vector.broadcast %cst_127 : f32 to vector<16x1xf32>
    %358 = arith.divf %356, %357 : vector<16x1xf32>
    %359 = vector.broadcast %351 : vector<16x1xf32> to vector<16x32xf32>
    %360 = arith.subf %347, %359 : vector<16x32xf32>
    %cst_128 = arith.constant 9.99999974E-6 : f32
    %361 = vector.broadcast %cst_128 : f32 to vector<16x1xf32>
    %362 = arith.addf %358, %361 : vector<16x1xf32>
    %363 = math.rsqrt %362 : vector<16x1xf32>
    %364 = vector.broadcast %363 : vector<16x1xf32> to vector<16x32xf32>
    %365 = arith.mulf %360, %364 : vector<16x32xf32>
    %366 = vector.broadcast %345 : vector<1x32xf32> to vector<16x32xf32>
    %367 = arith.mulf %365, %366 : vector<16x32xf32>
    %368 = vector.broadcast %346 : vector<1x32xf32> to vector<16x32xf32>
    %369 = arith.addf %367, %368 : vector<16x32xf32>
    %c0_129 = arith.constant 0 : index
    %c0_130 = arith.constant 0 : index
    %370 = vector.load %arg12[%c0_129, %c0_130] : memref<16x32xf32, #tpu.memory_space<vmem>>, vector<16x32xf32>
    tpu.vector_store %arg12[%c0_129, %c0_130], %369 {strides = array<i32>} : memref<16x32xf32, #tpu.memory_space<vmem>>, vector<16x32xf32>,
    return
  }
}

</mosaic_0001>

<llo_original>
// kernel: eq.15
$region0: #{eq.15}
  %s0 = inlined_call_operand.vmem [shape: s32[2,8], index: 0, kind: input, shape index: {}]
  %s1 = inlined_call_operand.vmem [shape: s32[16], index: 1, kind: output, shape index: {}]
  $region1: #{eq.15} parent=0
    #allocation0 [shape = 'u8[4096]{0}', space=vmem, size = 0x1000, scoped, tag = 'scoped mem for output reshape']
    #allocation1 [shape = 'u8[4096]{0}', space=vmem, size = 0x1000, scoped, tag = 'scoped mem for input reshape']
    %s3 = sshllo.u32 0, 2
    %v4 = vld [vmem:[%s0] sm:%s3]
    %5 = vst [vmem:[#allocation1] sm:%s3] %v4
    %v6 = vld [vmem:[#allocation1] sm:$0x1]
    %vm7 = vcmask 64512
    %8 = vst.msk [vmem:[#allocation0] sm:$0x1] %vm7, %v6
    %s9 = scalar_lea.vmem [#allocation1], 1
    %v10 = vld [vmem:[%s9] sm:$0x1]
    %11 = vrot.lane.b32.xlu0 %v10, 8
    %v12 = vpop.permute.xlu0 %11
    %vm13 = vcmask 130112
    %14 = vst.msk [vmem:[#allocation0] sm:$0x1] %vm13, %v12
    %s16 = sshllo.u32 0, 1
    %v18 = vld [vmem:[#allocation0] sm:%s16]
    %s19 = sshllo.u32 0, 1
    %20 = vst [vmem:[%s1] sm:%s19] %v18

// kernel: decoder_layer.1
$region0: #{decoder_layer.1}
  #allocation0 [shape = 'u32[]', space=smem, size = 0x4, offset = 0x4, fixed_abs, tag = 'smem constant byte address 0x4 - core index']
  #allocation1 [shape = 'u32[144,128]{1,0:T(1,128)}', space=vmem, size = 0x12000, scoped, tag = 'internal scratch']
  #allocation2 [shape = 'f32[16,32]{1,0:T(8,128)}', space=vmem, size = 0x2000, scoped, tag = 'scratch operand']
  %s0 = inlined_call_operand.vmem [shape: f32[16,32], index: 0, kind: input, shape index: {}]
  %s1 = inlined_call_operand.vmem [shape: f32[16,32], index: 1, kind: input, shape index: {}]
  %s2 = inlined_call_operand.vmem [shape: f32[16,32], index: 2, kind: input, shape index: {}]
  %s3 = inlined_call_operand.vmem [shape: f32[16,16], index: 3, kind: input, shape index: {}, may-alias: {3,4}]
  %s4 = inlined_call_operand.vmem [shape: f32[16,16], index: 4, kind: input, shape index: {}, may-alias: {3,4}]
  %s5 = inlined_call_operand.vmem [shape: f32[3,32,128], index: 5, kind: input, shape index: {}]
  %s6 = inlined_call_operand.vmem [shape: f32[3,128], index: 6, kind: input, shape index: {}]
  %s7 = inlined_call_operand.vmem [shape: f32[32,64], index: 7, kind: input, shape index: {}]
  %s8 = inlined_call_operand.vmem [shape: f32[1,64], index: 8, kind: input, shape index: {}]
  %s9 = inlined_call_operand.vmem [shape: f32[64,32], index: 9, kind: input, shape index: {}]
  %s10 = inlined_call_operand.vmem [shape: f32[1,32], index: 10, kind: input, shape index: {}]
  %s11 = inlined_call_operand.vmem [shape: f32[8,32], index: 11, kind: input, shape index: {}]
  %s12 = inlined_call_operand.vmem [shape: f32[16,32], index: 12, kind: output, shape index: {}]
  %s13 = sld [smem:[#allocation0]]
  $region58: #{decoder_layer.1} parent=0
    _
  %s15 = ssub.s32 1, %s13
  %s16 = scalar_select 0, %s15, %s13
  // Predicated region
  $region2: #{decoder_layer.1} parent=0 // pred_check
    _
  $region3: #{decoder_layer.1} parent=0 // pred_check_branch
    %18 = sbr.rel (0) target = $region5
  $region4: #{decoder_layer.1} parent=0 // pred_region
    _
  $region5: #{decoder_layer.1} parent=0 // pred_fallthru
    _
  // Predicated region
  $region6: #{decoder_layer.1} parent=0 // pred_check
    _
  $region7: #{decoder_layer.1} parent=0 // pred_check_branch
    %20 = sbr.rel (0) target = $region9
  $region8: #{decoder_layer.1} parent=0 // pred_region
    _
  $region9: #{decoder_layer.1} parent=0 // pred_fallthru
    _
  // Predicated region
  $region10: #{decoder_layer.1} parent=0 // pred_check
    _
  $region11: #{decoder_layer.1} parent=0 // pred_check_branch
    %22 = sbr.rel (0) target = $region13
  $region12: #{decoder_layer.1} parent=0 // pred_region
    _
  $region13: #{decoder_layer.1} parent=0 // pred_fallthru
    _
  // Predicated region
  $region14: #{decoder_layer.1} parent=0 // pred_check
    _
  $region15: #{decoder_layer.1} parent=0 // pred_check_branch
    %24 = sbr.rel (0) target = $region17
  $region16: #{decoder_layer.1} parent=0 // pred_region
    _
  $region17: #{decoder_layer.1} parent=0 // pred_fallthru
    _
  // Predicated region
  $region18: #{decoder_layer.1} parent=0 // pred_check
    _
  $region19: #{decoder_layer.1} parent=0 // pred_check_branch
    %26 = sbr.rel (0) target = $region21
  $region20: #{decoder_layer.1} parent=0 // pred_region
    _
  $region21: #{decoder_layer.1} parent=0 // pred_fallthru
    _
  // Predicated region
  $region22: #{decoder_layer.1} parent=0 // pred_check
    _
  $region23: #{decoder_layer.1} parent=0 // pred_check_branch
    %28 = sbr.rel (0) target = $region25
  $region24: #{decoder_layer.1} parent=0 // pred_region
    _
  $region25: #{decoder_layer.1} parent=0 // pred_fallthru
    _
  // Predicated region
  $region26: #{decoder_layer.1} parent=0 // pred_check
    _
  $region27: #{decoder_layer.1} parent=0 // pred_check_branch
    %30 = sbr.rel (0) target = $region29
  $region28: #{decoder_layer.1} parent=0 // pred_region
    _
  $region29: #{decoder_layer.1} parent=0 // pred_fallthru
    _
  // Predicated region
  $region30: #{decoder_layer.1} parent=0 // pred_check
    _
  $region31: #{decoder_layer.1} parent=0 // pred_check_branch
    %32 = sbr.rel (0) target = $region33
  $region32: #{decoder_layer.1} parent=0 // pred_region
    _
  $region33: #{decoder_layer.1} parent=0 // pred_fallthru
    _
  // Predicated region
  $region34: #{decoder_layer.1} parent=0 // pred_check
    _
  $region35: #{decoder_layer.1} parent=0 // pred_check_branch
    %34 = sbr.rel (0) target = $region37
  $region36: #{decoder_layer.1} parent=0 // pred_region
    _
  $region37: #{decoder_layer.1} parent=0 // pred_fallthru
    _
  // Predicated region
  $region38: #{decoder_layer.1} parent=0 // pred_check
    _
  $region39: #{decoder_layer.1} parent=0 // pred_check_branch
    %36 = sbr.rel (0) target = $region41
  $region40: #{decoder_layer.1} parent=0 // pred_region
    _
  $region41: #{decoder_layer.1} parent=0 // pred_fallthru
    _
  // Predicated region
  $region42: #{decoder_layer.1} parent=0 // pred_check
    _
  $region43: #{decoder_layer.1} parent=0 // pred_check_branch
    %38 = sbr.rel (0) target = $region45
  $region44: #{decoder_layer.1} parent=0 // pred_region
    _
  $region45: #{decoder_layer.1} parent=0 // pred_fallthru
    _
  // Predicated region
  $region46: #{decoder_layer.1} parent=0 // pred_check
    _
  $region47: #{decoder_layer.1} parent=0 // pred_check_branch
    %40 = sbr.rel (0) target = $region49
  $region48: #{decoder_layer.1} parent=0 // pred_region
    _
  $region49: #{decoder_layer.1} parent=0 // pred_fallthru
    _
  %v41 = vld [vmem:[%s0] sm:$0xff]
  %v42 = vld [vmem:[%s0 + $0x8] sm:$0xff]
  %v43 = vld [vmem:[%s1] sm:$0xff]
  %v44 = vld [vmem:[%s1 + $0x8] sm:$0xff]
  %v45 = vld [vmem:[%s2] sm:$0xff]
  %v46 = vld [vmem:[%s2 + $0x8] sm:$0xff]
  %v47 = vld [vmem:[%s3] sm:$0xff]
  %v48 = vld [vmem:[%s3 + $0x8] sm:$0xff]
  %v49 = vld [vmem:[%s4] sm:$0xff]
  %v50 = vld [vmem:[%s4 + $0x8] sm:$0xff]
  %v51 = vld [vmem:[%s5] sm:$0xff]
  %v52 = vld [vmem:[%s5 + $0x8] sm:$0xff]
  %v53 = vld [vmem:[%s5 + $0x10] sm:$0xff]
  %v54 = vld [vmem:[%s5 + $0x18] sm:$0xff]
  %v55 = vld [vmem:[%s5 + $0x20] sm:$0xff]
  %v56 = vld [vmem:[%s5 + $0x28] sm:$0xff]
  %v57 = vld [vmem:[%s5 + $0x30] sm:$0xff]
  %v58 = vld [vmem:[%s5 + $0x38] sm:$0xff]
  %v59 = vld [vmem:[%s5 + $0x40] sm:$0xff]
  %v60 = vld [vmem:[%s5 + $0x48] sm:$0xff]
  %v61 = vld [vmem:[%s5 + $0x50] sm:$0xff]
  %v62 = vld [vmem:[%s5 + $0x58] sm:$0xff]
  %v63 = vld [vmem:[%s6] sm:$0x7]
  %v64 = vld [vmem:[%s7] sm:$0xff]
  %v65 = vld [vmem:[%s7 + $0x8] sm:$0xff]
  %v66 = vld [vmem:[%s7 + $0x10] sm:$0xff]
  %v67 = vld [vmem:[%s7 + $0x18] sm:$0xff]
  %v68 = vld [vmem:[%s8] sm:$0x1]
  %v69 = vld [vmem:[%s9] sm:$0xff]
  %v70 = vld [vmem:[%s9 + $0x8] sm:$0xff]
  %v71 = vld [vmem:[%s9 + $0x10] sm:$0xff]
  %v72 = vld [vmem:[%s9 + $0x18] sm:$0xff]
  %v73 = vld [vmem:[%s9 + $0x20] sm:$0xff]
  %v74 = vld [vmem:[%s9 + $0x28] sm:$0xff]
  %v75 = vld [vmem:[%s9 + $0x30] sm:$0xff]
  %v76 = vld [vmem:[%s9 + $0x38] sm:$0xff]
  %v77 = vld [vmem:[%s10] sm:$0x1]
  %v78 = vld [vmem:[%s11] sm:$0xff]
  %v79 = vlaneseq
  %v80 = vshrl.u32 %v79, 7
  %v81 = vsub.s32 0, %v80
  %v82 = vrot.slane %v63, %v81
  %vm83 = vcmask 261120
  %v85 = vsel %vm83, %v41, 0
  %v88 = vsel %vm83, %v42, 0
  %90 = vmatprep.subr.mxu0 0.0
  %91 = vmatpush1.msra.mxu0 %v51
  %92 = vmatprep.subr.mxu0 0.0
  %93 = vmatpush1.msra.mxu0 %v52
  %94 = vmatprep.subr.mxu0 0.0
  %95 = vmatpush1.msra.mxu0 %v53
  %96 = vmatprep.subr.mxu0 0.0
  %97 = vmatpush1.msra.mxu0 %v54
  %98 = vmatprep.subr.mxu0 0.0
  %99 = vmatpush1.msra.mxu0 0.0
  %100 = vmatprep.subr.mxu0 0.0
  %101 = vmatpush1.msra.mxu0 0.0
  %102 = vmatprep.subr.mxu0 0.0
  %103 = vmatpush1.msra.mxu0 0.0
  %104 = vmatprep.subr.mxu0 0.0
  %105 = vmatpush1.msra.mxu0 0.0
  %106 = vmatprep.subr.mxu0 0.0
  %107 = vmatpush1.msra.mxu0 0.0
  %108 = vmatprep.subr.mxu0 0.0
  %109 = vmatpush1.msra.mxu0 0.0
  %110 = vmatprep.subr.mxu0 0.0
  %111 = vmatpush1.msra.mxu0 0.0
  %112 = vmatprep.subr.mxu0 0.0
  %113 = vmatpush1.msra.mxu0 0.0
  %114 = vmatprep.subr.mxu0 0.0
  %115 = vmatpush1.msra.mxu0 0.0
  %116 = vmatprep.subr.mxu0 0.0
  %117 = vmatpush1.msra.mxu0 0.0
  %118 = vmatprep.subr.mxu0 0.0
  %119 = vmatpush1.msra.mxu0 0.0
  %120 = vmatprep.subr.mxu0 0.0
  %121 = vmatpush1.msra.mxu0 0.0
  %122 = vmatprep.subr.mxu0 0.0
  %123 = vmatpush1.msra.mxu0 0.0
  %124 = vmatprep.subr.mxu0 0.0
  %125 = vmatpush1.msra.mxu0 0.0
  %126 = vmatprep.subr.mxu0 0.0
  %127 = vmatpush1.msra.mxu0 0.0
  %128 = vmatprep.subr.mxu0 0.0
  %129 = vmatpush1.msra.mxu0 0.0
  %130 = vmatprep.subr.mxu0 0.0
  %131 = vmatpush1.msra.mxu0 0.0
  %132 = vmatprep.subr.mxu0 0.0
  %133 = vmatpush1.msra.mxu0 0.0
  %134 = vmatprep.subr.mxu0 0.0
  %135 = vmatpush1.msra.mxu0 0.0
  %136 = vmatprep.subr.mxu0 0.0
  %137 = vmatpush1.msra.mxu0 0.0
  %138 = vmatprep.subr.mxu0 0.0
  %139 = vmatpush1.msra.mxu0 0.0
  %140 = vmatprep.subr.mxu0 0.0
  %141 = vmatpush1.msra.mxu0 0.0
  %142 = vmatprep.subr.mxu0 0.0
  %143 = vmatpush1.msra.mxu0 0.0
  %144 = vmatprep.subr.mxu0 0.0
  %145 = vmatpush1.msra.mxu0 0.0
  %146 = vmatprep.subr.mxu0 0.0
  %147 = vmatpush1.msra.mxu0 0.0
  %148 = vmatprep.subr.mxu0 0.0
  %149 = vmatpush1.msra.mxu0 0.0
  %150 = vmatprep.subr.mxu0 0.0
  %151 = vmatpush1.msra.mxu0 0.0
  %152 = vmatprep.subr.mxu0 0.0
  %153 = vmatpush1.msra.mxu0 0.0
  %154 = vmatprep.mubr.f32.mxu0 0.0
  %155 = vmatmul.mubr.f32.gmra.mrb[0].mxu0 %v85
  %v156 = vpop.f32.mrb[0].mxu0
  %v157 = vadd.f32 %v82, %v156
  %v158 = vpop.f32.mrb[0].mxu0
  %159 = vmatprep.mubr.f32.mxu0 0.0
  %160 = vmatmul.mubr.f32.gmra.mrb[0].mxu0 %v88
  %v161 = vpop.f32.mrb[0].mxu0
  %v162 = vadd.f32 %v82, %v161
  %v163 = vpop.f32.mrb[0].mxu0
  %164 = vdwg.mxu0
  %167 = vrot.lane.b32.xlu0 %v157, 96
  %v168 = vpop.permute.xlu0 %167
  %169 = vrot.lane.b32.xlu0 %v162, 96
  %v170 = vpop.permute.xlu0 %169
  %vm171 = vcmask 64512
  %v172 = vsel %vm171, %v157, 0
  %v174 = vsel %vm171, %v162, 0
  %v176 = vsel %vm171, %v168, 0
  %v178 = vsel %vm171, %v170, 0
  %180 = vmatprep.subr.mxu0 0.0
  %181 = vmatpush1.xpose.msra.mxu0 %v176
  %182 = vmatprep.subr.mxu0 0.0
  %183 = vmatpush1.xpose.msra.mxu0 %v178
  %184 = vmatprep.subr.mxu0 0.0
  %185 = vmatpush1.xpose.msra.mxu0 0.0
  %186 = vmatprep.subr.mxu0 0.0
  %187 = vmatpush1.xpose.msra.mxu0 0.0
  %188 = vmatprep.subr.mxu0 0.0
  %189 = vmatpush1.xpose.msra.mxu0 0.0
  %190 = vmatprep.subr.mxu0 0.0
  %191 = vmatpush1.xpose.msra.mxu0 0.0
  %192 = vmatprep.subr.mxu0 0.0
  %193 = vmatpush1.xpose.msra.mxu0 0.0
  %194 = vmatprep.subr.mxu0 0.0
  %195 = vmatpush1.xpose.msra.mxu0 0.0
  %196 = vmatprep.subr.mxu0 0.0
  %197 = vmatpush1.xpose.msra.mxu0 0.0
  %198 = vmatprep.subr.mxu0 0.0
  %199 = vmatpush1.xpose.msra.mxu0 0.0
  %200 = vmatprep.subr.mxu0 0.0
  %201 = vmatpush1.xpose.msra.mxu0 0.0
  %202 = vmatprep.subr.mxu0 0.0
  %203 = vmatpush1.xpose.msra.mxu0 0.0
  %204 = vmatprep.subr.mxu0 0.0
  %205 = vmatpush1.xpose.msra.mxu0 0.0
  %206 = vmatprep.subr.mxu0 0.0
  %207 = vmatpush1.xpose.msra.mxu0 0.0
  %208 = vmatprep.subr.mxu0 0.0
  %209 = vmatpush1.xpose.msra.mxu0 0.0
  %210 = vmatprep.subr.mxu0 0.0
  %211 = vmatpush1.xpose.msra.mxu0 0.0
  %212 = vmatprep.subr.mxu0 0.0
  %213 = vmatpush1.xpose.msra.mxu0 0.0
  %214 = vmatprep.subr.mxu0 0.0
  %215 = vmatpush1.xpose.msra.mxu0 0.0
  %216 = vmatprep.subr.mxu0 0.0
  %217 = vmatpush1.xpose.msra.mxu0 0.0
  %218 = vmatprep.subr.mxu0 0.0
  %219 = vmatpush1.xpose.msra.mxu0 0.0
  %220 = vmatprep.subr.mxu0 0.0
  %221 = vmatpush1.xpose.msra.mxu0 0.0
  %222 = vmatprep.subr.mxu0 0.0
  %223 = vmatpush1.xpose.msra.mxu0 0.0
  %224 = vmatprep.subr.mxu0 0.0
  %225 = vmatpush1.xpose.msra.mxu0 0.0
  %226 = vmatprep.subr.mxu0 0.0
  %227 = vmatpush1.xpose.msra.mxu0 0.0
  %228 = vmatprep.subr.mxu0 0.0
  %229 = vmatpush1.xpose.msra.mxu0 0.0
  %230 = vmatprep.subr.mxu0 0.0
  %231 = vmatpush1.xpose.msra.mxu0 0.0
  %232 = vmatprep.subr.mxu0 0.0
  %233 = vmatpush1.xpose.msra.mxu0 0.0
  %234 = vmatprep.subr.mxu0 0.0
  %235 = vmatpush1.xpose.msra.mxu0 0.0
  %236 = vmatprep.subr.mxu0 0.0
  %237 = vmatpush1.xpose.msra.mxu0 0.0
  %238 = vmatprep.subr.mxu0 0.0
  %239 = vmatpush1.xpose.msra.mxu0 0.0
  %240 = vmatprep.subr.mxu0 0.0
  %241 = vmatpush1.xpose.msra.mxu0 0.0
  %242 = vmatprep.subr.mxu0 0.0
  %243 = vmatpush1.xpose.msra.mxu0 0.0
  %244 = vmatprep.mubr.f32.mxu0 0.0
  %245 = vmatmul.mubr.f32.gmra.mrb[0].mxu0 %v172
  %v246 = vpop.f32.mrb[0].mxu0
  %v247 = vadd.f32 %v47, %v246
  %v248 = vpop.f32.mrb[0].mxu0
  %249 = vmatprep.mubr.f32.mxu0 0.0
  %250 = vmatmul.mubr.f32.gmra.mrb[0].mxu0 %v174
  %v251 = vpop.f32.mrb[0].mxu0
  %v252 = vadd.f32 %v48, %v251
  %v253 = vpop.f32.mrb[0].mxu0
  %254 = vdwg.mxu0
  %vm255 = vcmask 130048
  %v256 = vsel %vm255, %v247, -inf
  %257 = vmax.xlane.f32.xlu0 %v256
  %v258 = vpop.xlane.xlu0 %257
  %v259 = vsel %vm255, %v252, -inf
  %260 = vmax.xlane.f32.xlu0 %v259
  %v261 = vpop.xlane.xlu0 %260
  %v262 = vsub.f32 %v247, %v258
  %v263 = vsub.f32 %v252, %v261
  %v264 = vmul.f32 %v262, 1.442695
  %v265 = vpow.pop %v264
  %v266 = vmul.f32 %v263, 1.442695
  %v267 = vpow.pop %v266
  %v268 = vsel %vm255, %v265, 0.0
  %269 = vadd.xlane.f32.xlu0 %v268
  %v270 = vpop.xlane.xlu0 %269
  %v271 = vsel %vm255, %v267, 0.0
  %272 = vadd.xlane.f32.xlu0 %v271
  %v273 = vpop.xlane.xlu0 %272
  %v274 = vrcp.pop %v270
  %v275 = vmul.f32 %v265, %v274
  %v276 = vrcp.pop %v273
  %v277 = vmul.f32 %v267, %v276
  %278 = vrot.lane.b32.xlu0 %v157, 64
  %v279 = vpop.permute.xlu0 %278
  %280 = vrot.lane.b32.xlu0 %v162, 64
  %v281 = vpop.permute.xlu0 %280
  %v285 = vsel %vm255, %v275, 0
  %v288 = vsel %vm255, %v277, 0
  %290 = vmatprep.subr.mxu0 0.0
  %291 = vmatpush1.msra.mxu0 %v279
  %292 = vmatprep.subr.mxu0 0.0
  %293 = vmatpush1.msra.mxu0 %v281
  %294 = vmatprep.subr.mxu0 0.0
  %295 = vmatpush1.msra.mxu0 0.0
  %296 = vmatprep.subr.mxu0 0.0
  %297 = vmatpush1.msra.mxu0 0.0
  %298 = vmatprep.subr.mxu0 0.0
  %299 = vmatpush1.msra.mxu0 0.0
  %300 = vmatprep.subr.mxu0 0.0
  %301 = vmatpush1.msra.mxu0 0.0
  %302 = vmatprep.subr.mxu0 0.0
  %303 = vmatpush1.msra.mxu0 0.0
  %304 = vmatprep.subr.mxu0 0.0
  %305 = vmatpush1.msra.mxu0 0.0
  %306 = vmatprep.subr.mxu0 0.0
  %307 = vmatpush1.msra.mxu0 0.0
  %308 = vmatprep.subr.mxu0 0.0
  %309 = vmatpush1.msra.mxu0 0.0
  %310 = vmatprep.subr.mxu0 0.0
  %311 = vmatpush1.msra.mxu0 0.0
  %312 = vmatprep.subr.mxu0 0.0
  %313 = vmatpush1.msra.mxu0 0.0
  %314 = vmatprep.subr.mxu0 0.0
  %315 = vmatpush1.msra.mxu0 0.0
  %316 = vmatprep.subr.mxu0 0.0
  %317 = vmatpush1.msra.mxu0 0.0
  %318 = vmatprep.subr.mxu0 0.0
  %319 = vmatpush1.msra.mxu0 0.0
  %320 = vmatprep.subr.mxu0 0.0
  %321 = vmatpush1.msra.mxu0 0.0
  %322 = vmatprep.subr.mxu0 0.0
  %323 = vmatpush1.msra.mxu0 0.0
  %324 = vmatprep.subr.mxu0 0.0
  %325 = vmatpush1.msra.mxu0 0.0
  %326 = vmatprep.subr.mxu0 0.0
  %327 = vmatpush1.msra.mxu0 0.0
  %328 = vmatprep.subr.mxu0 0.0
  %329 = vmatpush1.msra.mxu0 0.0
  %330 = vmatprep.subr.mxu0 0.0
  %331 = vmatpush1.msra.mxu0 0.0
  %332 = vmatprep.subr.mxu0 0.0
  %333 = vmatpush1.msra.mxu0 0.0
  %334 = vmatprep.subr.mxu0 0.0
  %335 = vmatpush1.msra.mxu0 0.0
  %336 = vmatprep.subr.mxu0 0.0
  %337 = vmatpush1.msra.mxu0 0.0
  %338 = vmatprep.subr.mxu0 0.0
  %339 = vmatpush1.msra.mxu0 0.0
  %340 = vmatprep.subr.mxu0 0.0
  %341 = vmatpush1.msra.mxu0 0.0
  %342 = vmatprep.subr.mxu0 0.0
  %343 = vmatpush1.msra.mxu0 0.0
  %344 = vmatprep.subr.mxu0 0.0
  %345 = vmatpush1.msra.mxu0 0.0
  %346 = vmatprep.subr.mxu0 0.0
  %347 = vmatpush1.msra.mxu0 0.0
  %348 = vmatprep.subr.mxu0 0.0
  %349 = vmatpush1.msra.mxu0 0.0
  %350 = vmatprep.subr.mxu0 0.0
  %351 = vmatpush1.msra.mxu0 0.0
  %352 = vmatprep.subr.mxu0 0.0
  %353 = vmatpush1.msra.mxu0 0.0
  %354 = vmatprep.mubr.f32.mxu0 0.0
  %355 = vmatmul.mubr.f32.gmra.mrb[0].mxu0 %v285
  %v356 = vpop.f32.mrb[0].mxu0
  %v357 = vadd.f32 0.0, %v356
  %v358 = vpop.f32.mrb[0].mxu0
  %359 = vmatprep.mubr.f32.mxu0 0.0
  %360 = vmatmul.mubr.f32.gmra.mrb[0].mxu0 %v288
  %v361 = vpop.f32.mrb[0].mxu0
  %v362 = vadd.f32 0.0, %v361
  %v363 = vpop.f32.mrb[0].mxu0
  %364 = vdwg.mxu0
  %365 = vst.msk [vmem:[#allocation2] sm:$0xff] %vm171, %v357
  %366 = vst.msk [vmem:[#allocation2 + $0x8] sm:$0xff] %vm171, %v362
  %367 = vrot.lane.b32.xlu0 %v157, 120
  %v368 = vpop.permute.xlu0 %367
  %369 = vrot.lane.b32.xlu0 %v162, 120
  %v370 = vpop.permute.xlu0 %369
  %371 = vrot.lane.b32.xlu0 %v157, 88
  %v372 = vpop.permute.xlu0 %371
  %373 = vrot.lane.b32.xlu0 %v162, 88
  %v374 = vpop.permute.xlu0 %373
  %v375 = vsel %vm171, %v368, 0
  %v377 = vsel %vm171, %v370, 0
  %v379 = vsel %vm171, %v372, 0
  %v381 = vsel %vm171, %v374, 0
  %383 = vmatprep.subr.mxu0 0.0
  %384 = vmatpush1.xpose.msra.mxu0 %v379
  %385 = vmatprep.subr.mxu0 0.0
  %386 = vmatpush1.xpose.msra.mxu0 %v381
  %387 = vmatprep.subr.mxu0 0.0
  %388 = vmatpush1.xpose.msra.mxu0 0.0
  %389 = vmatprep.subr.mxu0 0.0
  %390 = vmatpush1.xpose.msra.mxu0 0.0
  %391 = vmatprep.subr.mxu0 0.0
  %392 = vmatpush1.xpose.msra.mxu0 0.0
  %393 = vmatprep.subr.mxu0 0.0
  %394 = vmatpush1.xpose.msra.mxu0 0.0
  %395 = vmatprep.subr.mxu0 0.0
  %396 = vmatpush1.xpose.msra.mxu0 0.0
  %397 = vmatprep.subr.mxu0 0.0
  %398 = vmatpush1.xpose.msra.mxu0 0.0
  %399 = vmatprep.subr.mxu0 0.0
  %400 = vmatpush1.xpose.msra.mxu0 0.0
  %401 = vmatprep.subr.mxu0 0.0
  %402 = vmatpush1.xpose.msra.mxu0 0.0
  %403 = vmatprep.subr.mxu0 0.0
  %404 = vmatpush1.xpose.msra.mxu0 0.0
  %405 = vmatprep.subr.mxu0 0.0
  %406 = vmatpush1.xpose.msra.mxu0 0.0
  %407 = vmatprep.subr.mxu0 0.0
  %408 = vmatpush1.xpose.msra.mxu0 0.0
  %409 = vmatprep.subr.mxu0 0.0
  %410 = vmatpush1.xpose.msra.mxu0 0.0
  %411 = vmatprep.subr.mxu0 0.0
  %412 = vmatpush1.xpose.msra.mxu0 0.0
  %413 = vmatprep.subr.mxu0 0.0
  %414 = vmatpush1.xpose.msra.mxu0 0.0
  %415 = vmatprep.subr.mxu0 0.0
  %416 = vmatpush1.xpose.msra.mxu0 0.0
  %417 = vmatprep.subr.mxu0 0.0
  %418 = vmatpush1.xpose.msra.mxu0 0.0
  %419 = vmatprep.subr.mxu0 0.0
  %420 = vmatpush1.xpose.msra.mxu0 0.0
  %421 = vmatprep.subr.mxu0 0.0
  %422 = vmatpush1.xpose.msra.mxu0 0.0
  %423 = vmatprep.subr.mxu0 0.0
  %424 = vmatpush1.xpose.msra.mxu0 0.0
  %425 = vmatprep.subr.mxu0 0.0
  %426 = vmatpush1.xpose.msra.mxu0 0.0
  %427 = vmatprep.subr.mxu0 0.0
  %428 = vmatpush1.xpose.msra.mxu0 0.0
  %429 = vmatprep.subr.mxu0 0.0
  %430 = vmatpush1.xpose.msra.mxu0 0.0
  %431 = vmatprep.subr.mxu0 0.0
  %432 = vmatpush1.xpose.msra.mxu0 0.0
  %433 = vmatprep.subr.mxu0 0.0
  %434 = vmatpush1.xpose.msra.mxu0 0.0
  %435 = vmatprep.subr.mxu0 0.0
  %436 = vmatpush1.xpose.msra.mxu0 0.0
  %437 = vmatprep.subr.mxu0 0.0
  %438 = vmatpush1.xpose.msra.mxu0 0.0
  %439 = vmatprep.subr.mxu0 0.0
  %440 = vmatpush1.xpose.msra.mxu0 0.0
  %441 = vmatprep.subr.mxu0 0.0
  %442 = vmatpush1.xpose.msra.mxu0 0.0
  %443 = vmatprep.subr.mxu0 0.0
  %444 = vmatpush1.xpose.msra.mxu0 0.0
  %445 = vmatprep.subr.mxu0 0.0
  %446 = vmatpush1.xpose.msra.mxu0 0.0
  %447 = vmatprep.mubr.f32.mxu0 0.0
  %448 = vmatmul.mubr.f32.gmra.mrb[0].mxu0 %v375
  %v449 = vpop.f32.mrb[0].mxu0
  %v450 = vadd.f32 %v47, %v449
  %v451 = vpop.f32.mrb[0].mxu0
  %452 = vmatprep.mubr.f32.mxu0 0.0
  %453 = vmatmul.mubr.f32.gmra.mrb[0].mxu0 %v377
  %v454 = vpop.f32.mrb[0].mxu0
  %v455 = vadd.f32 %v48, %v454
  %v456 = vpop.f32.mrb[0].mxu0
  %457 = vdwg.mxu0
  %v458 = vsel %vm255, %v450, -inf
  %459 = vmax.xlane.f32.xlu0 %v458
  %v460 = vpop.xlane.xlu0 %459
  %v461 = vsel %vm255, %v455, -inf
  %462 = vmax.xlane.f32.xlu0 %v461
  %v463 = vpop.xlane.xlu0 %462
  %v464 = vsub.f32 %v450, %v460
  %v465 = vsub.f32 %v455, %v463
  %v466 = vmul.f32 %v464, 1.442695
  %v467 = vpow.pop %v466
  %v468 = vmul.f32 %v465, 1.442695
  %v469 = vpow.pop %v468
  %v470 = vsel %vm255, %v467, 0.0
  %471 = vadd.xlane.f32.xlu0 %v470
  %v472 = vpop.xlane.xlu0 %471
  %v473 = vsel %vm255, %v469, 0.0
  %474 = vadd.xlane.f32.xlu0 %v473
  %v475 = vpop.xlane.xlu0 %474
  %v476 = vrcp.pop %v472
  %v477 = vmul.f32 %v467, %v476
  %v478 = vrcp.pop %v475
  %v479 = vmul.f32 %v469, %v478
  %480 = vrot.lane.b32.xlu0 %v157, 56
  %v481 = vpop.permute.xlu0 %480
  %482 = vrot.lane.b32.xlu0 %v162, 56
  %v483 = vpop.permute.xlu0 %482
  %v487 = vsel %vm255, %v477, 0
  %v490 = vsel %vm255, %v479, 0
  %492 = vmatprep.subr.mxu0 0.0
  %493 = vmatpush1.msra.mxu0 %v481
  %494 = vmatprep.subr.mxu0 0.0
  %495 = vmatpush1.msra.mxu0 %v483
  %496 = vmatprep.subr.mxu0 0.0
  %497 = vmatpush1.msra.mxu0 0.0
  %498 = vmatprep.subr.mxu0 0.0
  %499 = vmatpush1.msra.mxu0 0.0
  %500 = vmatprep.subr.mxu0 0.0
  %501 = vmatpush1.msra.mxu0 0.0
  %502 = vmatprep.subr.mxu0 0.0
  %503 = vmatpush1.msra.mxu0 0.0
  %504 = vmatprep.subr.mxu0 0.0
  %505 = vmatpush1.msra.mxu0 0.0
  %506 = vmatprep.subr.mxu0 0.0
  %507 = vmatpush1.msra.mxu0 0.0
  %508 = vmatprep.subr.mxu0 0.0
  %509 = vmatpush1.msra.mxu0 0.0
  %510 = vmatprep.subr.mxu0 0.0
  %511 = vmatpush1.msra.mxu0 0.0
  %512 = vmatprep.subr.mxu0 0.0
  %513 = vmatpush1.msra.mxu0 0.0
  %514 = vmatprep.subr.mxu0 0.0
  %515 = vmatpush1.msra.mxu0 0.0
  %516 = vmatprep.subr.mxu0 0.0
  %517 = vmatpush1.msra.mxu0 0.0
  %518 = vmatprep.subr.mxu0 0.0
  %519 = vmatpush1.msra.mxu0 0.0
  %520 = vmatprep.subr.mxu0 0.0
  %521 = vmatpush1.msra.mxu0 0.0
  %522 = vmatprep.subr.mxu0 0.0
  %523 = vmatpush1.msra.mxu0 0.0
  %524 = vmatprep.subr.mxu0 0.0
  %525 = vmatpush1.msra.mxu0 0.0
  %526 = vmatprep.subr.mxu0 0.0
  %527 = vmatpush1.msra.mxu0 0.0
  %528 = vmatprep.subr.mxu0 0.0
  %529 = vmatpush1.msra.mxu0 0.0
  %530 = vmatprep.subr.mxu0 0.0
  %531 = vmatpush1.msra.mxu0 0.0
  %532 = vmatprep.subr.mxu0 0.0
  %533 = vmatpush1.msra.mxu0 0.0
  %534 = vmatprep.subr.mxu0 0.0
  %535 = vmatpush1.msra.mxu0 0.0
  %536 = vmatprep.subr.mxu0 0.0
  %537 = vmatpush1.msra.mxu0 0.0
  %538 = vmatprep.subr.mxu0 0.0
  %539 = vmatpush1.msra.mxu0 0.0
  %540 = vmatprep.subr.mxu0 0.0
  %541 = vmatpush1.msra.mxu0 0.0
  %542 = vmatprep.subr.mxu0 0.0
  %543 = vmatpush1.msra.mxu0 0.0
  %544 = vmatprep.subr.mxu0 0.0
  %545 = vmatpush1.msra.mxu0 0.0
  %546 = vmatprep.subr.mxu0 0.0
  %547 = vmatpush1.msra.mxu0 0.0
  %548 = vmatprep.subr.mxu0 0.0
  %549 = vmatpush1.msra.mxu0 0.0
  %550 = vmatprep.subr.mxu0 0.0
  %551 = vmatpush1.msra.mxu0 0.0
  %552 = vmatprep.subr.mxu0 0.0
  %553 = vmatpush1.msra.mxu0 0.0
  %554 = vmatprep.subr.mxu0 0.0
  %555 = vmatpush1.msra.mxu0 0.0
  %556 = vmatprep.mubr.f32.mxu0 0.0
  %557 = vmatmul.mubr.f32.gmra.mrb[0].mxu0 %v487
  %v558 = vpop.f32.mrb[0].mxu0
  %v559 = vadd.f32 0.0, %v558
  %v560 = vpop.f32.mrb[0].mxu0
  %561 = vmatprep.mubr.f32.mxu0 0.0
  %562 = vmatmul.mubr.f32.gmra.mrb[0].mxu0 %v490
  %v563 = vpop.f32.mrb[0].mxu0
  %v564 = vadd.f32 0.0, %v563
  %v565 = vpop.f32.mrb[0].mxu0
  %566 = vdwg.mxu0
  %569 = vrot.lane.b32.xlu0 %v559, 8
  %v570 = vpop.permute.xlu0 %569
  %571 = vrot.lane.b32.xlu0 %v564, 8
  %v572 = vpop.permute.xlu0 %571
  %vm575 = vcmask 130112
  %576 = vst.msk [vmem:[#allocation2] sm:$0xff] %vm575, %v570
  %577 = vst.msk [vmem:[#allocation2 + $0x8] sm:$0xff] %vm575, %v572
  %578 = vrot.lane.b32.xlu0 %v157, 112
  %v579 = vpop.permute.xlu0 %578
  %580 = vrot.lane.b32.xlu0 %v162, 112
  %v581 = vpop.permute.xlu0 %580
  %582 = vrot.lane.b32.xlu0 %v157, 80
  %v583 = vpop.permute.xlu0 %582
  %584 = vrot.lane.b32.xlu0 %v162, 80
  %v585 = vpop.permute.xlu0 %584
  %v586 = vsel %vm171, %v579, 0
  %v588 = vsel %vm171, %v581, 0
  %v590 = vsel %vm171, %v583, 0
  %v592 = vsel %vm171, %v585, 0
  %594 = vmatprep.subr.mxu0 0.0
  %595 = vmatpush1.xpose.msra.mxu0 %v590
  %596 = vmatprep.subr.mxu0 0.0
  %597 = vmatpush1.xpose.msra.mxu0 %v592
  %598 = vmatprep.subr.mxu0 0.0
  %599 = vmatpush1.xpose.msra.mxu0 0.0
  %600 = vmatprep.subr.mxu0 0.0
  %601 = vmatpush1.xpose.msra.mxu0 0.0
  %602 = vmatprep.subr.mxu0 0.0
  %603 = vmatpush1.xpose.msra.mxu0 0.0
  %604 = vmatprep.subr.mxu0 0.0
  %605 = vmatpush1.xpose.msra.mxu0 0.0
  %606 = vmatprep.subr.mxu0 0.0
  %607 = vmatpush1.xpose.msra.mxu0 0.0
  %608 = vmatprep.subr.mxu0 0.0
  %609 = vmatpush1.xpose.msra.mxu0 0.0
  %610 = vmatprep.subr.mxu0 0.0
  %611 = vmatpush1.xpose.msra.mxu0 0.0
  %612 = vmatprep.subr.mxu0 0.0
  %613 = vmatpush1.xpose.msra.mxu0 0.0
  %614 = vmatprep.subr.mxu0 0.0
  %615 = vmatpush1.xpose.msra.mxu0 0.0
  %616 = vmatprep.subr.mxu0 0.0
  %617 = vmatpush1.xpose.msra.mxu0 0.0
  %618 = vmatprep.subr.mxu0 0.0
  %619 = vmatpush1.xpose.msra.mxu0 0.0
  %620 = vmatprep.subr.mxu0 0.0
  %621 = vmatpush1.xpose.msra.mxu0 0.0
  %622 = vmatprep.subr.mxu0 0.0
  %623 = vmatpush1.xpose.msra.mxu0 0.0
  %624 = vmatprep.subr.mxu0 0.0
  %625 = vmatpush1.xpose.msra.mxu0 0.0
  %626 = vmatprep.subr.mxu0 0.0
  %627 = vmatpush1.xpose.msra.mxu0 0.0
  %628 = vmatprep.subr.mxu0 0.0
  %629 = vmatpush1.xpose.msra.mxu0 0.0
  %630 = vmatprep.subr.mxu0 0.0
  %631 = vmatpush1.xpose.msra.mxu0 0.0
  %632 = vmatprep.subr.mxu0 0.0
  %633 = vmatpush1.xpose.msra.mxu0 0.0
  %634 = vmatprep.subr.mxu0 0.0
  %635 = vmatpush1.xpose.msra.mxu0 0.0
  %636 = vmatprep.subr.mxu0 0.0
  %637 = vmatpush1.xpose.msra.mxu0 0.0
  %638 = vmatprep.subr.mxu0 0.0
  %639 = vmatpush1.xpose.msra.mxu0 0.0
  %640 = vmatprep.subr.mxu0 0.0
  %641 = vmatpush1.xpose.msra.mxu0 0.0
  %642 = vmatprep.subr.mxu0 0.0
  %643 = vmatpush1.xpose.msra.mxu0 0.0
  %644 = vmatprep.subr.mxu0 0.0
  %645 = vmatpush1.xpose.msra.mxu0 0.0
  %646 = vmatprep.subr.mxu0 0.0
  %647 = vmatpush1.xpose.msra.mxu0 0.0
  %648 = vmatprep.subr.mxu0 0.0
  %649 = vmatpush1.xpose.msra.mxu0 0.0
  %650 = vmatprep.subr.mxu0 0.0
  %651 = vmatpush1.xpose.msra.mxu0 0.0
  %652 = vmatprep.subr.mxu0 0.0
  %653 = vmatpush1.xpose.msra.mxu0 0.0
  %654 = vmatprep.subr.mxu0 0.0
  %655 = vmatpush1.xpose.msra.mxu0 0.0
  %656 = vmatprep.subr.mxu0 0.0
  %657 = vmatpush1.xpose.msra.mxu0 0.0
  %658 = vmatprep.mubr.f32.mxu0 0.0
  %659 = vmatmul.mubr.f32.gmra.mrb[0].mxu0 %v586
  %v660 = vpop.f32.mrb[0].mxu0
  %v661 = vadd.f32 %v47, %v660
  %v662 = vpop.f32.mrb[0].mxu0
  %663 = vmatprep.mubr.f32.mxu0 0.0
  %664 = vmatmul.mubr.f32.gmra.mrb[0].mxu0 %v588
  %v665 = vpop.f32.mrb[0].mxu0
  %v666 = vadd.f32 %v48, %v665
  %v667 = vpop.f32.mrb[0].mxu0
  %668 = vdwg.mxu0
  %v669 = vsel %vm255, %v661, -inf
  %670 = vmax.xlane.f32.xlu0 %v669
  %v671 = vpop.xlane.xlu0 %670
  %v672 = vsel %vm255, %v666, -inf
  %673 = vmax.xlane.f32.xlu0 %v672
  %v674 = vpop.xlane.xlu0 %673
  %v675 = vsub.f32 %v661, %v671
  %v676 = vsub.f32 %v666, %v674
  %v677 = vmul.f32 %v675, 1.442695
  %v678 = vpow.pop %v677
  %v679 = vmul.f32 %v676, 1.442695
  %v680 = vpow.pop %v679
  %v681 = vsel %vm255, %v678, 0.0
  %682 = vadd.xlane.f32.xlu0 %v681
  %v683 = vpop.xlane.xlu0 %682
  %v684 = vsel %vm255, %v680, 0.0
  %685 = vadd.xlane.f32.xlu0 %v684
  %v686 = vpop.xlane.xlu0 %685
  %v687 = vrcp.pop %v683
  %v688 = vmul.f32 %v678, %v687
  %v689 = vrcp.pop %v686
  %v690 = vmul.f32 %v680, %v689
  %691 = vrot.lane.b32.xlu0 %v157, 48
  %v692 = vpop.permute.xlu0 %691
  %693 = vrot.lane.b32.xlu0 %v162, 48
  %v694 = vpop.permute.xlu0 %693
  %v698 = vsel %vm255, %v688, 0
  %v701 = vsel %vm255, %v690, 0
  %703 = vmatprep.subr.mxu0 0.0
  %704 = vmatpush1.msra.mxu0 %v692
  %705 = vmatprep.subr.mxu0 0.0
  %706 = vmatpush1.msra.mxu0 %v694
  %707 = vmatprep.subr.mxu0 0.0
  %708 = vmatpush1.msra.mxu0 0.0
  %709 = vmatprep.subr.mxu0 0.0
  %710 = vmatpush1.msra.mxu0 0.0
  %711 = vmatprep.subr.mxu0 0.0
  %712 = vmatpush1.msra.mxu0 0.0
  %713 = vmatprep.subr.mxu0 0.0
  %714 = vmatpush1.msra.mxu0 0.0
  %715 = vmatprep.subr.mxu0 0.0
  %716 = vmatpush1.msra.mxu0 0.0
  %717 = vmatprep.subr.mxu0 0.0
  %718 = vmatpush1.msra.mxu0 0.0
  %719 = vmatprep.subr.mxu0 0.0
  %720 = vmatpush1.msra.mxu0 0.0
  %721 = vmatprep.subr.mxu0 0.0
  %722 = vmatpush1.msra.mxu0 0.0
  %723 = vmatprep.subr.mxu0 0.0
  %724 = vmatpush1.msra.mxu0 0.0
  %725 = vmatprep.subr.mxu0 0.0
  %726 = vmatpush1.msra.mxu0 0.0
  %727 = vmatprep.subr.mxu0 0.0
  %728 = vmatpush1.msra.mxu0 0.0
  %729 = vmatprep.subr.mxu0 0.0
  %730 = vmatpush1.msra.mxu0 0.0
  %731 = vmatprep.subr.mxu0 0.0
  %732 = vmatpush1.msra.mxu0 0.0
  %733 = vmatprep.subr.mxu0 0.0
  %734 = vmatpush1.msra.mxu0 0.0
  %735 = vmatprep.subr.mxu0 0.0
  %736 = vmatpush1.msra.mxu0 0.0
  %737 = vmatprep.subr.mxu0 0.0
  %738 = vmatpush1.msra.mxu0 0.0
  %739 = vmatprep.subr.mxu0 0.0
  %740 = vmatpush1.msra.mxu0 0.0
  %741 = vmatprep.subr.mxu0 0.0
  %742 = vmatpush1.msra.mxu0 0.0
  %743 = vmatprep.subr.mxu0 0.0
  %744 = vmatpush1.msra.mxu0 0.0
  %745 = vmatprep.subr.mxu0 0.0
  %746 = vmatpush1.msra.mxu0 0.0
  %747 = vmatprep.subr.mxu0 0.0
  %748 = vmatpush1.msra.mxu0 0.0
  %749 = vmatprep.subr.mxu0 0.0
  %750 = vmatpush1.msra.mxu0 0.0
  %751 = vmatprep.subr.mxu0 0.0
  %752 = vmatpush1.msra.mxu0 0.0
  %753 = vmatprep.subr.mxu0 0.0
  %754 = vmatpush1.msra.mxu0 0.0
  %755 = vmatprep.subr.mxu0 0.0
  %756 = vmatpush1.msra.mxu0 0.0
  %757 = vmatprep.subr.mxu0 0.0
  %758 = vmatpush1.msra.mxu0 0.0
  %759 = vmatprep.subr.mxu0 0.0
  %760 = vmatpush1.msra.mxu0 0.0
  %761 = vmatprep.subr.mxu0 0.0
  %762 = vmatpush1.msra.mxu0 0.0
  %763 = vmatprep.subr.mxu0 0.0
  %764 = vmatpush1.msra.mxu0 0.0
  %765 = vmatprep.subr.mxu0 0.0
  %766 = vmatpush1.msra.mxu0 0.0
  %767 = vmatprep.mubr.f32.mxu0 0.0
  %768 = vmatmul.mubr.f32.gmra.mrb[0].mxu0 %v698
  %v769 = vpop.f32.mrb[0].mxu0
  %v770 = vadd.f32 0.0, %v769
  %v771 = vpop.f32.mrb[0].mxu0
  %772 = vmatprep.mubr.f32.mxu0 0.0
  %773 = vmatmul.mubr.f32.gmra.mrb[0].mxu0 %v701
  %v774 = vpop.f32.mrb[0].mxu0
  %v775 = vadd.f32 0.0, %v774
  %v776 = vpop.f32.mrb[0].mxu0
  %777 = vdwg.mxu0
  %780 = vrot.lane.b32.xlu0 %v770, 16
  %v781 = vpop.permute.xlu0 %780
  %782 = vrot.lane.b32.xlu0 %v775, 16
  %v783 = vpop.permute.xlu0 %782
  %vm786 = vcmask 195712
  %787 = vst.msk [vmem:[#allocation2] sm:$0xff] %vm786, %v781
  %788 = vst.msk [vmem:[#allocation2 + $0x8] sm:$0xff] %vm786, %v783
  %789 = vrot.lane.b32.xlu0 %v157, 104
  %v790 = vpop.permute.xlu0 %789
  %791 = vrot.lane.b32.xlu0 %v162, 104
  %v792 = vpop.permute.xlu0 %791
  %793 = vrot.lane.b32.xlu0 %v157, 72
  %v794 = vpop.permute.xlu0 %793
  %795 = vrot.lane.b32.xlu0 %v162, 72
  %v796 = vpop.permute.xlu0 %795
  %v797 = vsel %vm171, %v790, 0
  %v799 = vsel %vm171, %v792, 0
  %v801 = vsel %vm171, %v794, 0
  %v803 = vsel %vm171, %v796, 0
  %805 = vmatprep.subr.mxu0 0.0
  %806 = vmatpush1.xpose.msra.mxu0 %v801
  %807 = vmatprep.subr.mxu0 0.0
  %808 = vmatpush1.xpose.msra.mxu0 %v803
  %809 = vmatprep.subr.mxu0 0.0
  %810 = vmatpush1.xpose.msra.mxu0 0.0
  %811 = vmatprep.subr.mxu0 0.0
  %812 = vmatpush1.xpose.msra.mxu0 0.0
  %813 = vmatprep.subr.mxu0 0.0
  %814 = vmatpush1.xpose.msra.mxu0 0.0
  %815 = vmatprep.subr.mxu0 0.0
  %816 = vmatpush1.xpose.msra.mxu0 0.0
  %817 = vmatprep.subr.mxu0 0.0
  %818 = vmatpush1.xpose.msra.mxu0 0.0
  %819 = vmatprep.subr.mxu0 0.0
  %820 = vmatpush1.xpose.msra.mxu0 0.0
  %821 = vmatprep.subr.mxu0 0.0
  %822 = vmatpush1.xpose.msra.mxu0 0.0
  %823 = vmatprep.subr.mxu0 0.0
  %824 = vmatpush1.xpose.msra.mxu0 0.0
  %825 = vmatprep.subr.mxu0 0.0
  %826 = vmatpush1.xpose.msra.mxu0 0.0
  %827 = vmatprep.subr.mxu0 0.0
  %828 = vmatpush1.xpose.msra.mxu0 0.0
  %829 = vmatprep.subr.mxu0 0.0
  %830 = vmatpush1.xpose.msra.mxu0 0.0
  %831 = vmatprep.subr.mxu0 0.0
  %832 = vmatpush1.xpose.msra.mxu0 0.0
  %833 = vmatprep.subr.mxu0 0.0
  %834 = vmatpush1.xpose.msra.mxu0 0.0
  %835 = vmatprep.subr.mxu0 0.0
  %836 = vmatpush1.xpose.msra.mxu0 0.0
  %837 = vmatprep.subr.mxu0 0.0
  %838 = vmatpush1.xpose.msra.mxu0 0.0
  %839 = vmatprep.subr.mxu0 0.0
  %840 = vmatpush1.xpose.msra.mxu0 0.0
  %841 = vmatprep.subr.mxu0 0.0
  %842 = vmatpush1.xpose.msra.mxu0 0.0
  %843 = vmatprep.subr.mxu0 0.0
  %844 = vmatpush1.xpose.msra.mxu0 0.0
  %845 = vmatprep.subr.mxu0 0.0
  %846 = vmatpush1.xpose.msra.mxu0 0.0
  %847 = vmatprep.subr.mxu0 0.0
  %848 = vmatpush1.xpose.msra.mxu0 0.0
  %849 = vmatprep.subr.mxu0 0.0
  %850 = vmatpush1.xpose.msra.mxu0 0.0
  %851 = vmatprep.subr.mxu0 0.0
  %852 = vmatpush1.xpose.msra.mxu0 0.0
  %853 = vmatprep.subr.mxu0 0.0
  %854 = vmatpush1.xpose.msra.mxu0 0.0
  %855 = vmatprep.subr.mxu0 0.0
  %856 = vmatpush1.xpose.msra.mxu0 0.0
  %857 = vmatprep.subr.mxu0 0.0
  %858 = vmatpush1.xpose.msra.mxu0 0.0
  %859 = vmatprep.subr.mxu0 0.0
  %860 = vmatpush1.xpose.msra.mxu0 0.0
  %861 = vmatprep.subr.mxu0 0.0
  %862 = vmatpush1.xpose.msra.mxu0 0.0
  %863 = vmatprep.subr.mxu0 0.0
  %864 = vmatpush1.xpose.msra.mxu0 0.0
  %865 = vmatprep.subr.mxu0 0.0
  %866 = vmatpush1.xpose.msra.mxu0 0.0
  %867 = vmatprep.subr.mxu0 0.0
  %868 = vmatpush1.xpose.msra.mxu0 0.0
  %869 = vmatprep.mubr.f32.mxu0 0.0
  %870 = vmatmul.mubr.f32.gmra.mrb[0].mxu0 %v797
  %v871 = vpop.f32.mrb[0].mxu0
  %v872 = vadd.f32 %v47, %v871
  %v873 = vpop.f32.mrb[0].mxu0
  %874 = vmatprep.mubr.f32.mxu0 0.0
  %875 = vmatmul.mubr.f32.gmra.mrb[0].mxu0 %v799
  %v876 = vpop.f32.mrb[0].mxu0
  %v877 = vadd.f32 %v48, %v876
  %v878 = vpop.f32.mrb[0].mxu0
  %879 = vdwg.mxu0
  %v880 = vsel %vm255, %v872, -inf
  %881 = vmax.xlane.f32.xlu0 %v880
  %v882 = vpop.xlane.xlu0 %881
  %v883 = vsel %vm255, %v877, -inf
  %884 = vmax.xlane.f32.xlu0 %v883
  %v885 = vpop.xlane.xlu0 %884
  %v886 = vsub.f32 %v872, %v882
  %v887 = vsub.f32 %v877, %v885
  %v888 = vmul.f32 %v886, 1.442695
  %v889 = vpow.pop %v888
  %v890 = vmul.f32 %v887, 1.442695
  %v891 = vpow.pop %v890
  %v892 = vsel %vm255, %v889, 0.0
  %893 = vadd.xlane.f32.xlu0 %v892
  %v894 = vpop.xlane.xlu0 %893
  %v895 = vsel %vm255, %v891, 0.0
  %896 = vadd.xlane.f32.xlu0 %v895
  %v897 = vpop.xlane.xlu0 %896
  %v898 = vrcp.pop %v894
  %v899 = vmul.f32 %v889, %v898
  %v900 = vrcp.pop %v897
  %v901 = vmul.f32 %v891, %v900
  %902 = vrot.lane.b32.xlu0 %v157, 40
  %v903 = vpop.permute.xlu0 %902
  %904 = vrot.lane.b32.xlu0 %v162, 40
  %v905 = vpop.permute.xlu0 %904
  %v909 = vsel %vm255, %v899, 0
  %v912 = vsel %vm255, %v901, 0
  %914 = vmatprep.subr.mxu0 0.0
  %915 = vmatpush1.msra.mxu0 %v903
  %916 = vmatprep.subr.mxu0 0.0
  %917 = vmatpush1.msra.mxu0 %v905
  %918 = vmatprep.subr.mxu0 0.0
  %919 = vmatpush1.msra.mxu0 0.0
  %920 = vmatprep.subr.mxu0 0.0
  %921 = vmatpush1.msra.mxu0 0.0
  %922 = vmatprep.subr.mxu0 0.0
  %923 = vmatpush1.msra.mxu0 0.0
  %924 = vmatprep.subr.mxu0 0.0
  %925 = vmatpush1.msra.mxu0 0.0
  %926 = vmatprep.subr.mxu0 0.0
  %927 = vmatpush1.msra.mxu0 0.0
  %928 = vmatprep.subr.mxu0 0.0
  %929 = vmatpush1.msra.mxu0 0.0
  %930 = vmatprep.subr.mxu0 0.0
  %931 = vmatpush1.msra.mxu0 0.0
  %932 = vmatprep.subr.mxu0 0.0
  %933 = vmatpush1.msra.mxu0 0.0
  %934 = vmatprep.subr.mxu0 0.0
  %935 = vmatpush1.msra.mxu0 0.0
  %936 = vmatprep.subr.mxu0 0.0
  %937 = vmatpush1.msra.mxu0 0.0
  %938 = vmatprep.subr.mxu0 0.0
  %939 = vmatpush1.msra.mxu0 0.0
  %940 = vmatprep.subr.mxu0 0.0
  %941 = vmatpush1.msra.mxu0 0.0
  %942 = vmatprep.subr.mxu0 0.0
  %943 = vmatpush1.msra.mxu0 0.0
  %944 = vmatprep.subr.mxu0 0.0
  %945 = vmatpush1.msra.mxu0 0.0
  %946 = vmatprep.subr.mxu0 0.0
  %947 = vmatpush1.msra.mxu0 0.0
  %948 = vmatprep.subr.mxu0 0.0
  %949 = vmatpush1.msra.mxu0 0.0
  %950 = vmatprep.subr.mxu0 0.0
  %951 = vmatpush1.msra.mxu0 0.0
  %952 = vmatprep.subr.mxu0 0.0
  %953 = vmatpush1.msra.mxu0 0.0
  %954 = vmatprep.subr.mxu0 0.0
  %955 = vmatpush1.msra.mxu0 0.0
  %956 = vmatprep.subr.mxu0 0.0
  %957 = vmatpush1.msra.mxu0 0.0
  %958 = vmatprep.subr.mxu0 0.0
  %959 = vmatpush1.msra.mxu0 0.0
  %960 = vmatprep.subr.mxu0 0.0
  %961 = vmatpush1.msra.mxu0 0.0
  %962 = vmatprep.subr.mxu0 0.0
  %963 = vmatpush1.msra.mxu0 0.0
  %964 = vmatprep.subr.mxu0 0.0
  %965 = vmatpush1.msra.mxu0 0.0
  %966 = vmatprep.subr.mxu0 0.0
  %967 = vmatpush1.msra.mxu0 0.0
  %968 = vmatprep.subr.mxu0 0.0
  %969 = vmatpush1.msra.mxu0 0.0
  %970 = vmatprep.subr.mxu0 0.0
  %971 = vmatpush1.msra.mxu0 0.0
  %972 = vmatprep.subr.mxu0 0.0
  %973 = vmatpush1.msra.mxu0 0.0
  %974 = vmatprep.subr.mxu0 0.0
  %975 = vmatpush1.msra.mxu0 0.0
  %976 = vmatprep.subr.mxu0 0.0
  %977 = vmatpush1.msra.mxu0 0.0
  %978 = vmatprep.mubr.f32.mxu0 0.0
  %979 = vmatmul.mubr.f32.gmra.mrb[0].mxu0 %v909
  %v980 = vpop.f32.mrb[0].mxu0
  %v981 = vadd.f32 0.0, %v980
  %v982 = vpop.f32.mrb[0].mxu0
  %983 = vmatprep.mubr.f32.mxu0 0.0
  %984 = vmatmul.mubr.f32.gmra.mrb[0].mxu0 %v912
  %v985 = vpop.f32.mrb[0].mxu0
  %v986 = vadd.f32 0.0, %v985
  %v987 = vpop.f32.mrb[0].mxu0
  %988 = vdwg.mxu0
  %991 = vrot.lane.b32.xlu0 %v981, 24
  %v992 = vpop.permute.xlu0 %991
  %993 = vrot.lane.b32.xlu0 %v986, 24
  %v994 = vpop.permute.xlu0 %993
  %vm997 = vcmask 261312
  %998 = vst.msk [vmem:[#allocation2] sm:$0xff] %vm997, %v992
  %999 = vst.msk [vmem:[#allocation2 + $0x8] sm:$0xff] %vm997, %v994
  %v1000 = vld [vmem:[#allocation2] sm:$0xff]
  %v1001 = vld [vmem:[#allocation2 + $0x8] sm:$0xff]
  %1006 = vrot.lane.b32.xlu0 %v51, 32
  %v1007 = vpop.permute.xlu0 %1006
  %1008 = vrot.lane.b32.xlu0 %v52, 32
  %v1009 = vpop.permute.xlu0 %1008
  %1010 = vrot.lane.b32.xlu0 %v53, 32
  %v1011 = vpop.permute.xlu0 %1010
  %1012 = vrot.lane.b32.xlu0 %v54, 32
  %v1013 = vpop.permute.xlu0 %1012
  %1019 = vrot.lane.b32.xlu0 %v82, 32
  %v1020 = vpop.permute.xlu0 %1019
  %v1023 = vsel %vm83, %v1000, 0
  %v1026 = vsel %vm83, %v1001, 0
  %1028 = vmatprep.subr.mxu0 0.0
  %1029 = vmatpush1.msra.mxu0 %v1007
  %1030 = vmatprep.subr.mxu0 0.0
  %1031 = vmatpush1.msra.mxu0 %v1009
  %1032 = vmatprep.subr.mxu0 0.0
  %1033 = vmatpush1.msra.mxu0 %v1011
  %1034 = vmatprep.subr.mxu0 0.0
  %1035 = vmatpush1.msra.mxu0 %v1013
  %1036 = vmatprep.subr.mxu0 0.0
  %1037 = vmatpush1.msra.mxu0 0.0
  %1038 = vmatprep.subr.mxu0 0.0
  %1039 = vmatpush1.msra.mxu0 0.0
  %1040 = vmatprep.subr.mxu0 0.0
  %1041 = vmatpush1.msra.mxu0 0.0
  %1042 = vmatprep.subr.mxu0 0.0
  %1043 = vmatpush1.msra.mxu0 0.0
  %1044 = vmatprep.subr.mxu0 0.0
  %1045 = vmatpush1.msra.mxu0 0.0
  %1046 = vmatprep.subr.mxu0 0.0
  %1047 = vmatpush1.msra.mxu0 0.0
  %1048 = vmatprep.subr.mxu0 0.0
  %1049 = vmatpush1.msra.mxu0 0.0
  %1050 = vmatprep.subr.mxu0 0.0
  %1051 = vmatpush1.msra.mxu0 0.0
  %1052 = vmatprep.subr.mxu0 0.0
  %1053 = vmatpush1.msra.mxu0 0.0
  %1054 = vmatprep.subr.mxu0 0.0
  %1055 = vmatpush1.msra.mxu0 0.0
  %1056 = vmatprep.subr.mxu0 0.0
  %1057 = vmatpush1.msra.mxu0 0.0
  %1058 = vmatprep.subr.mxu0 0.0
  %1059 = vmatpush1.msra.mxu0 0.0
  %1060 = vmatprep.subr.mxu0 0.0
  %1061 = vmatpush1.msra.mxu0 0.0
  %1062 = vmatprep.subr.mxu0 0.0
  %1063 = vmatpush1.msra.mxu0 0.0
  %1064 = vmatprep.subr.mxu0 0.0
  %1065 = vmatpush1.msra.mxu0 0.0
  %1066 = vmatprep.subr.mxu0 0.0
  %1067 = vmatpush1.msra.mxu0 0.0
  %1068 = vmatprep.subr.mxu0 0.0
  %1069 = vmatpush1.msra.mxu0 0.0
  %1070 = vmatprep.subr.mxu0 0.0
  %1071 = vmatpush1.msra.mxu0 0.0
  %1072 = vmatprep.subr.mxu0 0.0
  %1073 = vmatpush1.msra.mxu0 0.0
  %1074 = vmatprep.subr.mxu0 0.0
  %1075 = vmatpush1.msra.mxu0 0.0
  %1076 = vmatprep.subr.mxu0 0.0
  %1077 = vmatpush1.msra.mxu0 0.0
  %1078 = vmatprep.subr.mxu0 0.0
  %1079 = vmatpush1.msra.mxu0 0.0
  %1080 = vmatprep.subr.mxu0 0.0
  %1081 = vmatpush1.msra.mxu0 0.0
  %1082 = vmatprep.subr.mxu0 0.0
  %1083 = vmatpush1.msra.mxu0 0.0
  %1084 = vmatprep.subr.mxu0 0.0
  %1085 = vmatpush1.msra.mxu0 0.0
  %1086 = vmatprep.subr.mxu0 0.0
  %1087 = vmatpush1.msra.mxu0 0.0
  %1088 = vmatprep.subr.mxu0 0.0
  %1089 = vmatpush1.msra.mxu0 0.0
  %1090 = vmatprep.subr.mxu0 0.0
  %1091 = vmatpush1.msra.mxu0 0.0
  %1092 = vmatprep.mubr.f32.mxu0 0.0
  %1093 = vmatmul.mubr.f32.gmra.mrb[0].mxu0 %v1023
  %v1094 = vpop.f32.mrb[0].mxu0
  %v1095 = vadd.f32 %v1020, %v1094
  %v1096 = vpop.f32.mrb[0].mxu0
  %1097 = vmatprep.mubr.f32.mxu0 0.0
  %1098 = vmatmul.mubr.f32.gmra.mrb[0].mxu0 %v1026
  %v1099 = vpop.f32.mrb[0].mxu0
  %v1100 = vadd.f32 %v1020, %v1099
  %v1101 = vpop.f32.mrb[0].mxu0
  %1102 = vdwg.mxu0
  %v1103 = vadd.f32 %v41, %v1095
  %v1104 = vadd.f32 %v42, %v1100
  %v1105 = vsel %vm83, %v1103, 0.0
  %1106 = vadd.xlane.f32.xlu0 %v1105
  %v1107 = vpop.xlane.xlu0 %1106
  %v1108 = vsel %vm83, %v1104, 0.0
  %1109 = vadd.xlane.f32.xlu0 %v1108
  %v1110 = vpop.xlane.xlu0 %1109
  %v1111 = vrcp.pop 32.0
  %v1112 = vmul.f32 %v1107, %v1111
  %v1113 = vmul.f32 %v1110, %v1111
  %v1114 = vsub.f32 %v1103, %v1112
  %v1115 = vsub.f32 %v1104, %v1113
  %v1116 = vmul.f32 %v1114, %v1114
  %v1117 = vmul.f32 %v1115, %v1115
  %v1118 = vsel %vm83, %v1116, 0.0
  %1119 = vadd.xlane.f32.xlu0 %v1118
  %v1120 = vpop.xlane.xlu0 %1119
  %v1121 = vsel %vm83, %v1117, 0.0
  %1122 = vadd.xlane.f32.xlu0 %v1121
  %v1123 = vpop.xlane.xlu0 %1122
  %v1124 = vmul.f32 %v1120, %v1111
  %v1125 = vmul.f32 %v1123, %v1111
  %v1126 = vadd.f32 %v1124, 1e-05
  %v1127 = vadd.f32 %v1125, 1e-05
  %v1128 = vrsqrt.pop %v1126
  %v1129 = vrsqrt.pop %v1127
  %v1130 = vmul.f32 %v1114, %v1128
  %v1131 = vmul.f32 %v1115, %v1129
  %v1132 = vlaneseq
  %v1133 = vshrl.u32 %v1132, 7
  %v1134 = vsub.s32 0, %v1133
  %v1135 = vrot.slane %v78, %v1134
  %v1136 = vmul.f32 %v1130, %v1135
  %v1137 = vmul.f32 %v1131, %v1135
  %v1138 = vlaneseq
  %v1139 = vshrl.u32 %v1138, 7
  %v1140 = vsub.s32 1, %v1139
  %v1141 = vrot.slane %v78, %v1140
  %v1142 = vadd.f32 %v1136, %v1141
  %v1143 = vadd.f32 %v1137, %v1141
  %v1144 = vmul.f32 %v1142, 5.656854
  %v1145 = vmul.f32 %v1143, 5.656854
  %v1146 = vadd.f32 %v1144, %v45
  %v1147 = vadd.f32 %v1145, %v46
  %v1148 = vlaneseq
  %v1149 = vshrl.u32 %v1148, 7
  %v1150 = vsub.s32 1, %v1149
  %v1151 = vrot.slane %v63, %v1150
  %v1153 = vsel %vm83, %v1146, 0
  %v1156 = vsel %vm83, %v1147, 0
  %1158 = vmatprep.subr.mxu0 0.0
  %1159 = vmatpush1.msra.mxu0 %v55
  %1160 = vmatprep.subr.mxu0 0.0
  %1161 = vmatpush1.msra.mxu0 %v56
  %1162 = vmatprep.subr.mxu0 0.0
  %1163 = vmatpush1.msra.mxu0 %v57
  %1164 = vmatprep.subr.mxu0 0.0
  %1165 = vmatpush1.msra.mxu0 %v58
  %1166 = vmatprep.subr.mxu0 0.0
  %1167 = vmatpush1.msra.mxu0 0.0
  %1168 = vmatprep.subr.mxu0 0.0
  %1169 = vmatpush1.msra.mxu0 0.0
  %1170 = vmatprep.subr.mxu0 0.0
  %1171 = vmatpush1.msra.mxu0 0.0
  %1172 = vmatprep.subr.mxu0 0.0
  %1173 = vmatpush1.msra.mxu0 0.0
  %1174 = vmatprep.subr.mxu0 0.0
  %1175 = vmatpush1.msra.mxu0 0.0
  %1176 = vmatprep.subr.mxu0 0.0
  %1177 = vmatpush1.msra.mxu0 0.0
  %1178 = vmatprep.subr.mxu0 0.0
  %1179 = vmatpush1.msra.mxu0 0.0
  %1180 = vmatprep.subr.mxu0 0.0
  %1181 = vmatpush1.msra.mxu0 0.0
  %1182 = vmatprep.subr.mxu0 0.0
  %1183 = vmatpush1.msra.mxu0 0.0
  %1184 = vmatprep.subr.mxu0 0.0
  %1185 = vmatpush1.msra.mxu0 0.0
  %1186 = vmatprep.subr.mxu0 0.0
  %1187 = vmatpush1.msra.mxu0 0.0
  %1188 = vmatprep.subr.mxu0 0.0
  %1189 = vmatpush1.msra.mxu0 0.0
  %1190 = vmatprep.subr.mxu0 0.0
  %1191 = vmatpush1.msra.mxu0 0.0
  %1192 = vmatprep.subr.mxu0 0.0
  %1193 = vmatpush1.msra.mxu0 0.0
  %1194 = vmatprep.subr.mxu0 0.0
  %1195 = vmatpush1.msra.mxu0 0.0
  %1196 = vmatprep.subr.mxu0 0.0
  %1197 = vmatpush1.msra.mxu0 0.0
  %1198 = vmatprep.subr.mxu0 0.0
  %1199 = vmatpush1.msra.mxu0 0.0
  %1200 = vmatprep.subr.mxu0 0.0
  %1201 = vmatpush1.msra.mxu0 0.0
  %1202 = vmatprep.subr.mxu0 0.0
  %1203 = vmatpush1.msra.mxu0 0.0
  %1204 = vmatprep.subr.mxu0 0.0
  %1205 = vmatpush1.msra.mxu0 0.0
  %1206 = vmatprep.subr.mxu0 0.0
  %1207 = vmatpush1.msra.mxu0 0.0
  %1208 = vmatprep.subr.mxu0 0.0
  %1209 = vmatpush1.msra.mxu0 0.0
  %1210 = vmatprep.subr.mxu0 0.0
  %1211 = vmatpush1.msra.mxu0 0.0
  %1212 = vmatprep.subr.mxu0 0.0
  %1213 = vmatpush1.msra.mxu0 0.0
  %1214 = vmatprep.subr.mxu0 0.0
  %1215 = vmatpush1.msra.mxu0 0.0
  %1216 = vmatprep.subr.mxu0 0.0
  %1217 = vmatpush1.msra.mxu0 0.0
  %1218 = vmatprep.subr.mxu0 0.0
  %1219 = vmatpush1.msra.mxu0 0.0
  %1220 = vmatprep.subr.mxu0 0.0
  %1221 = vmatpush1.msra.mxu0 0.0
  %1222 = vmatprep.mubr.f32.mxu0 0.0
  %1223 = vmatmul.mubr.f32.gmra.mrb[0].mxu0 %v1153
  %v1224 = vpop.f32.mrb[0].mxu0
  %v1225 = vadd.f32 %v1151, %v1224
  %v1226 = vpop.f32.mrb[0].mxu0
  %1227 = vmatprep.mubr.f32.mxu0 0.0
  %1228 = vmatmul.mubr.f32.gmra.mrb[0].mxu0 %v1156
  %v1229 = vpop.f32.mrb[0].mxu0
  %v1230 = vadd.f32 %v1151, %v1229
  %v1231 = vpop.f32.mrb[0].mxu0
  %1232 = vdwg.mxu0
  %1235 = vrot.lane.b32.xlu0 %v1225, 96
  %v1236 = vpop.permute.xlu0 %1235
  %1237 = vrot.lane.b32.xlu0 %v1230, 96
  %v1238 = vpop.permute.xlu0 %1237
  %v1239 = vsel %vm171, %v1225, 0
  %v1241 = vsel %vm171, %v1230, 0
  %v1243 = vsel %vm171, %v1236, 0
  %v1245 = vsel %vm171, %v1238, 0
  %1247 = vmatprep.subr.mxu0 0.0
  %1248 = vmatpush1.xpose.msra.mxu0 %v1243
  %1249 = vmatprep.subr.mxu0 0.0
  %1250 = vmatpush1.xpose.msra.mxu0 %v1245
  %1251 = vmatprep.subr.mxu0 0.0
  %1252 = vmatpush1.xpose.msra.mxu0 0.0
  %1253 = vmatprep.subr.mxu0 0.0
  %1254 = vmatpush1.xpose.msra.mxu0 0.0
  %1255 = vmatprep.subr.mxu0 0.0
  %1256 = vmatpush1.xpose.msra.mxu0 0.0
  %1257 = vmatprep.subr.mxu0 0.0
  %1258 = vmatpush1.xpose.msra.mxu0 0.0
  %1259 = vmatprep.subr.mxu0 0.0
  %1260 = vmatpush1.xpose.msra.mxu0 0.0
  %1261 = vmatprep.subr.mxu0 0.0
  %1262 = vmatpush1.xpose.msra.mxu0 0.0
  %1263 = vmatprep.subr.mxu0 0.0
  %1264 = vmatpush1.xpose.msra.mxu0 0.0
  %1265 = vmatprep.subr.mxu0 0.0
  %1266 = vmatpush1.xpose.msra.mxu0 0.0
  %1267 = vmatprep.subr.mxu0 0.0
  %1268 = vmatpush1.xpose.msra.mxu0 0.0
  %1269 = vmatprep.subr.mxu0 0.0
  %1270 = vmatpush1.xpose.msra.mxu0 0.0
  %1271 = vmatprep.subr.mxu0 0.0
  %1272 = vmatpush1.xpose.msra.mxu0 0.0
  %1273 = vmatprep.subr.mxu0 0.0
  %1274 = vmatpush1.xpose.msra.mxu0 0.0
  %1275 = vmatprep.subr.mxu0 0.0
  %1276 = vmatpush1.xpose.msra.mxu0 0.0
  %1277 = vmatprep.subr.mxu0 0.0
  %1278 = vmatpush1.xpose.msra.mxu0 0.0
  %1279 = vmatprep.subr.mxu0 0.0
  %1280 = vmatpush1.xpose.msra.mxu0 0.0
  %1281 = vmatprep.subr.mxu0 0.0
  %1282 = vmatpush1.xpose.msra.mxu0 0.0
  %1283 = vmatprep.subr.mxu0 0.0
  %1284 = vmatpush1.xpose.msra.mxu0 0.0
  %1285 = vmatprep.subr.mxu0 0.0
  %1286 = vmatpush1.xpose.msra.mxu0 0.0
  %1287 = vmatprep.subr.mxu0 0.0
  %1288 = vmatpush1.xpose.msra.mxu0 0.0
  %1289 = vmatprep.subr.mxu0 0.0
  %1290 = vmatpush1.xpose.msra.mxu0 0.0
  %1291 = vmatprep.subr.mxu0 0.0
  %1292 = vmatpush1.xpose.msra.mxu0 0.0
  %1293 = vmatprep.subr.mxu0 0.0
  %1294 = vmatpush1.xpose.msra.mxu0 0.0
  %1295 = vmatprep.subr.mxu0 0.0
  %1296 = vmatpush1.xpose.msra.mxu0 0.0
  %1297 = vmatprep.subr.mxu0 0.0
  %1298 = vmatpush1.xpose.msra.mxu0 0.0
  %1299 = vmatprep.subr.mxu0 0.0
  %1300 = vmatpush1.xpose.msra.mxu0 0.0
  %1301 = vmatprep.subr.mxu0 0.0
  %1302 = vmatpush1.xpose.msra.mxu0 0.0
  %1303 = vmatprep.subr.mxu0 0.0
  %1304 = vmatpush1.xpose.msra.mxu0 0.0
  %1305 = vmatprep.subr.mxu0 0.0
  %1306 = vmatpush1.xpose.msra.mxu0 0.0
  %1307 = vmatprep.subr.mxu0 0.0
  %1308 = vmatpush1.xpose.msra.mxu0 0.0
  %1309 = vmatprep.subr.mxu0 0.0
  %1310 = vmatpush1.xpose.msra.mxu0 0.0
  %1311 = vmatprep.mubr.f32.mxu0 0.0
  %1312 = vmatmul.mubr.f32.gmra.mrb[0].mxu0 %v1239
  %v1313 = vpop.f32.mrb[0].mxu0
  %v1314 = vadd.f32 %v47, %v1313
  %v1315 = vpop.f32.mrb[0].mxu0
  %1316 = vmatprep.mubr.f32.mxu0 0.0
  %1317 = vmatmul.mubr.f32.gmra.mrb[0].mxu0 %v1241
  %v1318 = vpop.f32.mrb[0].mxu0
  %v1319 = vadd.f32 %v48, %v1318
  %v1320 = vpop.f32.mrb[0].mxu0
  %1321 = vdwg.mxu0
  %v1322 = vsel %vm255, %v1314, -inf
  %1323 = vmax.xlane.f32.xlu0 %v1322
  %v1324 = vpop.xlane.xlu0 %1323
  %v1325 = vsel %vm255, %v1319, -inf
  %1326 = vmax.xlane.f32.xlu0 %v1325
  %v1327 = vpop.xlane.xlu0 %1326
  %v1328 = vsub.f32 %v1314, %v1324
  %v1329 = vsub.f32 %v1319, %v1327
  %v1330 = vmul.f32 %v1328, 1.442695
  %v1331 = vpow.pop %v1330
  %v1332 = vmul.f32 %v1329, 1.442695
  %v1333 = vpow.pop %v1332
  %v1334 = vsel %vm255, %v1331, 0.0
  %1335 = vadd.xlane.f32.xlu0 %v1334
  %v1336 = vpop.xlane.xlu0 %1335
  %v1337 = vsel %vm255, %v1333, 0.0
  %1338 = vadd.xlane.f32.xlu0 %v1337
  %v1339 = vpop.xlane.xlu0 %1338
  %v1340 = vrcp.pop %v1336
  %v1341 = vmul.f32 %v1331, %v1340
  %v1342 = vrcp.pop %v1339
  %v1343 = vmul.f32 %v1333, %v1342
  %1344 = vrot.lane.b32.xlu0 %v1225, 64
  %v1345 = vpop.permute.xlu0 %1344
  %1346 = vrot.lane.b32.xlu0 %v1230, 64
  %v1347 = vpop.permute.xlu0 %1346
  %v1351 = vsel %vm255, %v1341, 0
  %v1354 = vsel %vm255, %v1343, 0
  %1356 = vmatprep.subr.mxu0 0.0
  %1357 = vmatpush1.msra.mxu0 %v1345
  %1358 = vmatprep.subr.mxu0 0.0
  %1359 = vmatpush1.msra.mxu0 %v1347
  %1360 = vmatprep.subr.mxu0 0.0
  %1361 = vmatpush1.msra.mxu0 0.0
  %1362 = vmatprep.subr.mxu0 0.0
  %1363 = vmatpush1.msra.mxu0 0.0
  %1364 = vmatprep.subr.mxu0 0.0
  %1365 = vmatpush1.msra.mxu0 0.0
  %1366 = vmatprep.subr.mxu0 0.0
  %1367 = vmatpush1.msra.mxu0 0.0
  %1368 = vmatprep.subr.mxu0 0.0
  %1369 = vmatpush1.msra.mxu0 0.0
  %1370 = vmatprep.subr.mxu0 0.0
  %1371 = vmatpush1.msra.mxu0 0.0
  %1372 = vmatprep.subr.mxu0 0.0
  %1373 = vmatpush1.msra.mxu0 0.0
  %1374 = vmatprep.subr.mxu0 0.0
  %1375 = vmatpush1.msra.mxu0 0.0
  %1376 = vmatprep.subr.mxu0 0.0
  %1377 = vmatpush1.msra.mxu0 0.0
  %1378 = vmatprep.subr.mxu0 0.0
  %1379 = vmatpush1.msra.mxu0 0.0
  %1380 = vmatprep.subr.mxu0 0.0
  %1381 = vmatpush1.msra.mxu0 0.0
  %1382 = vmatprep.subr.mxu0 0.0
  %1383 = vmatpush1.msra.mxu0 0.0
  %1384 = vmatprep.subr.mxu0 0.0
  %1385 = vmatpush1.msra.mxu0 0.0
  %1386 = vmatprep.subr.mxu0 0.0
  %1387 = vmatpush1.msra.mxu0 0.0
  %1388 = vmatprep.subr.mxu0 0.0
  %1389 = vmatpush1.msra.mxu0 0.0
  %1390 = vmatprep.subr.mxu0 0.0
  %1391 = vmatpush1.msra.mxu0 0.0
  %1392 = vmatprep.subr.mxu0 0.0
  %1393 = vmatpush1.msra.mxu0 0.0
  %1394 = vmatprep.subr.mxu0 0.0
  %1395 = vmatpush1.msra.mxu0 0.0
  %1396 = vmatprep.subr.mxu0 0.0
  %1397 = vmatpush1.msra.mxu0 0.0
  %1398 = vmatprep.subr.mxu0 0.0
  %1399 = vmatpush1.msra.mxu0 0.0
  %1400 = vmatprep.subr.mxu0 0.0
  %1401 = vmatpush1.msra.mxu0 0.0
  %1402 = vmatprep.subr.mxu0 0.0
  %1403 = vmatpush1.msra.mxu0 0.0
  %1404 = vmatprep.subr.mxu0 0.0
  %1405 = vmatpush1.msra.mxu0 0.0
  %1406 = vmatprep.subr.mxu0 0.0
  %1407 = vmatpush1.msra.mxu0 0.0
  %1408 = vmatprep.subr.mxu0 0.0
  %1409 = vmatpush1.msra.mxu0 0.0
  %1410 = vmatprep.subr.mxu0 0.0
  %1411 = vmatpush1.msra.mxu0 0.0
  %1412 = vmatprep.subr.mxu0 0.0
  %1413 = vmatpush1.msra.mxu0 0.0
  %1414 = vmatprep.subr.mxu0 0.0
  %1415 = vmatpush1.msra.mxu0 0.0
  %1416 = vmatprep.subr.mxu0 0.0
  %1417 = vmatpush1.msra.mxu0 0.0
  %1418 = vmatprep.subr.mxu0 0.0
  %1419 = vmatpush1.msra.mxu0 0.0
  %1420 = vmatprep.mubr.f32.mxu0 0.0
  %1421 = vmatmul.mubr.f32.gmra.mrb[0].mxu0 %v1351
  %v1422 = vpop.f32.mrb[0].mxu0
  %v1423 = vadd.f32 0.0, %v1422
  %v1424 = vpop.f32.mrb[0].mxu0
  %1425 = vmatprep.mubr.f32.mxu0 0.0
  %1426 = vmatmul.mubr.f32.gmra.mrb[0].mxu0 %v1354
  %v1427 = vpop.f32.mrb[0].mxu0
  %v1428 = vadd.f32 0.0, %v1427
  %v1429 = vpop.f32.mrb[0].mxu0
  %1430 = vdwg.mxu0
  %1431 = vst.msk [vmem:[#allocation2] sm:$0xff] %vm171, %v1423
  %1432 = vst.msk [vmem:[#allocation2 + $0x8] sm:$0xff] %vm171, %v1428
  %1433 = vrot.lane.b32.xlu0 %v1225, 120
  %v1434 = vpop.permute.xlu0 %1433
  %1435 = vrot.lane.b32.xlu0 %v1230, 120
  %v1436 = vpop.permute.xlu0 %1435
  %1437 = vrot.lane.b32.xlu0 %v1225, 88
  %v1438 = vpop.permute.xlu0 %1437
  %1439 = vrot.lane.b32.xlu0 %v1230, 88
  %v1440 = vpop.permute.xlu0 %1439
  %v1441 = vsel %vm171, %v1434, 0
  %v1443 = vsel %vm171, %v1436, 0
  %v1445 = vsel %vm171, %v1438, 0
  %v1447 = vsel %vm171, %v1440, 0
  %1449 = vmatprep.subr.mxu0 0.0
  %1450 = vmatpush1.xpose.msra.mxu0 %v1445
  %1451 = vmatprep.subr.mxu0 0.0
  %1452 = vmatpush1.xpose.msra.mxu0 %v1447
  %1453 = vmatprep.subr.mxu0 0.0
  %1454 = vmatpush1.xpose.msra.mxu0 0.0
  %1455 = vmatprep.subr.mxu0 0.0
  %1456 = vmatpush1.xpose.msra.mxu0 0.0
  %1457 = vmatprep.subr.mxu0 0.0
  %1458 = vmatpush1.xpose.msra.mxu0 0.0
  %1459 = vmatprep.subr.mxu0 0.0
  %1460 = vmatpush1.xpose.msra.mxu0 0.0
  %1461 = vmatprep.subr.mxu0 0.0
  %1462 = vmatpush1.xpose.msra.mxu0 0.0
  %1463 = vmatprep.subr.mxu0 0.0
  %1464 = vmatpush1.xpose.msra.mxu0 0.0
  %1465 = vmatprep.subr.mxu0 0.0
  %1466 = vmatpush1.xpose.msra.mxu0 0.0
  %1467 = vmatprep.subr.mxu0 0.0
  %1468 = vmatpush1.xpose.msra.mxu0 0.0
  %1469 = vmatprep.subr.mxu0 0.0
  %1470 = vmatpush1.xpose.msra.mxu0 0.0
  %1471 = vmatprep.subr.mxu0 0.0
  %1472 = vmatpush1.xpose.msra.mxu0 0.0
  %1473 = vmatprep.subr.mxu0 0.0
  %1474 = vmatpush1.xpose.msra.mxu0 0.0
  %1475 = vmatprep.subr.mxu0 0.0
  %1476 = vmatpush1.xpose.msra.mxu0 0.0
  %1477 = vmatprep.subr.mxu0 0.0
  %1478 = vmatpush1.xpose.msra.mxu0 0.0
  %1479 = vmatprep.subr.mxu0 0.0
  %1480 = vmatpush1.xpose.msra.mxu0 0.0
  %1481 = vmatprep.subr.mxu0 0.0
  %1482 = vmatpush1.xpose.msra.mxu0 0.0
  %1483 = vmatprep.subr.mxu0 0.0
  %1484 = vmatpush1.xpose.msra.mxu0 0.0
  %1485 = vmatprep.subr.mxu0 0.0
  %1486 = vmatpush1.xpose.msra.mxu0 0.0
  %1487 = vmatprep.subr.mxu0 0.0
  %1488 = vmatpush1.xpose.msra.mxu0 0.0
  %1489 = vmatprep.subr.mxu0 0.0
  %1490 = vmatpush1.xpose.msra.mxu0 0.0
  %1491 = vmatprep.subr.mxu0 0.0
  %1492 = vmatpush1.xpose.msra.mxu0 0.0
  %1493 = vmatprep.subr.mxu0 0.0
  %1494 = vmatpush1.xpose.msra.mxu0 0.0
  %1495 = vmatprep.subr.mxu0 0.0
  %1496 = vmatpush1.xpose.msra.mxu0 0.0
  %1497 = vmatprep.subr.mxu0 0.0
  %1498 = vmatpush1.xpose.msra.mxu0 0.0
  %1499 = vmatprep.subr.mxu0 0.0
  %1500 = vmatpush1.xpose.msra.mxu0 0.0
  %1501 = vmatprep.subr.mxu0 0.0
  %1502 = vmatpush1.xpose.msra.mxu0 0.0
  %1503 = vmatprep.subr.mxu0 0.0
  %1504 = vmatpush1.xpose.msra.mxu0 0.0
  %1505 = vmatprep.subr.mxu0 0.0
  %1506 = vmatpush1.xpose.msra.mxu0 0.0
  %1507 = vmatprep.subr.mxu0 0.0
  %1508 = vmatpush1.xpose.msra.mxu0 0.0
  %1509 = vmatprep.subr.mxu0 0.0
  %1510 = vmatpush1.xpose.msra.mxu0 0.0
  %1511 = vmatprep.subr.mxu0 0.0
  %1512 = vmatpush1.xpose.msra.mxu0 0.0
  %1513 = vmatprep.mubr.f32.mxu0 0.0
  %1514 = vmatmul.mubr.f32.gmra.mrb[0].mxu0 %v1441
  %v1515 = vpop.f32.mrb[0].mxu0
  %v1516 = vadd.f32 %v47, %v1515
  %v1517 = vpop.f32.mrb[0].mxu0
  %1518 = vmatprep.mubr.f32.mxu0 0.0
  %1519 = vmatmul.mubr.f32.gmra.mrb[0].mxu0 %v1443
  %v1520 = vpop.f32.mrb[0].mxu0
  %v1521 = vadd.f32 %v48, %v1520
  %v1522 = vpop.f32.mrb[0].mxu0
  %1523 = vdwg.mxu0
  %v1524 = vsel %vm255, %v1516, -inf
  %1525 = vmax.xlane.f32.xlu0 %v1524
  %v1526 = vpop.xlane.xlu0 %1525
  %v1527 = vsel %vm255, %v1521, -inf
  %1528 = vmax.xlane.f32.xlu0 %v1527
  %v1529 = vpop.xlane.xlu0 %1528
  %v1530 = vsub.f32 %v1516, %v1526
  %v1531 = vsub.f32 %v1521, %v1529
  %v1532 = vmul.f32 %v1530, 1.442695
  %v1533 = vpow.pop %v1532
  %v1534 = vmul.f32 %v1531, 1.442695
  %v1535 = vpow.pop %v1534
  %v1536 = vsel %vm255, %v1533, 0.0
  %1537 = vadd.xlane.f32.xlu0 %v1536
  %v1538 = vpop.xlane.xlu0 %1537
  %v1539 = vsel %vm255, %v1535, 0.0
  %1540 = vadd.xlane.f32.xlu0 %v1539
  %v1541 = vpop.xlane.xlu0 %1540
  %v1542 = vrcp.pop %v1538
  %v1543 = vmul.f32 %v1533, %v1542
  %v1544 = vrcp.pop %v1541
  %v1545 = vmul.f32 %v1535, %v1544
  %1546 = vrot.lane.b32.xlu0 %v1225, 56
  %v1547 = vpop.permute.xlu0 %1546
  %1548 = vrot.lane.b32.xlu0 %v1230, 56
  %v1549 = vpop.permute.xlu0 %1548
  %v1553 = vsel %vm255, %v1543, 0
  %v1556 = vsel %vm255, %v1545, 0
  %1558 = vmatprep.subr.mxu0 0.0
  %1559 = vmatpush1.msra.mxu0 %v1547
  %1560 = vmatprep.subr.mxu0 0.0
  %1561 = vmatpush1.msra.mxu0 %v1549
  %1562 = vmatprep.subr.mxu0 0.0
  %1563 = vmatpush1.msra.mxu0 0.0
  %1564 = vmatprep.subr.mxu0 0.0
  %1565 = vmatpush1.msra.mxu0 0.0
  %1566 = vmatprep.subr.mxu0 0.0
  %1567 = vmatpush1.msra.mxu0 0.0
  %1568 = vmatprep.subr.mxu0 0.0
  %1569 = vmatpush1.msra.mxu0 0.0
  %1570 = vmatprep.subr.mxu0 0.0
  %1571 = vmatpush1.msra.mxu0 0.0
  %1572 = vmatprep.subr.mxu0 0.0
  %1573 = vmatpush1.msra.mxu0 0.0
  %1574 = vmatprep.subr.mxu0 0.0
  %1575 = vmatpush1.msra.mxu0 0.0
  %1576 = vmatprep.subr.mxu0 0.0
  %1577 = vmatpush1.msra.mxu0 0.0
  %1578 = vmatprep.subr.mxu0 0.0
  %1579 = vmatpush1.msra.mxu0 0.0
  %1580 = vmatprep.subr.mxu0 0.0
  %1581 = vmatpush1.msra.mxu0 0.0
  %1582 = vmatprep.subr.mxu0 0.0
  %1583 = vmatpush1.msra.mxu0 0.0
  %1584 = vmatprep.subr.mxu0 0.0
  %1585 = vmatpush1.msra.mxu0 0.0
  %1586 = vmatprep.subr.mxu0 0.0
  %1587 = vmatpush1.msra.mxu0 0.0
  %1588 = vmatprep.subr.mxu0 0.0
  %1589 = vmatpush1.msra.mxu0 0.0
  %1590 = vmatprep.subr.mxu0 0.0
  %1591 = vmatpush1.msra.mxu0 0.0
  %1592 = vmatprep.subr.mxu0 0.0
  %1593 = vmatpush1.msra.mxu0 0.0
  %1594 = vmatprep.subr.mxu0 0.0
  %1595 = vmatpush1.msra.mxu0 0.0
  %1596 = vmatprep.subr.mxu0 0.0
  %1597 = vmatpush1.msra.mxu0 0.0
  %1598 = vmatprep.subr.mxu0 0.0
  %1599 = vmatpush1.msra.mxu0 0.0
  %1600 = vmatprep.subr.mxu0 0.0
  %1601 = vmatpush1.msra.mxu0 0.0
  %1602 = vmatprep.subr.mxu0 0.0
  %1603 = vmatpush1.msra.mxu0 0.0
  %1604 = vmatprep.subr.mxu0 0.0
  %1605 = vmatpush1.msra.mxu0 0.0
  %1606 = vmatprep.subr.mxu0 0.0
  %1607 = vmatpush1.msra.mxu0 0.0
  %1608 = vmatprep.subr.mxu0 0.0
  %1609 = vmatpush1.msra.mxu0 0.0
  %1610 = vmatprep.subr.mxu0 0.0
  %1611 = vmatpush1.msra.mxu0 0.0
  %1612 = vmatprep.subr.mxu0 0.0
  %1613 = vmatpush1.msra.mxu0 0.0
  %1614 = vmatprep.subr.mxu0 0.0
  %1615 = vmatpush1.msra.mxu0 0.0
  %1616 = vmatprep.subr.mxu0 0.0
  %1617 = vmatpush1.msra.mxu0 0.0
  %1618 = vmatprep.subr.mxu0 0.0
  %1619 = vmatpush1.msra.mxu0 0.0
  %1620 = vmatprep.subr.mxu0 0.0
  %1621 = vmatpush1.msra.mxu0 0.0
  %1622 = vmatprep.mubr.f32.mxu0 0.0
  %1623 = vmatmul.mubr.f32.gmra.mrb[0].mxu0 %v1553
  %v1624 = vpop.f32.mrb[0].mxu0
  %v1625 = vadd.f32 0.0, %v1624
  %v1626 = vpop.f32.mrb[0].mxu0
  %1627 = vmatprep.mubr.f32.mxu0 0.0
  %1628 = vmatmul.mubr.f32.gmra.mrb[0].mxu0 %v1556
  %v1629 = vpop.f32.mrb[0].mxu0
  %v1630 = vadd.f32 0.0, %v1629
  %v1631 = vpop.f32.mrb[0].mxu0
  %1632 = vdwg.mxu0
  %1635 = vrot.lane.b32.xlu0 %v1625, 8
  %v1636 = vpop.permute.xlu0 %1635
  %1637 = vrot.lane.b32.xlu0 %v1630, 8
  %v1638 = vpop.permute.xlu0 %1637
  %1641 = vst.msk [vmem:[#allocation2] sm:$0xff] %vm575, %v1636
  %1642 = vst.msk [vmem:[#allocation2 + $0x8] sm:$0xff] %vm575, %v1638
  %1643 = vrot.lane.b32.xlu0 %v1225, 112
  %v1644 = vpop.permute.xlu0 %1643
  %1645 = vrot.lane.b32.xlu0 %v1230, 112
  %v1646 = vpop.permute.xlu0 %1645
  %1647 = vrot.lane.b32.xlu0 %v1225, 80
  %v1648 = vpop.permute.xlu0 %1647
  %1649 = vrot.lane.b32.xlu0 %v1230, 80
  %v1650 = vpop.permute.xlu0 %1649
  %v1651 = vsel %vm171, %v1644, 0
  %v1653 = vsel %vm171, %v1646, 0
  %v1655 = vsel %vm171, %v1648, 0
  %v1657 = vsel %vm171, %v1650, 0
  %1659 = vmatprep.subr.mxu0 0.0
  %1660 = vmatpush1.xpose.msra.mxu0 %v1655
  %1661 = vmatprep.subr.mxu0 0.0
  %1662 = vmatpush1.xpose.msra.mxu0 %v1657
  %1663 = vmatprep.subr.mxu0 0.0
  %1664 = vmatpush1.xpose.msra.mxu0 0.0
  %1665 = vmatprep.subr.mxu0 0.0
  %1666 = vmatpush1.xpose.msra.mxu0 0.0
  %1667 = vmatprep.subr.mxu0 0.0
  %1668 = vmatpush1.xpose.msra.mxu0 0.0
  %1669 = vmatprep.subr.mxu0 0.0
  %1670 = vmatpush1.xpose.msra.mxu0 0.0
  %1671 = vmatprep.subr.mxu0 0.0
  %1672 = vmatpush1.xpose.msra.mxu0 0.0
  %1673 = vmatprep.subr.mxu0 0.0
  %1674 = vmatpush1.xpose.msra.mxu0 0.0
  %1675 = vmatprep.subr.mxu0 0.0
  %1676 = vmatpush1.xpose.msra.mxu0 0.0
  %1677 = vmatprep.subr.mxu0 0.0
  %1678 = vmatpush1.xpose.msra.mxu0 0.0
  %1679 = vmatprep.subr.mxu0 0.0
  %1680 = vmatpush1.xpose.msra.mxu0 0.0
  %1681 = vmatprep.subr.mxu0 0.0
  %1682 = vmatpush1.xpose.msra.mxu0 0.0
  %1683 = vmatprep.subr.mxu0 0.0
  %1684 = vmatpush1.xpose.msra.mxu0 0.0
  %1685 = vmatprep.subr.mxu0 0.0
  %1686 = vmatpush1.xpose.msra.mxu0 0.0
  %1687 = vmatprep.subr.mxu0 0.0
  %1688 = vmatpush1.xpose.msra.mxu0 0.0
  %1689 = vmatprep.subr.mxu0 0.0
  %1690 = vmatpush1.xpose.msra.mxu0 0.0
  %1691 = vmatprep.subr.mxu0 0.0
  %1692 = vmatpush1.xpose.msra.mxu0 0.0
  %1693 = vmatprep.subr.mxu0 0.0
  %1694 = vmatpush1.xpose.msra.mxu0 0.0
  %1695 = vmatprep.subr.mxu0 0.0
  %1696 = vmatpush1.xpose.msra.mxu0 0.0
  %1697 = vmatprep.subr.mxu0 0.0
  %1698 = vmatpush1.xpose.msra.mxu0 0.0
  %1699 = vmatprep.subr.mxu0 0.0
  %1700 = vmatpush1.xpose.msra.mxu0 0.0
  %1701 = vmatprep.subr.mxu0 0.0
  %1702 = vmatpush1.xpose.msra.mxu0 0.0
  %1703 = vmatprep.subr.mxu0 0.0
  %1704 = vmatpush1.xpose.msra.mxu0 0.0
  %1705 = vmatprep.subr.mxu0 0.0
  %1706 = vmatpush1.xpose.msra.mxu0 0.0
  %1707 = vmatprep.subr.mxu0 0.0
  %1708 = vmatpush1.xpose.msra.mxu0 0.0
  %1709 = vmatprep.subr.mxu0 0.0
  %1710 = vmatpush1.xpose.msra.mxu0 0.0
  %1711 = vmatprep.subr.mxu0 0.0
  %1712 = vmatpush1.xpose.msra.mxu0 0.0
  %1713 = vmatprep.subr.mxu0 0.0
  %1714 = vmatpush1.xpose.msra.mxu0 0.0
  %1715 = vmatprep.subr.mxu0 0.0
  %1716 = vmatpush1.xpose.msra.mxu0 0.0
  %1717 = vmatprep.subr.mxu0 0.0
  %1718 = vmatpush1.xpose.msra.mxu0 0.0
  %1719 = vmatprep.subr.mxu0 0.0
  %1720 = vmatpush1.xpose.msra.mxu0 0.0
  %1721 = vmatprep.subr.mxu0 0.0
  %1722 = vmatpush1.xpose.msra.mxu0 0.0
  %1723 = vmatprep.mubr.f32.mxu0 0.0
  %1724 = vmatmul.mubr.f32.gmra.mrb[0].mxu0 %v1651
  %v1725 = vpop.f32.mrb[0].mxu0
  %v1726 = vadd.f32 %v47, %v1725
  %v1727 = vpop.f32.mrb[0].mxu0
  %1728 = vmatprep.mubr.f32.mxu0 0.0
  %1729 = vmatmul.mubr.f32.gmra.mrb[0].mxu0 %v1653
  %v1730 = vpop.f32.mrb[0].mxu0
  %v1731 = vadd.f32 %v48, %v1730
  %v1732 = vpop.f32.mrb[0].mxu0
  %1733 = vdwg.mxu0
  %v1734 = vsel %vm255, %v1726, -inf
  %1735 = vmax.xlane.f32.xlu0 %v1734
  %v1736 = vpop.xlane.xlu0 %1735
  %v1737 = vsel %vm255, %v1731, -inf
  %1738 = vmax.xlane.f32.xlu0 %v1737
  %v1739 = vpop.xlane.xlu0 %1738
  %v1740 = vsub.f32 %v1726, %v1736
  %v1741 = vsub.f32 %v1731, %v1739
  %v1742 = vmul.f32 %v1740, 1.442695
  %v1743 = vpow.pop %v1742
  %v1744 = vmul.f32 %v1741, 1.442695
  %v1745 = vpow.pop %v1744
  %v1746 = vsel %vm255, %v1743, 0.0
  %1747 = vadd.xlane.f32.xlu0 %v1746
  %v1748 = vpop.xlane.xlu0 %1747
  %v1749 = vsel %vm255, %v1745, 0.0
  %1750 = vadd.xlane.f32.xlu0 %v1749
  %v1751 = vpop.xlane.xlu0 %1750
  %v1752 = vrcp.pop %v1748
  %v1753 = vmul.f32 %v1743, %v1752
  %v1754 = vrcp.pop %v1751
  %v1755 = vmul.f32 %v1745, %v1754
  %1756 = vrot.lane.b32.xlu0 %v1225, 48
  %v1757 = vpop.permute.xlu0 %1756
  %1758 = vrot.lane.b32.xlu0 %v1230, 48
  %v1759 = vpop.permute.xlu0 %1758
  %v1763 = vsel %vm255, %v1753, 0
  %v1766 = vsel %vm255, %v1755, 0
  %1768 = vmatprep.subr.mxu0 0.0
  %1769 = vmatpush1.msra.mxu0 %v1757
  %1770 = vmatprep.subr.mxu0 0.0
  %1771 = vmatpush1.msra.mxu0 %v1759
  %1772 = vmatprep.subr.mxu0 0.0
  %1773 = vmatpush1.msra.mxu0 0.0
  %1774 = vmatprep.subr.mxu0 0.0
  %1775 = vmatpush1.msra.mxu0 0.0
  %1776 = vmatprep.subr.mxu0 0.0
  %1777 = vmatpush1.msra.mxu0 0.0
  %1778 = vmatprep.subr.mxu0 0.0
  %1779 = vmatpush1.msra.mxu0 0.0
  %1780 = vmatprep.subr.mxu0 0.0
  %1781 = vmatpush1.msra.mxu0 0.0
  %1782 = vmatprep.subr.mxu0 0.0
  %1783 = vmatpush1.msra.mxu0 0.0
  %1784 = vmatprep.subr.mxu0 0.0
  %1785 = vmatpush1.msra.mxu0 0.0
  %1786 = vmatprep.subr.mxu0 0.0
  %1787 = vmatpush1.msra.mxu0 0.0
  %1788 = vmatprep.subr.mxu0 0.0
  %1789 = vmatpush1.msra.mxu0 0.0
  %1790 = vmatprep.subr.mxu0 0.0
  %1791 = vmatpush1.msra.mxu0 0.0
  %1792 = vmatprep.subr.mxu0 0.0
  %1793 = vmatpush1.msra.mxu0 0.0
  %1794 = vmatprep.subr.mxu0 0.0
  %1795 = vmatpush1.msra.mxu0 0.0
  %1796 = vmatprep.subr.mxu0 0.0
  %1797 = vmatpush1.msra.mxu0 0.0
  %1798 = vmatprep.subr.mxu0 0.0
  %1799 = vmatpush1.msra.mxu0 0.0
  %1800 = vmatprep.subr.mxu0 0.0
  %1801 = vmatpush1.msra.mxu0 0.0
  %1802 = vmatprep.subr.mxu0 0.0
  %1803 = vmatpush1.msra.mxu0 0.0
  %1804 = vmatprep.subr.mxu0 0.0
  %1805 = vmatpush1.msra.mxu0 0.0
  %1806 = vmatprep.subr.mxu0 0.0
  %1807 = vmatpush1.msra.mxu0 0.0
  %1808 = vmatprep.subr.mxu0 0.0
  %1809 = vmatpush1.msra.mxu0 0.0
  %1810 = vmatprep.subr.mxu0 0.0
  %1811 = vmatpush1.msra.mxu0 0.0
  %1812 = vmatprep.subr.mxu0 0.0
  %1813 = vmatpush1.msra.mxu0 0.0
  %1814 = vmatprep.subr.mxu0 0.0
  %1815 = vmatpush1.msra.mxu0 0.0
  %1816 = vmatprep.subr.mxu0 0.0
  %1817 = vmatpush1.msra.mxu0 0.0
  %1818 = vmatprep.subr.mxu0 0.0
  %1819 = vmatpush1.msra.mxu0 0.0
  %1820 = vmatprep.subr.mxu0 0.0
  %1821 = vmatpush1.msra.mxu0 0.0
  %1822 = vmatprep.subr.mxu0 0.0
  %1823 = vmatpush1.msra.mxu0 0.0
  %1824 = vmatprep.subr.mxu0 0.0
  %1825 = vmatpush1.msra.mxu0 0.0
  %1826 = vmatprep.subr.mxu0 0.0
  %1827 = vmatpush1.msra.mxu0 0.0
  %1828 = vmatprep.subr.mxu0 0.0
  %1829 = vmatpush1.msra.mxu0 0.0
  %1830 = vmatprep.subr.mxu0 0.0
  %1831 = vmatpush1.msra.mxu0 0.0
  %1832 = vmatprep.mubr.f32.mxu0 0.0
  %1833 = vmatmul.mubr.f32.gmra.mrb[0].mxu0 %v1763
  %v1834 = vpop.f32.mrb[0].mxu0
  %v1835 = vadd.f32 0.0, %v1834
  %v1836 = vpop.f32.mrb[0].mxu0
  %1837 = vmatprep.mubr.f32.mxu0 0.0
  %1838 = vmatmul.mubr.f32.gmra.mrb[0].mxu0 %v1766
  %v1839 = vpop.f32.mrb[0].mxu0
  %v1840 = vadd.f32 0.0, %v1839
  %v1841 = vpop.f32.mrb[0].mxu0
  %1842 = vdwg.mxu0
  %1845 = vrot.lane.b32.xlu0 %v1835, 16
  %v1846 = vpop.permute.xlu0 %1845
  %1847 = vrot.lane.b32.xlu0 %v1840, 16
  %v1848 = vpop.permute.xlu0 %1847
  %1851 = vst.msk [vmem:[#allocation2] sm:$0xff] %vm786, %v1846
  %1852 = vst.msk [vmem:[#allocation2 + $0x8] sm:$0xff] %vm786, %v1848
  %1853 = vrot.lane.b32.xlu0 %v1225, 104
  %v1854 = vpop.permute.xlu0 %1853
  %1855 = vrot.lane.b32.xlu0 %v1230, 104
  %v1856 = vpop.permute.xlu0 %1855
  %1857 = vrot.lane.b32.xlu0 %v1225, 72
  %v1858 = vpop.permute.xlu0 %1857
  %1859 = vrot.lane.b32.xlu0 %v1230, 72
  %v1860 = vpop.permute.xlu0 %1859
  %v1861 = vsel %vm171, %v1854, 0
  %v1863 = vsel %vm171, %v1856, 0
  %v1865 = vsel %vm171, %v1858, 0
  %v1867 = vsel %vm171, %v1860, 0
  %1869 = vmatprep.subr.mxu0 0.0
  %1870 = vmatpush1.xpose.msra.mxu0 %v1865
  %1871 = vmatprep.subr.mxu0 0.0
  %1872 = vmatpush1.xpose.msra.mxu0 %v1867
  %1873 = vmatprep.subr.mxu0 0.0
  %1874 = vmatpush1.xpose.msra.mxu0 0.0
  %1875 = vmatprep.subr.mxu0 0.0
  %1876 = vmatpush1.xpose.msra.mxu0 0.0
  %1877 = vmatprep.subr.mxu0 0.0
  %1878 = vmatpush1.xpose.msra.mxu0 0.0
  %1879 = vmatprep.subr.mxu0 0.0
  %1880 = vmatpush1.xpose.msra.mxu0 0.0
  %1881 = vmatprep.subr.mxu0 0.0
  %1882 = vmatpush1.xpose.msra.mxu0 0.0
  %1883 = vmatprep.subr.mxu0 0.0
  %1884 = vmatpush1.xpose.msra.mxu0 0.0
  %1885 = vmatprep.subr.mxu0 0.0
  %1886 = vmatpush1.xpose.msra.mxu0 0.0
  %1887 = vmatprep.subr.mxu0 0.0
  %1888 = vmatpush1.xpose.msra.mxu0 0.0
  %1889 = vmatprep.subr.mxu0 0.0
  %1890 = vmatpush1.xpose.msra.mxu0 0.0
  %1891 = vmatprep.subr.mxu0 0.0
  %1892 = vmatpush1.xpose.msra.mxu0 0.0
  %1893 = vmatprep.subr.mxu0 0.0
  %1894 = vmatpush1.xpose.msra.mxu0 0.0
  %1895 = vmatprep.subr.mxu0 0.0
  %1896 = vmatpush1.xpose.msra.mxu0 0.0
  %1897 = vmatprep.subr.mxu0 0.0
  %1898 = vmatpush1.xpose.msra.mxu0 0.0
  %1899 = vmatprep.subr.mxu0 0.0
  %1900 = vmatpush1.xpose.msra.mxu0 0.0
  %1901 = vmatprep.subr.mxu0 0.0
  %1902 = vmatpush1.xpose.msra.mxu0 0.0
  %1903 = vmatprep.subr.mxu0 0.0
  %1904 = vmatpush1.xpose.msra.mxu0 0.0
  %1905 = vmatprep.subr.mxu0 0.0
  %1906 = vmatpush1.xpose.msra.mxu0 0.0
  %1907 = vmatprep.subr.mxu0 0.0
  %1908 = vmatpush1.xpose.msra.mxu0 0.0
  %1909 = vmatprep.subr.mxu0 0.0
  %1910 = vmatpush1.xpose.msra.mxu0 0.0
  %1911 = vmatprep.subr.mxu0 0.0
  %1912 = vmatpush1.xpose.msra.mxu0 0.0
  %1913 = vmatprep.subr.mxu0 0.0
  %1914 = vmatpush1.xpose.msra.mxu0 0.0
  %1915 = vmatprep.subr.mxu0 0.0
  %1916 = vmatpush1.xpose.msra.mxu0 0.0
  %1917 = vmatprep.subr.mxu0 0.0
  %1918 = vmatpush1.xpose.msra.mxu0 0.0
  %1919 = vmatprep.subr.mxu0 0.0
  %1920 = vmatpush1.xpose.msra.mxu0 0.0
  %1921 = vmatprep.subr.mxu0 0.0
  %1922 = vmatpush1.xpose.msra.mxu0 0.0
  %1923 = vmatprep.subr.mxu0 0.0
  %1924 = vmatpush1.xpose.msra.mxu0 0.0
  %1925 = vmatprep.subr.mxu0 0.0
  %1926 = vmatpush1.xpose.msra.mxu0 0.0
  %1927 = vmatprep.subr.mxu0 0.0
  %1928 = vmatpush1.xpose.msra.mxu0 0.0
  %1929 = vmatprep.subr.mxu0 0.0
  %1930 = vmatpush1.xpose.msra.mxu0 0.0
  %1931 = vmatprep.subr.mxu0 0.0
  %1932 = vmatpush1.xpose.msra.mxu0 0.0
  %1933 = vmatprep.mubr.f32.mxu0 0.0
  %1934 = vmatmul.mubr.f32.gmra.mrb[0].mxu0 %v1861
  %v1935 = vpop.f32.mrb[0].mxu0
  %v1936 = vadd.f32 %v47, %v1935
  %v1937 = vpop.f32.mrb[0].mxu0
  %1938 = vmatprep.mubr.f32.mxu0 0.0
  %1939 = vmatmul.mubr.f32.gmra.mrb[0].mxu0 %v1863
  %v1940 = vpop.f32.mrb[0].mxu0
  %v1941 = vadd.f32 %v48, %v1940
  %v1942 = vpop.f32.mrb[0].mxu0
  %1943 = vdwg.mxu0
  %v1944 = vsel %vm255, %v1936, -inf
  %1945 = vmax.xlane.f32.xlu0 %v1944
  %v1946 = vpop.xlane.xlu0 %1945
  %v1947 = vsel %vm255, %v1941, -inf
  %1948 = vmax.xlane.f32.xlu0 %v1947
  %v1949 = vpop.xlane.xlu0 %1948
  %v1950 = vsub.f32 %v1936, %v1946
  %v1951 = vsub.f32 %v1941, %v1949
  %v1952 = vmul.f32 %v1950, 1.442695
  %v1953 = vpow.pop %v1952
  %v1954 = vmul.f32 %v1951, 1.442695
  %v1955 = vpow.pop %v1954
  %v1956 = vsel %vm255, %v1953, 0.0
  %1957 = vadd.xlane.f32.xlu0 %v1956
  %v1958 = vpop.xlane.xlu0 %1957
  %v1959 = vsel %vm255, %v1955, 0.0
  %1960 = vadd.xlane.f32.xlu0 %v1959
  %v1961 = vpop.xlane.xlu0 %1960
  %v1962 = vrcp.pop %v1958
  %v1963 = vmul.f32 %v1953, %v1962
  %v1964 = vrcp.pop %v1961
  %v1965 = vmul.f32 %v1955, %v1964
  %1966 = vrot.lane.b32.xlu0 %v1225, 40
  %v1967 = vpop.permute.xlu0 %1966
  %1968 = vrot.lane.b32.xlu0 %v1230, 40
  %v1969 = vpop.permute.xlu0 %1968
  %v1973 = vsel %vm255, %v1963, 0
  %v1976 = vsel %vm255, %v1965, 0
  %1978 = vmatprep.subr.mxu0 0.0
  %1979 = vmatpush1.msra.mxu0 %v1967
  %1980 = vmatprep.subr.mxu0 0.0
  %1981 = vmatpush1.msra.mxu0 %v1969
  %1982 = vmatprep.subr.mxu0 0.0
  %1983 = vmatpush1.msra.mxu0 0.0
  %1984 = vmatprep.subr.mxu0 0.0
  %1985 = vmatpush1.msra.mxu0 0.0
  %1986 = vmatprep.subr.mxu0 0.0
  %1987 = vmatpush1.msra.mxu0 0.0
  %1988 = vmatprep.subr.mxu0 0.0
  %1989 = vmatpush1.msra.mxu0 0.0
  %1990 = vmatprep.subr.mxu0 0.0
  %1991 = vmatpush1.msra.mxu0 0.0
  %1992 = vmatprep.subr.mxu0 0.0
  %1993 = vmatpush1.msra.mxu0 0.0
  %1994 = vmatprep.subr.mxu0 0.0
  %1995 = vmatpush1.msra.mxu0 0.0
  %1996 = vmatprep.subr.mxu0 0.0
  %1997 = vmatpush1.msra.mxu0 0.0
  %1998 = vmatprep.subr.mxu0 0.0
  %1999 = vmatpush1.msra.mxu0 0.0
  %2000 = vmatprep.subr.mxu0 0.0
  %2001 = vmatpush1.msra.mxu0 0.0
  %2002 = vmatprep.subr.mxu0 0.0
  %2003 = vmatpush1.msra.mxu0 0.0
  %2004 = vmatprep.subr.mxu0 0.0
  %2005 = vmatpush1.msra.mxu0 0.0
  %2006 = vmatprep.subr.mxu0 0.0
  %2007 = vmatpush1.msra.mxu0 0.0
  %2008 = vmatprep.subr.mxu0 0.0
  %2009 = vmatpush1.msra.mxu0 0.0
  %2010 = vmatprep.subr.mxu0 0.0
  %2011 = vmatpush1.msra.mxu0 0.0
  %2012 = vmatprep.subr.mxu0 0.0
  %2013 = vmatpush1.msra.mxu0 0.0
  %2014 = vmatprep.subr.mxu0 0.0
  %2015 = vmatpush1.msra.mxu0 0.0
  %2016 = vmatprep.subr.mxu0 0.0
  %2017 = vmatpush1.msra.mxu0 0.0
  %2018 = vmatprep.subr.mxu0 0.0
  %2019 = vmatpush1.msra.mxu0 0.0
  %2020 = vmatprep.subr.mxu0 0.0
  %2021 = vmatpush1.msra.mxu0 0.0
  %2022 = vmatprep.subr.mxu0 0.0
  %2023 = vmatpush1.msra.mxu0 0.0
  %2024 = vmatprep.subr.mxu0 0.0
  %2025 = vmatpush1.msra.mxu0 0.0
  %2026 = vmatprep.subr.mxu0 0.0
  %2027 = vmatpush1.msra.mxu0 0.0
  %2028 = vmatprep.subr.mxu0 0.0
  %2029 = vmatpush1.msra.mxu0 0.0
  %2030 = vmatprep.subr.mxu0 0.0
  %2031 = vmatpush1.msra.mxu0 0.0
  %2032 = vmatprep.subr.mxu0 0.0
  %2033 = vmatpush1.msra.mxu0 0.0
  %2034 = vmatprep.subr.mxu0 0.0
  %2035 = vmatpush1.msra.mxu0 0.0
  %2036 = vmatprep.subr.mxu0 0.0
  %2037 = vmatpush1.msra.mxu0 0.0
  %2038 = vmatprep.subr.mxu0 0.0
  %2039 = vmatpush1.msra.mxu0 0.0
  %2040 = vmatprep.subr.mxu0 0.0
  %2041 = vmatpush1.msra.mxu0 0.0
  %2042 = vmatprep.mubr.f32.mxu0 0.0
  %2043 = vmatmul.mubr.f32.gmra.mrb[0].mxu0 %v1973
  %v2044 = vpop.f32.mrb[0].mxu0
  %v2045 = vadd.f32 0.0, %v2044
  %v2046 = vpop.f32.mrb[0].mxu0
  %2047 = vmatprep.mubr.f32.mxu0 0.0
  %2048 = vmatmul.mubr.f32.gmra.mrb[0].mxu0 %v1976
  %v2049 = vpop.f32.mrb[0].mxu0
  %v2050 = vadd.f32 0.0, %v2049
  %v2051 = vpop.f32.mrb[0].mxu0
  %2052 = vdwg.mxu0
  %2055 = vrot.lane.b32.xlu0 %v2045, 24
  %v2056 = vpop.permute.xlu0 %2055
  %2057 = vrot.lane.b32.xlu0 %v2050, 24
  %v2058 = vpop.permute.xlu0 %2057
  %2061 = vst.msk [vmem:[#allocation2] sm:$0xff] %vm997, %v2056
  %2062 = vst.msk [vmem:[#allocation2 + $0x8] sm:$0xff] %vm997, %v2058
  %v2063 = vld [vmem:[#allocation2] sm:$0xff]
  %v2064 = vld [vmem:[#allocation2 + $0x8] sm:$0xff]
  %2069 = vrot.lane.b32.xlu0 %v55, 32
  %v2070 = vpop.permute.xlu0 %2069
  %2071 = vrot.lane.b32.xlu0 %v56, 32
  %v2072 = vpop.permute.xlu0 %2071
  %2073 = vrot.lane.b32.xlu0 %v57, 32
  %v2074 = vpop.permute.xlu0 %2073
  %2075 = vrot.lane.b32.xlu0 %v58, 32
  %v2076 = vpop.permute.xlu0 %2075
  %2082 = vrot.lane.b32.xlu0 %v1151, 32
  %v2083 = vpop.permute.xlu0 %2082
  %v2086 = vsel %vm83, %v2063, 0
  %v2089 = vsel %vm83, %v2064, 0
  %2091 = vmatprep.subr.mxu0 0.0
  %2092 = vmatpush1.msra.mxu0 %v2070
  %2093 = vmatprep.subr.mxu0 0.0
  %2094 = vmatpush1.msra.mxu0 %v2072
  %2095 = vmatprep.subr.mxu0 0.0
  %2096 = vmatpush1.msra.mxu0 %v2074
  %2097 = vmatprep.subr.mxu0 0.0
  %2098 = vmatpush1.msra.mxu0 %v2076
  %2099 = vmatprep.subr.mxu0 0.0
  %2100 = vmatpush1.msra.mxu0 0.0
  %2101 = vmatprep.subr.mxu0 0.0
  %2102 = vmatpush1.msra.mxu0 0.0
  %2103 = vmatprep.subr.mxu0 0.0
  %2104 = vmatpush1.msra.mxu0 0.0
  %2105 = vmatprep.subr.mxu0 0.0
  %2106 = vmatpush1.msra.mxu0 0.0
  %2107 = vmatprep.subr.mxu0 0.0
  %2108 = vmatpush1.msra.mxu0 0.0
  %2109 = vmatprep.subr.mxu0 0.0
  %2110 = vmatpush1.msra.mxu0 0.0
  %2111 = vmatprep.subr.mxu0 0.0
  %2112 = vmatpush1.msra.mxu0 0.0
  %2113 = vmatprep.subr.mxu0 0.0
  %2114 = vmatpush1.msra.mxu0 0.0
  %2115 = vmatprep.subr.mxu0 0.0
  %2116 = vmatpush1.msra.mxu0 0.0
  %2117 = vmatprep.subr.mxu0 0.0
  %2118 = vmatpush1.msra.mxu0 0.0
  %2119 = vmatprep.subr.mxu0 0.0
  %2120 = vmatpush1.msra.mxu0 0.0
  %2121 = vmatprep.subr.mxu0 0.0
  %2122 = vmatpush1.msra.mxu0 0.0
  %2123 = vmatprep.subr.mxu0 0.0
  %2124 = vmatpush1.msra.mxu0 0.0
  %2125 = vmatprep.subr.mxu0 0.0
  %2126 = vmatpush1.msra.mxu0 0.0
  %2127 = vmatprep.subr.mxu0 0.0
  %2128 = vmatpush1.msra.mxu0 0.0
  %2129 = vmatprep.subr.mxu0 0.0
  %2130 = vmatpush1.msra.mxu0 0.0
  %2131 = vmatprep.subr.mxu0 0.0
  %2132 = vmatpush1.msra.mxu0 0.0
  %2133 = vmatprep.subr.mxu0 0.0
  %2134 = vmatpush1.msra.mxu0 0.0
  %2135 = vmatprep.subr.mxu0 0.0
  %2136 = vmatpush1.msra.mxu0 0.0
  %2137 = vmatprep.subr.mxu0 0.0
  %2138 = vmatpush1.msra.mxu0 0.0
  %2139 = vmatprep.subr.mxu0 0.0
  %2140 = vmatpush1.msra.mxu0 0.0
  %2141 = vmatprep.subr.mxu0 0.0
  %2142 = vmatpush1.msra.mxu0 0.0
  %2143 = vmatprep.subr.mxu0 0.0
  %2144 = vmatpush1.msra.mxu0 0.0
  %2145 = vmatprep.subr.mxu0 0.0
  %2146 = vmatpush1.msra.mxu0 0.0
  %2147 = vmatprep.subr.mxu0 0.0
  %2148 = vmatpush1.msra.mxu0 0.0
  %2149 = vmatprep.subr.mxu0 0.0
  %2150 = vmatpush1.msra.mxu0 0.0
  %2151 = vmatprep.subr.mxu0 0.0
  %2152 = vmatpush1.msra.mxu0 0.0
  %2153 = vmatprep.subr.mxu0 0.0
  %2154 = vmatpush1.msra.mxu0 0.0
  %2155 = vmatprep.mubr.f32.mxu0 0.0
  %2156 = vmatmul.mubr.f32.gmra.mrb[0].mxu0 %v2086
  %v2157 = vpop.f32.mrb[0].mxu0
  %v2158 = vadd.f32 %v2083, %v2157
  %v2159 = vpop.f32.mrb[0].mxu0
  %2160 = vmatprep.mubr.f32.mxu0 0.0
  %2161 = vmatmul.mubr.f32.gmra.mrb[0].mxu0 %v2089
  %v2162 = vpop.f32.mrb[0].mxu0
  %v2163 = vadd.f32 %v2083, %v2162
  %v2164 = vpop.f32.mrb[0].mxu0
  %2165 = vdwg.mxu0
  %v2166 = vadd.f32 %v1142, %v2158
  %v2167 = vadd.f32 %v1143, %v2163
  %v2168 = vsel %vm83, %v2166, 0.0
  %2169 = vadd.xlane.f32.xlu0 %v2168
  %v2170 = vpop.xlane.xlu0 %2169
  %v2171 = vsel %vm83, %v2167, 0.0
  %2172 = vadd.xlane.f32.xlu0 %v2171
  %v2173 = vpop.xlane.xlu0 %2172
  %v2174 = vmul.f32 %v2170, %v1111
  %v2175 = vmul.f32 %v2173, %v1111
  %v2176 = vsub.f32 %v2166, %v2174
  %v2177 = vsub.f32 %v2167, %v2175
  %v2178 = vmul.f32 %v2176, %v2176
  %v2179 = vmul.f32 %v2177, %v2177
  %v2180 = vsel %vm83, %v2178, 0.0
  %2181 = vadd.xlane.f32.xlu0 %v2180
  %v2182 = vpop.xlane.xlu0 %2181
  %v2183 = vsel %vm83, %v2179, 0.0
  %2184 = vadd.xlane.f32.xlu0 %v2183
  %v2185 = vpop.xlane.xlu0 %2184
  %v2186 = vmul.f32 %v2182, %v1111
  %v2187 = vmul.f32 %v2185, %v1111
  %v2188 = vadd.f32 %v2186, 1e-05
  %v2189 = vadd.f32 %v2187, 1e-05
  %v2190 = vrsqrt.pop %v2188
  %v2191 = vrsqrt.pop %v2189
  %v2192 = vmul.f32 %v2176, %v2190
  %v2193 = vmul.f32 %v2177, %v2191
  %v2194 = vlaneseq
  %v2195 = vshrl.u32 %v2194, 7
  %v2196 = vsub.s32 2, %v2195
  %v2197 = vrot.slane %v78, %v2196
  %v2198 = vmul.f32 %v2192, %v2197
  %v2199 = vmul.f32 %v2193, %v2197
  %v2200 = vlaneseq
  %v2201 = vshrl.u32 %v2200, 7
  %v2202 = vsub.s32 3, %v2201
  %v2203 = vrot.slane %v78, %v2202
  %v2204 = vadd.f32 %v2198, %v2203
  %v2205 = vadd.f32 %v2199, %v2203
  %v2206 = vlaneseq
  %v2207 = vshrl.u32 %v2206, 7
  %v2208 = vsub.s32 2, %v2207
  %v2209 = vrot.slane %v63, %v2208
  %v2211 = vsel %vm83, %v2204, 0
  %v2214 = vsel %vm83, %v2205, 0
  %2216 = vmatprep.subr.mxu0 0.0
  %2217 = vmatpush1.msra.mxu0 %v59
  %2218 = vmatprep.subr.mxu0 0.0
  %2219 = vmatpush1.msra.mxu0 %v60
  %2220 = vmatprep.subr.mxu0 0.0
  %2221 = vmatpush1.msra.mxu0 %v61
  %2222 = vmatprep.subr.mxu0 0.0
  %2223 = vmatpush1.msra.mxu0 %v62
  %2224 = vmatprep.subr.mxu0 0.0
  %2225 = vmatpush1.msra.mxu0 0.0
  %2226 = vmatprep.subr.mxu0 0.0
  %2227 = vmatpush1.msra.mxu0 0.0
  %2228 = vmatprep.subr.mxu0 0.0
  %2229 = vmatpush1.msra.mxu0 0.0
  %2230 = vmatprep.subr.mxu0 0.0
  %2231 = vmatpush1.msra.mxu0 0.0
  %2232 = vmatprep.subr.mxu0 0.0
  %2233 = vmatpush1.msra.mxu0 0.0
  %2234 = vmatprep.subr.mxu0 0.0
  %2235 = vmatpush1.msra.mxu0 0.0
  %2236 = vmatprep.subr.mxu0 0.0
  %2237 = vmatpush1.msra.mxu0 0.0
  %2238 = vmatprep.subr.mxu0 0.0
  %2239 = vmatpush1.msra.mxu0 0.0
  %2240 = vmatprep.subr.mxu0 0.0
  %2241 = vmatpush1.msra.mxu0 0.0
  %2242 = vmatprep.subr.mxu0 0.0
  %2243 = vmatpush1.msra.mxu0 0.0
  %2244 = vmatprep.subr.mxu0 0.0
  %2245 = vmatpush1.msra.mxu0 0.0
  %2246 = vmatprep.subr.mxu0 0.0
  %2247 = vmatpush1.msra.mxu0 0.0
  %2248 = vmatprep.subr.mxu0 0.0
  %2249 = vmatpush1.msra.mxu0 0.0
  %2250 = vmatprep.subr.mxu0 0.0
  %2251 = vmatpush1.msra.mxu0 0.0
  %2252 = vmatprep.subr.mxu0 0.0
  %2253 = vmatpush1.msra.mxu0 0.0
  %2254 = vmatprep.subr.mxu0 0.0
  %2255 = vmatpush1.msra.mxu0 0.0
  %2256 = vmatprep.subr.mxu0 0.0
  %2257 = vmatpush1.msra.mxu0 0.0
  %2258 = vmatprep.subr.mxu0 0.0
  %2259 = vmatpush1.msra.mxu0 0.0
  %2260 = vmatprep.subr.mxu0 0.0
  %2261 = vmatpush1.msra.mxu0 0.0
  %2262 = vmatprep.subr.mxu0 0.0
  %2263 = vmatpush1.msra.mxu0 0.0
  %2264 = vmatprep.subr.mxu0 0.0
  %2265 = vmatpush1.msra.mxu0 0.0
  %2266 = vmatprep.subr.mxu0 0.0
  %2267 = vmatpush1.msra.mxu0 0.0
  %2268 = vmatprep.subr.mxu0 0.0
  %2269 = vmatpush1.msra.mxu0 0.0
  %2270 = vmatprep.subr.mxu0 0.0
  %2271 = vmatpush1.msra.mxu0 0.0
  %2272 = vmatprep.subr.mxu0 0.0
  %2273 = vmatpush1.msra.mxu0 0.0
  %2274 = vmatprep.subr.mxu0 0.0
  %2275 = vmatpush1.msra.mxu0 0.0
  %2276 = vmatprep.subr.mxu0 0.0
  %2277 = vmatpush1.msra.mxu0 0.0
  %2278 = vmatprep.subr.mxu0 0.0
  %2279 = vmatpush1.msra.mxu0 0.0
  %2280 = vmatprep.mubr.f32.mxu0 0.0
  %2281 = vmatmul.mubr.f32.gmra.mrb[0].mxu0 %v2211
  %v2282 = vpop.f32.mrb[0].mxu0
  %v2283 = vadd.f32 %v2209, %v2282
  %v2284 = vpop.f32.mrb[0].mxu0
  %2285 = vmatprep.mubr.f32.mxu0 0.0
  %2286 = vmatmul.mubr.f32.gmra.mrb[0].mxu0 %v2214
  %v2287 = vpop.f32.mrb[0].mxu0
  %v2288 = vadd.f32 %v2209, %v2287
  %v2289 = vpop.f32.mrb[0].mxu0
  %2290 = vdwg.mxu0
  %2295 = vrot.lane.b32.xlu0 %v59, 96
  %v2296 = vpop.permute.xlu0 %2295
  %2297 = vrot.lane.b32.xlu0 %v60, 96
  %v2298 = vpop.permute.xlu0 %2297
  %2299 = vrot.lane.b32.xlu0 %v61, 96
  %v2300 = vpop.permute.xlu0 %2299
  %2301 = vrot.lane.b32.xlu0 %v62, 96
  %v2302 = vpop.permute.xlu0 %2301
  %2308 = vrot.lane.b32.xlu0 %v2209, 96
  %v2309 = vpop.permute.xlu0 %2308
  %v2312 = vsel %vm83, %v43, 0
  %v2315 = vsel %vm83, %v44, 0
  %2317 = vmatprep.subr.mxu0 0.0
  %2318 = vmatpush1.msra.mxu0 %v2296
  %2319 = vmatprep.subr.mxu0 0.0
  %2320 = vmatpush1.msra.mxu0 %v2298
  %2321 = vmatprep.subr.mxu0 0.0
  %2322 = vmatpush1.msra.mxu0 %v2300
  %2323 = vmatprep.subr.mxu0 0.0
  %2324 = vmatpush1.msra.mxu0 %v2302
  %2325 = vmatprep.subr.mxu0 0.0
  %2326 = vmatpush1.msra.mxu0 0.0
  %2327 = vmatprep.subr.mxu0 0.0
  %2328 = vmatpush1.msra.mxu0 0.0
  %2329 = vmatprep.subr.mxu0 0.0
  %2330 = vmatpush1.msra.mxu0 0.0
  %2331 = vmatprep.subr.mxu0 0.0
  %2332 = vmatpush1.msra.mxu0 0.0
  %2333 = vmatprep.subr.mxu0 0.0
  %2334 = vmatpush1.msra.mxu0 0.0
  %2335 = vmatprep.subr.mxu0 0.0
  %2336 = vmatpush1.msra.mxu0 0.0
  %2337 = vmatprep.subr.mxu0 0.0
  %2338 = vmatpush1.msra.mxu0 0.0
  %2339 = vmatprep.subr.mxu0 0.0
  %2340 = vmatpush1.msra.mxu0 0.0
  %2341 = vmatprep.subr.mxu0 0.0
  %2342 = vmatpush1.msra.mxu0 0.0
  %2343 = vmatprep.subr.mxu0 0.0
  %2344 = vmatpush1.msra.mxu0 0.0
  %2345 = vmatprep.subr.mxu0 0.0
  %2346 = vmatpush1.msra.mxu0 0.0
  %2347 = vmatprep.subr.mxu0 0.0
  %2348 = vmatpush1.msra.mxu0 0.0
  %2349 = vmatprep.subr.mxu0 0.0
  %2350 = vmatpush1.msra.mxu0 0.0
  %2351 = vmatprep.subr.mxu0 0.0
  %2352 = vmatpush1.msra.mxu0 0.0
  %2353 = vmatprep.subr.mxu0 0.0
  %2354 = vmatpush1.msra.mxu0 0.0
  %2355 = vmatprep.subr.mxu0 0.0
  %2356 = vmatpush1.msra.mxu0 0.0
  %2357 = vmatprep.subr.mxu0 0.0
  %2358 = vmatpush1.msra.mxu0 0.0
  %2359 = vmatprep.subr.mxu0 0.0
  %2360 = vmatpush1.msra.mxu0 0.0
  %2361 = vmatprep.subr.mxu0 0.0
  %2362 = vmatpush1.msra.mxu0 0.0
  %2363 = vmatprep.subr.mxu0 0.0
  %2364 = vmatpush1.msra.mxu0 0.0
  %2365 = vmatprep.subr.mxu0 0.0
  %2366 = vmatpush1.msra.mxu0 0.0
  %2367 = vmatprep.subr.mxu0 0.0
  %2368 = vmatpush1.msra.mxu0 0.0
  %2369 = vmatprep.subr.mxu0 0.0
  %2370 = vmatpush1.msra.mxu0 0.0
  %2371 = vmatprep.subr.mxu0 0.0
  %2372 = vmatpush1.msra.mxu0 0.0
  %2373 = vmatprep.subr.mxu0 0.0
  %2374 = vmatpush1.msra.mxu0 0.0
  %2375 = vmatprep.subr.mxu0 0.0
  %2376 = vmatpush1.msra.mxu0 0.0
  %2377 = vmatprep.subr.mxu0 0.0
  %2378 = vmatpush1.msra.mxu0 0.0
  %2379 = vmatprep.subr.mxu0 0.0
  %2380 = vmatpush1.msra.mxu0 0.0
  %2381 = vmatprep.mubr.f32.mxu0 0.0
  %2382 = vmatmul.mubr.f32.gmra.mrb[0].mxu0 %v2312
  %v2383 = vpop.f32.mrb[0].mxu0
  %v2384 = vadd.f32 %v2309, %v2383
  %v2385 = vpop.f32.mrb[0].mxu0
  %2386 = vmatprep.mubr.f32.mxu0 0.0
  %2387 = vmatmul.mubr.f32.gmra.mrb[0].mxu0 %v2315
  %v2388 = vpop.f32.mrb[0].mxu0
  %v2389 = vadd.f32 %v2309, %v2388
  %v2390 = vpop.f32.mrb[0].mxu0
  %2391 = vdwg.mxu0
  %v2393 = vsel %vm171, %v2283, 0
  %v2396 = vsel %vm171, %v2288, 0
  %v2399 = vsel %vm171, %v2384, 0
  %v2402 = vsel %vm171, %v2389, 0
  %2404 = vmatprep.subr.mxu0 0.0
  %2405 = vmatpush1.xpose.msra.mxu0 %v2399
  %2406 = vmatprep.subr.mxu0 0.0
  %2407 = vmatpush1.xpose.msra.mxu0 %v2402
  %2408 = vmatprep.subr.mxu0 0.0
  %2409 = vmatpush1.xpose.msra.mxu0 0.0
  %2410 = vmatprep.subr.mxu0 0.0
  %2411 = vmatpush1.xpose.msra.mxu0 0.0
  %2412 = vmatprep.subr.mxu0 0.0
  %2413 = vmatpush1.xpose.msra.mxu0 0.0
  %2414 = vmatprep.subr.mxu0 0.0
  %2415 = vmatpush1.xpose.msra.mxu0 0.0
  %2416 = vmatprep.subr.mxu0 0.0
  %2417 = vmatpush1.xpose.msra.mxu0 0.0
  %2418 = vmatprep.subr.mxu0 0.0
  %2419 = vmatpush1.xpose.msra.mxu0 0.0
  %2420 = vmatprep.subr.mxu0 0.0
  %2421 = vmatpush1.xpose.msra.mxu0 0.0
  %2422 = vmatprep.subr.mxu0 0.0
  %2423 = vmatpush1.xpose.msra.mxu0 0.0
  %2424 = vmatprep.subr.mxu0 0.0
  %2425 = vmatpush1.xpose.msra.mxu0 0.0
  %2426 = vmatprep.subr.mxu0 0.0
  %2427 = vmatpush1.xpose.msra.mxu0 0.0
  %2428 = vmatprep.subr.mxu0 0.0
  %2429 = vmatpush1.xpose.msra.mxu0 0.0
  %2430 = vmatprep.subr.mxu0 0.0
  %2431 = vmatpush1.xpose.msra.mxu0 0.0
  %2432 = vmatprep.subr.mxu0 0.0
  %2433 = vmatpush1.xpose.msra.mxu0 0.0
  %2434 = vmatprep.subr.mxu0 0.0
  %2435 = vmatpush1.xpose.msra.mxu0 0.0
  %2436 = vmatprep.subr.mxu0 0.0
  %2437 = vmatpush1.xpose.msra.mxu0 0.0
  %2438 = vmatprep.subr.mxu0 0.0
  %2439 = vmatpush1.xpose.msra.mxu0 0.0
  %2440 = vmatprep.subr.mxu0 0.0
  %2441 = vmatpush1.xpose.msra.mxu0 0.0
  %2442 = vmatprep.subr.mxu0 0.0
  %2443 = vmatpush1.xpose.msra.mxu0 0.0
  %2444 = vmatprep.subr.mxu0 0.0
  %2445 = vmatpush1.xpose.msra.mxu0 0.0
  %2446 = vmatprep.subr.mxu0 0.0
  %2447 = vmatpush1.xpose.msra.mxu0 0.0
  %2448 = vmatprep.subr.mxu0 0.0
  %2449 = vmatpush1.xpose.msra.mxu0 0.0
  %2450 = vmatprep.subr.mxu0 0.0
  %2451 = vmatpush1.xpose.msra.mxu0 0.0
  %2452 = vmatprep.subr.mxu0 0.0
  %2453 = vmatpush1.xpose.msra.mxu0 0.0
  %2454 = vmatprep.subr.mxu0 0.0
  %2455 = vmatpush1.xpose.msra.mxu0 0.0
  %2456 = vmatprep.subr.mxu0 0.0
  %2457 = vmatpush1.xpose.msra.mxu0 0.0
  %2458 = vmatprep.subr.mxu0 0.0
  %2459 = vmatpush1.xpose.msra.mxu0 0.0
  %2460 = vmatprep.subr.mxu0 0.0
  %2461 = vmatpush1.xpose.msra.mxu0 0.0
  %2462 = vmatprep.subr.mxu0 0.0
  %2463 = vmatpush1.xpose.msra.mxu0 0.0
  %2464 = vmatprep.subr.mxu0 0.0
  %2465 = vmatpush1.xpose.msra.mxu0 0.0
  %2466 = vmatprep.subr.mxu0 0.0
  %2467 = vmatpush1.xpose.msra.mxu0 0.0
  %2468 = vmatprep.mubr.f32.mxu0 0.0
  %2469 = vmatmul.mubr.f32.gmra.mrb[0].mxu0 %v2393
  %v2470 = vpop.f32.mrb[0].mxu0
  %v2471 = vadd.f32 %v49, %v2470
  %v2472 = vpop.f32.mrb[0].mxu0
  %2473 = vmatprep.mubr.f32.mxu0 0.0
  %2474 = vmatmul.mubr.f32.gmra.mrb[0].mxu0 %v2396
  %v2475 = vpop.f32.mrb[0].mxu0
  %v2476 = vadd.f32 %v50, %v2475
  %v2477 = vpop.f32.mrb[0].mxu0
  %2478 = vdwg.mxu0
  %v2479 = vsel %vm255, %v2471, -inf
  %2480 = vmax.xlane.f32.xlu0 %v2479
  %v2481 = vpop.xlane.xlu0 %2480
  %v2482 = vsel %vm255, %v2476, -inf
  %2483 = vmax.xlane.f32.xlu0 %v2482
  %v2484 = vpop.xlane.xlu0 %2483
  %v2485 = vsub.f32 %v2471, %v2481
  %v2486 = vsub.f32 %v2476, %v2484
  %v2487 = vmul.f32 %v2485, 1.442695
  %v2488 = vpow.pop %v2487
  %v2489 = vmul.f32 %v2486, 1.442695
  %v2490 = vpow.pop %v2489
  %v2491 = vsel %vm255, %v2488, 0.0
  %2492 = vadd.xlane.f32.xlu0 %v2491
  %v2493 = vpop.xlane.xlu0 %2492
  %v2494 = vsel %vm255, %v2490, 0.0
  %2495 = vadd.xlane.f32.xlu0 %v2494
  %v2496 = vpop.xlane.xlu0 %2495
  %v2497 = vrcp.pop %v2493
  %v2498 = vmul.f32 %v2488, %v2497
  %v2499 = vrcp.pop %v2496
  %v2500 = vmul.f32 %v2490, %v2499
  %2501 = vrot.lane.b32.xlu0 %v2384, 96
  %v2502 = vpop.permute.xlu0 %2501
  %2503 = vrot.lane.b32.xlu0 %v2389, 96
  %v2504 = vpop.permute.xlu0 %2503
  %v2508 = vsel %vm255, %v2498, 0
  %v2511 = vsel %vm255, %v2500, 0
  %2513 = vmatprep.subr.mxu0 0.0
  %2514 = vmatpush1.msra.mxu0 %v2502
  %2515 = vmatprep.subr.mxu0 0.0
  %2516 = vmatpush1.msra.mxu0 %v2504
  %2517 = vmatprep.subr.mxu0 0.0
  %2518 = vmatpush1.msra.mxu0 0.0
  %2519 = vmatprep.subr.mxu0 0.0
  %2520 = vmatpush1.msra.mxu0 0.0
  %2521 = vmatprep.subr.mxu0 0.0
  %2522 = vmatpush1.msra.mxu0 0.0
  %2523 = vmatprep.subr.mxu0 0.0
  %2524 = vmatpush1.msra.mxu0 0.0
  %2525 = vmatprep.subr.mxu0 0.0
  %2526 = vmatpush1.msra.mxu0 0.0
  %2527 = vmatprep.subr.mxu0 0.0
  %2528 = vmatpush1.msra.mxu0 0.0
  %2529 = vmatprep.subr.mxu0 0.0
  %2530 = vmatpush1.msra.mxu0 0.0
  %2531 = vmatprep.subr.mxu0 0.0
  %2532 = vmatpush1.msra.mxu0 0.0
  %2533 = vmatprep.subr.mxu0 0.0
  %2534 = vmatpush1.msra.mxu0 0.0
  %2535 = vmatprep.subr.mxu0 0.0
  %2536 = vmatpush1.msra.mxu0 0.0
  %2537 = vmatprep.subr.mxu0 0.0
  %2538 = vmatpush1.msra.mxu0 0.0
  %2539 = vmatprep.subr.mxu0 0.0
  %2540 = vmatpush1.msra.mxu0 0.0
  %2541 = vmatprep.subr.mxu0 0.0
  %2542 = vmatpush1.msra.mxu0 0.0
  %2543 = vmatprep.subr.mxu0 0.0
  %2544 = vmatpush1.msra.mxu0 0.0
  %2545 = vmatprep.subr.mxu0 0.0
  %2546 = vmatpush1.msra.mxu0 0.0
  %2547 = vmatprep.subr.mxu0 0.0
  %2548 = vmatpush1.msra.mxu0 0.0
  %2549 = vmatprep.subr.mxu0 0.0
  %2550 = vmatpush1.msra.mxu0 0.0
  %2551 = vmatprep.subr.mxu0 0.0
  %2552 = vmatpush1.msra.mxu0 0.0
  %2553 = vmatprep.subr.mxu0 0.0
  %2554 = vmatpush1.msra.mxu0 0.0
  %2555 = vmatprep.subr.mxu0 0.0
  %2556 = vmatpush1.msra.mxu0 0.0
  %2557 = vmatprep.subr.mxu0 0.0
  %2558 = vmatpush1.msra.mxu0 0.0
  %2559 = vmatprep.subr.mxu0 0.0
  %2560 = vmatpush1.msra.mxu0 0.0
  %2561 = vmatprep.subr.mxu0 0.0
  %2562 = vmatpush1.msra.mxu0 0.0
  %2563 = vmatprep.subr.mxu0 0.0
  %2564 = vmatpush1.msra.mxu0 0.0
  %2565 = vmatprep.subr.mxu0 0.0
  %2566 = vmatpush1.msra.mxu0 0.0
  %2567 = vmatprep.subr.mxu0 0.0
  %2568 = vmatpush1.msra.mxu0 0.0
  %2569 = vmatprep.subr.mxu0 0.0
  %2570 = vmatpush1.msra.mxu0 0.0
  %2571 = vmatprep.subr.mxu0 0.0
  %2572 = vmatpush1.msra.mxu0 0.0
  %2573 = vmatprep.subr.mxu0 0.0
  %2574 = vmatpush1.msra.mxu0 0.0
  %2575 = vmatprep.subr.mxu0 0.0
  %2576 = vmatpush1.msra.mxu0 0.0
  %2577 = vmatprep.mubr.f32.mxu0 0.0
  %2578 = vmatmul.mubr.f32.gmra.mrb[0].mxu0 %v2508
  %v2579 = vpop.f32.mrb[0].mxu0
  %v2580 = vadd.f32 0.0, %v2579
  %v2581 = vpop.f32.mrb[0].mxu0
  %2582 = vmatprep.mubr.f32.mxu0 0.0
  %2583 = vmatmul.mubr.f32.gmra.mrb[0].mxu0 %v2511
  %v2584 = vpop.f32.mrb[0].mxu0
  %v2585 = vadd.f32 0.0, %v2584
  %v2586 = vpop.f32.mrb[0].mxu0
  %2587 = vdwg.mxu0
  %2588 = vst.msk [vmem:[#allocation2] sm:$0xff] %vm171, %v2580
  %2589 = vst.msk [vmem:[#allocation2 + $0x8] sm:$0xff] %vm171, %v2585
  %2590 = vrot.lane.b32.xlu0 %v2283, 120
  %v2591 = vpop.permute.xlu0 %2590
  %2592 = vrot.lane.b32.xlu0 %v2288, 120
  %v2593 = vpop.permute.xlu0 %2592
  %2594 = vrot.lane.b32.xlu0 %v2384, 120
  %v2595 = vpop.permute.xlu0 %2594
  %2596 = vrot.lane.b32.xlu0 %v2389, 120
  %v2597 = vpop.permute.xlu0 %2596
  %v2598 = vsel %vm171, %v2591, 0
  %v2600 = vsel %vm171, %v2593, 0
  %v2602 = vsel %vm171, %v2595, 0
  %v2604 = vsel %vm171, %v2597, 0
  %2606 = vmatprep.subr.mxu0 0.0
  %2607 = vmatpush1.xpose.msra.mxu0 %v2602
  %2608 = vmatprep.subr.mxu0 0.0
  %2609 = vmatpush1.xpose.msra.mxu0 %v2604
  %2610 = vmatprep.subr.mxu0 0.0
  %2611 = vmatpush1.xpose.msra.mxu0 0.0
  %2612 = vmatprep.subr.mxu0 0.0
  %2613 = vmatpush1.xpose.msra.mxu0 0.0
  %2614 = vmatprep.subr.mxu0 0.0
  %2615 = vmatpush1.xpose.msra.mxu0 0.0
  %2616 = vmatprep.subr.mxu0 0.0
  %2617 = vmatpush1.xpose.msra.mxu0 0.0
  %2618 = vmatprep.subr.mxu0 0.0
  %2619 = vmatpush1.xpose.msra.mxu0 0.0
  %2620 = vmatprep.subr.mxu0 0.0
  %2621 = vmatpush1.xpose.msra.mxu0 0.0
  %2622 = vmatprep.subr.mxu0 0.0
  %2623 = vmatpush1.xpose.msra.mxu0 0.0
  %2624 = vmatprep.subr.mxu0 0.0
  %2625 = vmatpush1.xpose.msra.mxu0 0.0
  %2626 = vmatprep.subr.mxu0 0.0
  %2627 = vmatpush1.xpose.msra.mxu0 0.0
  %2628 = vmatprep.subr.mxu0 0.0
  %2629 = vmatpush1.xpose.msra.mxu0 0.0
  %2630 = vmatprep.subr.mxu0 0.0
  %2631 = vmatpush1.xpose.msra.mxu0 0.0
  %2632 = vmatprep.subr.mxu0 0.0
  %2633 = vmatpush1.xpose.msra.mxu0 0.0
  %2634 = vmatprep.subr.mxu0 0.0
  %2635 = vmatpush1.xpose.msra.mxu0 0.0
  %2636 = vmatprep.subr.mxu0 0.0
  %2637 = vmatpush1.xpose.msra.mxu0 0.0
  %2638 = vmatprep.subr.mxu0 0.0
  %2639 = vmatpush1.xpose.msra.mxu0 0.0
  %2640 = vmatprep.subr.mxu0 0.0
  %2641 = vmatpush1.xpose.msra.mxu0 0.0
  %2642 = vmatprep.subr.mxu0 0.0
  %2643 = vmatpush1.xpose.msra.mxu0 0.0
  %2644 = vmatprep.subr.mxu0 0.0
  %2645 = vmatpush1.xpose.msra.mxu0 0.0
  %2646 = vmatprep.subr.mxu0 0.0
  %2647 = vmatpush1.xpose.msra.mxu0 0.0
  %2648 = vmatprep.subr.mxu0 0.0
  %2649 = vmatpush1.xpose.msra.mxu0 0.0
  %2650 = vmatprep.subr.mxu0 0.0
  %2651 = vmatpush1.xpose.msra.mxu0 0.0
  %2652 = vmatprep.subr.mxu0 0.0
  %2653 = vmatpush1.xpose.msra.mxu0 0.0
  %2654 = vmatprep.subr.mxu0 0.0
  %2655 = vmatpush1.xpose.msra.mxu0 0.0
  %2656 = vmatprep.subr.mxu0 0.0
  %2657 = vmatpush1.xpose.msra.mxu0 0.0
  %2658 = vmatprep.subr.mxu0 0.0
  %2659 = vmatpush1.xpose.msra.mxu0 0.0
  %2660 = vmatprep.subr.mxu0 0.0
  %2661 = vmatpush1.xpose.msra.mxu0 0.0
  %2662 = vmatprep.subr.mxu0 0.0
  %2663 = vmatpush1.xpose.msra.mxu0 0.0
  %2664 = vmatprep.subr.mxu0 0.0
  %2665 = vmatpush1.xpose.msra.mxu0 0.0
  %2666 = vmatprep.subr.mxu0 0.0
  %2667 = vmatpush1.xpose.msra.mxu0 0.0
  %2668 = vmatprep.subr.mxu0 0.0
  %2669 = vmatpush1.xpose.msra.mxu0 0.0
  %2670 = vmatprep.mubr.f32.mxu0 0.0
  %2671 = vmatmul.mubr.f32.gmra.mrb[0].mxu0 %v2598
  %v2672 = vpop.f32.mrb[0].mxu0
  %v2673 = vadd.f32 %v49, %v2672
  %v2674 = vpop.f32.mrb[0].mxu0
  %2675 = vmatprep.mubr.f32.mxu0 0.0
  %2676 = vmatmul.mubr.f32.gmra.mrb[0].mxu0 %v2600
  %v2677 = vpop.f32.mrb[0].mxu0
  %v2678 = vadd.f32 %v50, %v2677
  %v2679 = vpop.f32.mrb[0].mxu0
  %2680 = vdwg.mxu0
  %v2681 = vsel %vm255, %v2673, -inf
  %2682 = vmax.xlane.f32.xlu0 %v2681
  %v2683 = vpop.xlane.xlu0 %2682
  %v2684 = vsel %vm255, %v2678, -inf
  %2685 = vmax.xlane.f32.xlu0 %v2684
  %v2686 = vpop.xlane.xlu0 %2685
  %v2687 = vsub.f32 %v2673, %v2683
  %v2688 = vsub.f32 %v2678, %v2686
  %v2689 = vmul.f32 %v2687, 1.442695
  %v2690 = vpow.pop %v2689
  %v2691 = vmul.f32 %v2688, 1.442695
  %v2692 = vpow.pop %v2691
  %v2693 = vsel %vm255, %v2690, 0.0
  %2694 = vadd.xlane.f32.xlu0 %v2693
  %v2695 = vpop.xlane.xlu0 %2694
  %v2696 = vsel %vm255, %v2692, 0.0
  %2697 = vadd.xlane.f32.xlu0 %v2696
  %v2698 = vpop.xlane.xlu0 %2697
  %v2699 = vrcp.pop %v2695
  %v2700 = vmul.f32 %v2690, %v2699
  %v2701 = vrcp.pop %v2698
  %v2702 = vmul.f32 %v2692, %v2701
  %2703 = vrot.lane.b32.xlu0 %v2384, 88
  %v2704 = vpop.permute.xlu0 %2703
  %2705 = vrot.lane.b32.xlu0 %v2389, 88
  %v2706 = vpop.permute.xlu0 %2705
  %v2710 = vsel %vm255, %v2700, 0
  %v2713 = vsel %vm255, %v2702, 0
  %2715 = vmatprep.subr.mxu0 0.0
  %2716 = vmatpush1.msra.mxu0 %v2704
  %2717 = vmatprep.subr.mxu0 0.0
  %2718 = vmatpush1.msra.mxu0 %v2706
  %2719 = vmatprep.subr.mxu0 0.0
  %2720 = vmatpush1.msra.mxu0 0.0
  %2721 = vmatprep.subr.mxu0 0.0
  %2722 = vmatpush1.msra.mxu0 0.0
  %2723 = vmatprep.subr.mxu0 0.0
  %2724 = vmatpush1.msra.mxu0 0.0
  %2725 = vmatprep.subr.mxu0 0.0
  %2726 = vmatpush1.msra.mxu0 0.0
  %2727 = vmatprep.subr.mxu0 0.0
  %2728 = vmatpush1.msra.mxu0 0.0
  %2729 = vmatprep.subr.mxu0 0.0
  %2730 = vmatpush1.msra.mxu0 0.0
  %2731 = vmatprep.subr.mxu0 0.0
  %2732 = vmatpush1.msra.mxu0 0.0
  %2733 = vmatprep.subr.mxu0 0.0
  %2734 = vmatpush1.msra.mxu0 0.0
  %2735 = vmatprep.subr.mxu0 0.0
  %2736 = vmatpush1.msra.mxu0 0.0
  %2737 = vmatprep.subr.mxu0 0.0
  %2738 = vmatpush1.msra.mxu0 0.0
  %2739 = vmatprep.subr.mxu0 0.0
  %2740 = vmatpush1.msra.mxu0 0.0
  %2741 = vmatprep.subr.mxu0 0.0
  %2742 = vmatpush1.msra.mxu0 0.0
  %2743 = vmatprep.subr.mxu0 0.0
  %2744 = vmatpush1.msra.mxu0 0.0
  %2745 = vmatprep.subr.mxu0 0.0
  %2746 = vmatpush1.msra.mxu0 0.0
  %2747 = vmatprep.subr.mxu0 0.0
  %2748 = vmatpush1.msra.mxu0 0.0
  %2749 = vmatprep.subr.mxu0 0.0
  %2750 = vmatpush1.msra.mxu0 0.0
  %2751 = vmatprep.subr.mxu0 0.0
  %2752 = vmatpush1.msra.mxu0 0.0
  %2753 = vmatprep.subr.mxu0 0.0
  %2754 = vmatpush1.msra.mxu0 0.0
  %2755 = vmatprep.subr.mxu0 0.0
  %2756 = vmatpush1.msra.mxu0 0.0
  %2757 = vmatprep.subr.mxu0 0.0
  %2758 = vmatpush1.msra.mxu0 0.0
  %2759 = vmatprep.subr.mxu0 0.0
  %2760 = vmatpush1.msra.mxu0 0.0
  %2761 = vmatprep.subr.mxu0 0.0
  %2762 = vmatpush1.msra.mxu0 0.0
  %2763 = vmatprep.subr.mxu0 0.0
  %2764 = vmatpush1.msra.mxu0 0.0
  %2765 = vmatprep.subr.mxu0 0.0
  %2766 = vmatpush1.msra.mxu0 0.0
  %2767 = vmatprep.subr.mxu0 0.0
  %2768 = vmatpush1.msra.mxu0 0.0
  %2769 = vmatprep.subr.mxu0 0.0
  %2770 = vmatpush1.msra.mxu0 0.0
  %2771 = vmatprep.subr.mxu0 0.0
  %2772 = vmatpush1.msra.mxu0 0.0
  %2773 = vmatprep.subr.mxu0 0.0
  %2774 = vmatpush1.msra.mxu0 0.0
  %2775 = vmatprep.subr.mxu0 0.0
  %2776 = vmatpush1.msra.mxu0 0.0
  %2777 = vmatprep.subr.mxu0 0.0
  %2778 = vmatpush1.msra.mxu0 0.0
  %2779 = vmatprep.mubr.f32.mxu0 0.0
  %2780 = vmatmul.mubr.f32.gmra.mrb[0].mxu0 %v2710
  %v2781 = vpop.f32.mrb[0].mxu0
  %v2782 = vadd.f32 0.0, %v2781
  %v2783 = vpop.f32.mrb[0].mxu0
  %2784 = vmatprep.mubr.f32.mxu0 0.0
  %2785 = vmatmul.mubr.f32.gmra.mrb[0].mxu0 %v2713
  %v2786 = vpop.f32.mrb[0].mxu0
  %v2787 = vadd.f32 0.0, %v2786
  %v2788 = vpop.f32.mrb[0].mxu0
  %2789 = vdwg.mxu0
  %2792 = vrot.lane.b32.xlu0 %v2782, 8
  %v2793 = vpop.permute.xlu0 %2792
  %2794 = vrot.lane.b32.xlu0 %v2787, 8
  %v2795 = vpop.permute.xlu0 %2794
  %2798 = vst.msk [vmem:[#allocation2] sm:$0xff] %vm575, %v2793
  %2799 = vst.msk [vmem:[#allocation2 + $0x8] sm:$0xff] %vm575, %v2795
  %2800 = vrot.lane.b32.xlu0 %v2283, 112
  %v2801 = vpop.permute.xlu0 %2800
  %2802 = vrot.lane.b32.xlu0 %v2288, 112
  %v2803 = vpop.permute.xlu0 %2802
  %2804 = vrot.lane.b32.xlu0 %v2384, 112
  %v2805 = vpop.permute.xlu0 %2804
  %2806 = vrot.lane.b32.xlu0 %v2389, 112
  %v2807 = vpop.permute.xlu0 %2806
  %v2808 = vsel %vm171, %v2801, 0
  %v2810 = vsel %vm171, %v2803, 0
  %v2812 = vsel %vm171, %v2805, 0
  %v2814 = vsel %vm171, %v2807, 0
  %2816 = vmatprep.subr.mxu0 0.0
  %2817 = vmatpush1.xpose.msra.mxu0 %v2812
  %2818 = vmatprep.subr.mxu0 0.0
  %2819 = vmatpush1.xpose.msra.mxu0 %v2814
  %2820 = vmatprep.subr.mxu0 0.0
  %2821 = vmatpush1.xpose.msra.mxu0 0.0
  %2822 = vmatprep.subr.mxu0 0.0
  %2823 = vmatpush1.xpose.msra.mxu0 0.0
  %2824 = vmatprep.subr.mxu0 0.0
  %2825 = vmatpush1.xpose.msra.mxu0 0.0
  %2826 = vmatprep.subr.mxu0 0.0
  %2827 = vmatpush1.xpose.msra.mxu0 0.0
  %2828 = vmatprep.subr.mxu0 0.0
  %2829 = vmatpush1.xpose.msra.mxu0 0.0
  %2830 = vmatprep.subr.mxu0 0.0
  %2831 = vmatpush1.xpose.msra.mxu0 0.0
  %2832 = vmatprep.subr.mxu0 0.0
  %2833 = vmatpush1.xpose.msra.mxu0 0.0
  %2834 = vmatprep.subr.mxu0 0.0
  %2835 = vmatpush1.xpose.msra.mxu0 0.0
  %2836 = vmatprep.subr.mxu0 0.0
  %2837 = vmatpush1.xpose.msra.mxu0 0.0
  %2838 = vmatprep.subr.mxu0 0.0
  %2839 = vmatpush1.xpose.msra.mxu0 0.0
  %2840 = vmatprep.subr.mxu0 0.0
  %2841 = vmatpush1.xpose.msra.mxu0 0.0
  %2842 = vmatprep.subr.mxu0 0.0
  %2843 = vmatpush1.xpose.msra.mxu0 0.0
  %2844 = vmatprep.subr.mxu0 0.0
  %2845 = vmatpush1.xpose.msra.mxu0 0.0
  %2846 = vmatprep.subr.mxu0 0.0
  %2847 = vmatpush1.xpose.msra.mxu0 0.0
  %2848 = vmatprep.subr.mxu0 0.0
  %2849 = vmatpush1.xpose.msra.mxu0 0.0
  %2850 = vmatprep.subr.mxu0 0.0
  %2851 = vmatpush1.xpose.msra.mxu0 0.0
  %2852 = vmatprep.subr.mxu0 0.0
  %2853 = vmatpush1.xpose.msra.mxu0 0.0
  %2854 = vmatprep.subr.mxu0 0.0
  %2855 = vmatpush1.xpose.msra.mxu0 0.0
  %2856 = vmatprep.subr.mxu0 0.0
  %2857 = vmatpush1.xpose.msra.mxu0 0.0
  %2858 = vmatprep.subr.mxu0 0.0
  %2859 = vmatpush1.xpose.msra.mxu0 0.0
  %2860 = vmatprep.subr.mxu0 0.0
  %2861 = vmatpush1.xpose.msra.mxu0 0.0
  %2862 = vmatprep.subr.mxu0 0.0
  %2863 = vmatpush1.xpose.msra.mxu0 0.0
  %2864 = vmatprep.subr.mxu0 0.0
  %2865 = vmatpush1.xpose.msra.mxu0 0.0
  %2866 = vmatprep.subr.mxu0 0.0
  %2867 = vmatpush1.xpose.msra.mxu0 0.0
  %2868 = vmatprep.subr.mxu0 0.0
  %2869 = vmatpush1.xpose.msra.mxu0 0.0
  %2870 = vmatprep.subr.mxu0 0.0
  %2871 = vmatpush1.xpose.msra.mxu0 0.0
  %2872 = vmatprep.subr.mxu0 0.0
  %2873 = vmatpush1.xpose.msra.mxu0 0.0
  %2874 = vmatprep.subr.mxu0 0.0
  %2875 = vmatpush1.xpose.msra.mxu0 0.0
  %2876 = vmatprep.subr.mxu0 0.0
  %2877 = vmatpush1.xpose.msra.mxu0 0.0
  %2878 = vmatprep.subr.mxu0 0.0
  %2879 = vmatpush1.xpose.msra.mxu0 0.0
  %2880 = vmatprep.mubr.f32.mxu0 0.0
  %2881 = vmatmul.mubr.f32.gmra.mrb[0].mxu0 %v2808
  %v2882 = vpop.f32.mrb[0].mxu0
  %v2883 = vadd.f32 %v49, %v2882
  %v2884 = vpop.f32.mrb[0].mxu0
  %2885 = vmatprep.mubr.f32.mxu0 0.0
  %2886 = vmatmul.mubr.f32.gmra.mrb[0].mxu0 %v2810
  %v2887 = vpop.f32.mrb[0].mxu0
  %v2888 = vadd.f32 %v50, %v2887
  %v2889 = vpop.f32.mrb[0].mxu0
  %2890 = vdwg.mxu0
  %v2891 = vsel %vm255, %v2883, -inf
  %2892 = vmax.xlane.f32.xlu0 %v2891
  %v2893 = vpop.xlane.xlu0 %2892
  %v2894 = vsel %vm255, %v2888, -inf
  %2895 = vmax.xlane.f32.xlu0 %v2894
  %v2896 = vpop.xlane.xlu0 %2895
  %v2897 = vsub.f32 %v2883, %v2893
  %v2898 = vsub.f32 %v2888, %v2896
  %v2899 = vmul.f32 %v2897, 1.442695
  %v2900 = vpow.pop %v2899
  %v2901 = vmul.f32 %v2898, 1.442695
  %v2902 = vpow.pop %v2901
  %v2903 = vsel %vm255, %v2900, 0.0
  %2904 = vadd.xlane.f32.xlu0 %v2903
  %v2905 = vpop.xlane.xlu0 %2904
  %v2906 = vsel %vm255, %v2902, 0.0
  %2907 = vadd.xlane.f32.xlu0 %v2906
  %v2908 = vpop.xlane.xlu0 %2907
  %v2909 = vrcp.pop %v2905
  %v2910 = vmul.f32 %v2900, %v2909
  %v2911 = vrcp.pop %v2908
  %v2912 = vmul.f32 %v2902, %v2911
  %2913 = vrot.lane.b32.xlu0 %v2384, 80
  %v2914 = vpop.permute.xlu0 %2913
  %2915 = vrot.lane.b32.xlu0 %v2389, 80
  %v2916 = vpop.permute.xlu0 %2915
  %v2920 = vsel %vm255, %v2910, 0
  %v2923 = vsel %vm255, %v2912, 0
  %2925 = vmatprep.subr.mxu0 0.0
  %2926 = vmatpush1.msra.mxu0 %v2914
  %2927 = vmatprep.subr.mxu0 0.0
  %2928 = vmatpush1.msra.mxu0 %v2916
  %2929 = vmatprep.subr.mxu0 0.0
  %2930 = vmatpush1.msra.mxu0 0.0
  %2931 = vmatprep.subr.mxu0 0.0
  %2932 = vmatpush1.msra.mxu0 0.0
  %2933 = vmatprep.subr.mxu0 0.0
  %2934 = vmatpush1.msra.mxu0 0.0
  %2935 = vmatprep.subr.mxu0 0.0
  %2936 = vmatpush1.msra.mxu0 0.0
  %2937 = vmatprep.subr.mxu0 0.0
  %2938 = vmatpush1.msra.mxu0 0.0
  %2939 = vmatprep.subr.mxu0 0.0
  %2940 = vmatpush1.msra.mxu0 0.0
  %2941 = vmatprep.subr.mxu0 0.0
  %2942 = vmatpush1.msra.mxu0 0.0
  %2943 = vmatprep.subr.mxu0 0.0
  %2944 = vmatpush1.msra.mxu0 0.0
  %2945 = vmatprep.subr.mxu0 0.0
  %2946 = vmatpush1.msra.mxu0 0.0
  %2947 = vmatprep.subr.mxu0 0.0
  %2948 = vmatpush1.msra.mxu0 0.0
  %2949 = vmatprep.subr.mxu0 0.0
  %2950 = vmatpush1.msra.mxu0 0.0
  %2951 = vmatprep.subr.mxu0 0.0
  %2952 = vmatpush1.msra.mxu0 0.0
  %2953 = vmatprep.subr.mxu0 0.0
  %2954 = vmatpush1.msra.mxu0 0.0
  %2955 = vmatprep.subr.mxu0 0.0
  %2956 = vmatpush1.msra.mxu0 0.0
  %2957 = vmatprep.subr.mxu0 0.0
  %2958 = vmatpush1.msra.mxu0 0.0
  %2959 = vmatprep.subr.mxu0 0.0
  %2960 = vmatpush1.msra.mxu0 0.0
  %2961 = vmatprep.subr.mxu0 0.0
  %2962 = vmatpush1.msra.mxu0 0.0
  %2963 = vmatprep.subr.mxu0 0.0
  %2964 = vmatpush1.msra.mxu0 0.0
  %2965 = vmatprep.subr.mxu0 0.0
  %2966 = vmatpush1.msra.mxu0 0.0
  %2967 = vmatprep.subr.mxu0 0.0
  %2968 = vmatpush1.msra.mxu0 0.0
  %2969 = vmatprep.subr.mxu0 0.0
  %2970 = vmatpush1.msra.mxu0 0.0
  %2971 = vmatprep.subr.mxu0 0.0
  %2972 = vmatpush1.msra.mxu0 0.0
  %2973 = vmatprep.subr.mxu0 0.0
  %2974 = vmatpush1.msra.mxu0 0.0
  %2975 = vmatprep.subr.mxu0 0.0
  %2976 = vmatpush1.msra.mxu0 0.0
  %2977 = vmatprep.subr.mxu0 0.0
  %2978 = vmatpush1.msra.mxu0 0.0
  %2979 = vmatprep.subr.mxu0 0.0
  %2980 = vmatpush1.msra.mxu0 0.0
  %2981 = vmatprep.subr.mxu0 0.0
  %2982 = vmatpush1.msra.mxu0 0.0
  %2983 = vmatprep.subr.mxu0 0.0
  %2984 = vmatpush1.msra.mxu0 0.0
  %2985 = vmatprep.subr.mxu0 0.0
  %2986 = vmatpush1.msra.mxu0 0.0
  %2987 = vmatprep.subr.mxu0 0.0
  %2988 = vmatpush1.msra.mxu0 0.0
  %2989 = vmatprep.mubr.f32.mxu0 0.0
  %2990 = vmatmul.mubr.f32.gmra.mrb[0].mxu0 %v2920
  %v2991 = vpop.f32.mrb[0].mxu0
  %v2992 = vadd.f32 0.0, %v2991
  %v2993 = vpop.f32.mrb[0].mxu0
  %2994 = vmatprep.mubr.f32.mxu0 0.0
  %2995 = vmatmul.mubr.f32.gmra.mrb[0].mxu0 %v2923
  %v2996 = vpop.f32.mrb[0].mxu0
  %v2997 = vadd.f32 0.0, %v2996
  %v2998 = vpop.f32.mrb[0].mxu0
  %2999 = vdwg.mxu0
  %3002 = vrot.lane.b32.xlu0 %v2992, 16
  %v3003 = vpop.permute.xlu0 %3002
  %3004 = vrot.lane.b32.xlu0 %v2997, 16
  %v3005 = vpop.permute.xlu0 %3004
  %3008 = vst.msk [vmem:[#allocation2] sm:$0xff] %vm786, %v3003
  %3009 = vst.msk [vmem:[#allocation2 + $0x8] sm:$0xff] %vm786, %v3005
  %3010 = vrot.lane.b32.xlu0 %v2283, 104
  %v3011 = vpop.permute.xlu0 %3010
  %3012 = vrot.lane.b32.xlu0 %v2288, 104
  %v3013 = vpop.permute.xlu0 %3012
  %3014 = vrot.lane.b32.xlu0 %v2384, 104
  %v3015 = vpop.permute.xlu0 %3014
  %3016 = vrot.lane.b32.xlu0 %v2389, 104
  %v3017 = vpop.permute.xlu0 %3016
  %v3018 = vsel %vm171, %v3011, 0
  %v3020 = vsel %vm171, %v3013, 0
  %v3022 = vsel %vm171, %v3015, 0
  %v3024 = vsel %vm171, %v3017, 0
  %3026 = vmatprep.subr.mxu0 0.0
  %3027 = vmatpush1.xpose.msra.mxu0 %v3022
  %3028 = vmatprep.subr.mxu0 0.0
  %3029 = vmatpush1.xpose.msra.mxu0 %v3024
  %3030 = vmatprep.subr.mxu0 0.0
  %3031 = vmatpush1.xpose.msra.mxu0 0.0
  %3032 = vmatprep.subr.mxu0 0.0
  %3033 = vmatpush1.xpose.msra.mxu0 0.0
  %3034 = vmatprep.subr.mxu0 0.0
  %3035 = vmatpush1.xpose.msra.mxu0 0.0
  %3036 = vmatprep.subr.mxu0 0.0
  %3037 = vmatpush1.xpose.msra.mxu0 0.0
  %3038 = vmatprep.subr.mxu0 0.0
  %3039 = vmatpush1.xpose.msra.mxu0 0.0
  %3040 = vmatprep.subr.mxu0 0.0
  %3041 = vmatpush1.xpose.msra.mxu0 0.0
  %3042 = vmatprep.subr.mxu0 0.0
  %3043 = vmatpush1.xpose.msra.mxu0 0.0
  %3044 = vmatprep.subr.mxu0 0.0
  %3045 = vmatpush1.xpose.msra.mxu0 0.0
  %3046 = vmatprep.subr.mxu0 0.0
  %3047 = vmatpush1.xpose.msra.mxu0 0.0
  %3048 = vmatprep.subr.mxu0 0.0
  %3049 = vmatpush1.xpose.msra.mxu0 0.0
  %3050 = vmatprep.subr.mxu0 0.0
  %3051 = vmatpush1.xpose.msra.mxu0 0.0
  %3052 = vmatprep.subr.mxu0 0.0
  %3053 = vmatpush1.xpose.msra.mxu0 0.0
  %3054 = vmatprep.subr.mxu0 0.0
  %3055 = vmatpush1.xpose.msra.mxu0 0.0
  %3056 = vmatprep.subr.mxu0 0.0
  %3057 = vmatpush1.xpose.msra.mxu0 0.0
  %3058 = vmatprep.subr.mxu0 0.0
  %3059 = vmatpush1.xpose.msra.mxu0 0.0
  %3060 = vmatprep.subr.mxu0 0.0
  %3061 = vmatpush1.xpose.msra.mxu0 0.0
  %3062 = vmatprep.subr.mxu0 0.0
  %3063 = vmatpush1.xpose.msra.mxu0 0.0
  %3064 = vmatprep.subr.mxu0 0.0
  %3065 = vmatpush1.xpose.msra.mxu0 0.0
  %3066 = vmatprep.subr.mxu0 0.0
  %3067 = vmatpush1.xpose.msra.mxu0 0.0
  %3068 = vmatprep.subr.mxu0 0.0
  %3069 = vmatpush1.xpose.msra.mxu0 0.0
  %3070 = vmatprep.subr.mxu0 0.0
  %3071 = vmatpush1.xpose.msra.mxu0 0.0
  %3072 = vmatprep.subr.mxu0 0.0
  %3073 = vmatpush1.xpose.msra.mxu0 0.0
  %3074 = vmatprep.subr.mxu0 0.0
  %3075 = vmatpush1.xpose.msra.mxu0 0.0
  %3076 = vmatprep.subr.mxu0 0.0
  %3077 = vmatpush1.xpose.msra.mxu0 0.0
  %3078 = vmatprep.subr.mxu0 0.0
  %3079 = vmatpush1.xpose.msra.mxu0 0.0
  %3080 = vmatprep.subr.mxu0 0.0
  %3081 = vmatpush1.xpose.msra.mxu0 0.0
  %3082 = vmatprep.subr.mxu0 0.0
  %3083 = vmatpush1.xpose.msra.mxu0 0.0
  %3084 = vmatprep.subr.mxu0 0.0
  %3085 = vmatpush1.xpose.msra.mxu0 0.0
  %3086 = vmatprep.subr.mxu0 0.0
  %3087 = vmatpush1.xpose.msra.mxu0 0.0
  %3088 = vmatprep.subr.mxu0 0.0
  %3089 = vmatpush1.xpose.msra.mxu0 0.0
  %3090 = vmatprep.mubr.f32.mxu0 0.0
  %3091 = vmatmul.mubr.f32.gmra.mrb[0].mxu0 %v3018
  %v3092 = vpop.f32.mrb[0].mxu0
  %v3093 = vadd.f32 %v49, %v3092
  %v3094 = vpop.f32.mrb[0].mxu0
  %3095 = vmatprep.mubr.f32.mxu0 0.0
  %3096 = vmatmul.mubr.f32.gmra.mrb[0].mxu0 %v3020
  %v3097 = vpop.f32.mrb[0].mxu0
  %v3098 = vadd.f32 %v50, %v3097
  %v3099 = vpop.f32.mrb[0].mxu0
  %3100 = vdwg.mxu0
  %v3101 = vsel %vm255, %v3093, -inf
  %3102 = vmax.xlane.f32.xlu0 %v3101
  %v3103 = vpop.xlane.xlu0 %3102
  %v3104 = vsel %vm255, %v3098, -inf
  %3105 = vmax.xlane.f32.xlu0 %v3104
  %v3106 = vpop.xlane.xlu0 %3105
  %v3107 = vsub.f32 %v3093, %v3103
  %v3108 = vsub.f32 %v3098, %v3106
  %v3109 = vmul.f32 %v3107, 1.442695
  %v3110 = vpow.pop %v3109
  %v3111 = vmul.f32 %v3108, 1.442695
  %v3112 = vpow.pop %v3111
  %v3113 = vsel %vm255, %v3110, 0.0
  %3114 = vadd.xlane.f32.xlu0 %v3113
  %v3115 = vpop.xlane.xlu0 %3114
  %v3116 = vsel %vm255, %v3112, 0.0
  %3117 = vadd.xlane.f32.xlu0 %v3116
  %v3118 = vpop.xlane.xlu0 %3117
  %v3119 = vrcp.pop %v3115
  %v3120 = vmul.f32 %v3110, %v3119
  %v3121 = vrcp.pop %v3118
  %v3122 = vmul.f32 %v3112, %v3121
  %3123 = vrot.lane.b32.xlu0 %v2384, 72
  %v3124 = vpop.permute.xlu0 %3123
  %3125 = vrot.lane.b32.xlu0 %v2389, 72
  %v3126 = vpop.permute.xlu0 %3125
  %v3130 = vsel %vm255, %v3120, 0
  %v3133 = vsel %vm255, %v3122, 0
  %3135 = vmatprep.subr.mxu0 0.0
  %3136 = vmatpush1.msra.mxu0 %v3124
  %3137 = vmatprep.subr.mxu0 0.0
  %3138 = vmatpush1.msra.mxu0 %v3126
  %3139 = vmatprep.subr.mxu0 0.0
  %3140 = vmatpush1.msra.mxu0 0.0
  %3141 = vmatprep.subr.mxu0 0.0
  %3142 = vmatpush1.msra.mxu0 0.0
  %3143 = vmatprep.subr.mxu0 0.0
  %3144 = vmatpush1.msra.mxu0 0.0
  %3145 = vmatprep.subr.mxu0 0.0
  %3146 = vmatpush1.msra.mxu0 0.0
  %3147 = vmatprep.subr.mxu0 0.0
  %3148 = vmatpush1.msra.mxu0 0.0
  %3149 = vmatprep.subr.mxu0 0.0
  %3150 = vmatpush1.msra.mxu0 0.0
  %3151 = vmatprep.subr.mxu0 0.0
  %3152 = vmatpush1.msra.mxu0 0.0
  %3153 = vmatprep.subr.mxu0 0.0
  %3154 = vmatpush1.msra.mxu0 0.0
  %3155 = vmatprep.subr.mxu0 0.0
  %3156 = vmatpush1.msra.mxu0 0.0
  %3157 = vmatprep.subr.mxu0 0.0
  %3158 = vmatpush1.msra.mxu0 0.0
  %3159 = vmatprep.subr.mxu0 0.0
  %3160 = vmatpush1.msra.mxu0 0.0
  %3161 = vmatprep.subr.mxu0 0.0
  %3162 = vmatpush1.msra.mxu0 0.0
  %3163 = vmatprep.subr.mxu0 0.0
  %3164 = vmatpush1.msra.mxu0 0.0
  %3165 = vmatprep.subr.mxu0 0.0
  %3166 = vmatpush1.msra.mxu0 0.0
  %3167 = vmatprep.subr.mxu0 0.0
  %3168 = vmatpush1.msra.mxu0 0.0
  %3169 = vmatprep.subr.mxu0 0.0
  %3170 = vmatpush1.msra.mxu0 0.0
  %3171 = vmatprep.subr.mxu0 0.0
  %3172 = vmatpush1.msra.mxu0 0.0
  %3173 = vmatprep.subr.mxu0 0.0
  %3174 = vmatpush1.msra.mxu0 0.0
  %3175 = vmatprep.subr.mxu0 0.0
  %3176 = vmatpush1.msra.mxu0 0.0
  %3177 = vmatprep.subr.mxu0 0.0
  %3178 = vmatpush1.msra.mxu0 0.0
  %3179 = vmatprep.subr.mxu0 0.0
  %3180 = vmatpush1.msra.mxu0 0.0
  %3181 = vmatprep.subr.mxu0 0.0
  %3182 = vmatpush1.msra.mxu0 0.0
  %3183 = vmatprep.subr.mxu0 0.0
  %3184 = vmatpush1.msra.mxu0 0.0
  %3185 = vmatprep.subr.mxu0 0.0
  %3186 = vmatpush1.msra.mxu0 0.0
  %3187 = vmatprep.subr.mxu0 0.0
  %3188 = vmatpush1.msra.mxu0 0.0
  %3189 = vmatprep.subr.mxu0 0.0
  %3190 = vmatpush1.msra.mxu0 0.0
  %3191 = vmatprep.subr.mxu0 0.0
  %3192 = vmatpush1.msra.mxu0 0.0
  %3193 = vmatprep.subr.mxu0 0.0
  %3194 = vmatpush1.msra.mxu0 0.0
  %3195 = vmatprep.subr.mxu0 0.0
  %3196 = vmatpush1.msra.mxu0 0.0
  %3197 = vmatprep.subr.mxu0 0.0
  %3198 = vmatpush1.msra.mxu0 0.0
  %3199 = vmatprep.mubr.f32.mxu0 0.0
  %3200 = vmatmul.mubr.f32.gmra.mrb[0].mxu0 %v3130
  %v3201 = vpop.f32.mrb[0].mxu0
  %v3202 = vadd.f32 0.0, %v3201
  %v3203 = vpop.f32.mrb[0].mxu0
  %3204 = vmatprep.mubr.f32.mxu0 0.0
  %3205 = vmatmul.mubr.f32.gmra.mrb[0].mxu0 %v3133
  %v3206 = vpop.f32.mrb[0].mxu0
  %v3207 = vadd.f32 0.0, %v3206
  %v3208 = vpop.f32.mrb[0].mxu0
  %3209 = vdwg.mxu0
  %3212 = vrot.lane.b32.xlu0 %v3202, 24
  %v3213 = vpop.permute.xlu0 %3212
  %3214 = vrot.lane.b32.xlu0 %v3207, 24
  %v3215 = vpop.permute.xlu0 %3214
  %3218 = vst.msk [vmem:[#allocation2] sm:$0xff] %vm997, %v3213
  %3219 = vst.msk [vmem:[#allocation2 + $0x8] sm:$0xff] %vm997, %v3215
  %v3220 = vld [vmem:[#allocation2] sm:$0xff]
  %v3221 = vld [vmem:[#allocation2 + $0x8] sm:$0xff]
  %3222 = vrot.lane.b32.xlu0 %v59, 32
  %v3223 = vpop.permute.xlu0 %3222
  %3224 = vrot.lane.b32.xlu0 %v60, 32
  %v3225 = vpop.permute.xlu0 %3224
  %3226 = vrot.lane.b32.xlu0 %v61, 32
  %v3227 = vpop.permute.xlu0 %3226
  %3228 = vrot.lane.b32.xlu0 %v62, 32
  %v3229 = vpop.permute.xlu0 %3228
  %3234 = vrot.lane.b32.xlu0 %v2209, 32
  %v3235 = vpop.permute.xlu0 %3234
  %v3238 = vsel %vm83, %v3220, 0
  %v3241 = vsel %vm83, %v3221, 0
  %3243 = vmatprep.subr.mxu0 0.0
  %3244 = vmatpush1.msra.mxu0 %v3223
  %3245 = vmatprep.subr.mxu0 0.0
  %3246 = vmatpush1.msra.mxu0 %v3225
  %3247 = vmatprep.subr.mxu0 0.0
  %3248 = vmatpush1.msra.mxu0 %v3227
  %3249 = vmatprep.subr.mxu0 0.0
  %3250 = vmatpush1.msra.mxu0 %v3229
  %3251 = vmatprep.subr.mxu0 0.0
  %3252 = vmatpush1.msra.mxu0 0.0
  %3253 = vmatprep.subr.mxu0 0.0
  %3254 = vmatpush1.msra.mxu0 0.0
  %3255 = vmatprep.subr.mxu0 0.0
  %3256 = vmatpush1.msra.mxu0 0.0
  %3257 = vmatprep.subr.mxu0 0.0
  %3258 = vmatpush1.msra.mxu0 0.0
  %3259 = vmatprep.subr.mxu0 0.0
  %3260 = vmatpush1.msra.mxu0 0.0
  %3261 = vmatprep.subr.mxu0 0.0
  %3262 = vmatpush1.msra.mxu0 0.0
  %3263 = vmatprep.subr.mxu0 0.0
  %3264 = vmatpush1.msra.mxu0 0.0
  %3265 = vmatprep.subr.mxu0 0.0
  %3266 = vmatpush1.msra.mxu0 0.0
  %3267 = vmatprep.subr.mxu0 0.0
  %3268 = vmatpush1.msra.mxu0 0.0
  %3269 = vmatprep.subr.mxu0 0.0
  %3270 = vmatpush1.msra.mxu0 0.0
  %3271 = vmatprep.subr.mxu0 0.0
  %3272 = vmatpush1.msra.mxu0 0.0
  %3273 = vmatprep.subr.mxu0 0.0
  %3274 = vmatpush1.msra.mxu0 0.0
  %3275 = vmatprep.subr.mxu0 0.0
  %3276 = vmatpush1.msra.mxu0 0.0
  %3277 = vmatprep.subr.mxu0 0.0
  %3278 = vmatpush1.msra.mxu0 0.0
  %3279 = vmatprep.subr.mxu0 0.0
  %3280 = vmatpush1.msra.mxu0 0.0
  %3281 = vmatprep.subr.mxu0 0.0
  %3282 = vmatpush1.msra.mxu0 0.0
  %3283 = vmatprep.subr.mxu0 0.0
  %3284 = vmatpush1.msra.mxu0 0.0
  %3285 = vmatprep.subr.mxu0 0.0
  %3286 = vmatpush1.msra.mxu0 0.0
  %3287 = vmatprep.subr.mxu0 0.0
  %3288 = vmatpush1.msra.mxu0 0.0
  %3289 = vmatprep.subr.mxu0 0.0
  %3290 = vmatpush1.msra.mxu0 0.0
  %3291 = vmatprep.subr.mxu0 0.0
  %3292 = vmatpush1.msra.mxu0 0.0
  %3293 = vmatprep.subr.mxu0 0.0
  %3294 = vmatpush1.msra.mxu0 0.0
  %3295 = vmatprep.subr.mxu0 0.0
  %3296 = vmatpush1.msra.mxu0 0.0
  %3297 = vmatprep.subr.mxu0 0.0
  %3298 = vmatpush1.msra.mxu0 0.0
  %3299 = vmatprep.subr.mxu0 0.0
  %3300 = vmatpush1.msra.mxu0 0.0
  %3301 = vmatprep.subr.mxu0 0.0
  %3302 = vmatpush1.msra.mxu0 0.0
  %3303 = vmatprep.subr.mxu0 0.0
  %3304 = vmatpush1.msra.mxu0 0.0
  %3305 = vmatprep.subr.mxu0 0.0
  %3306 = vmatpush1.msra.mxu0 0.0
  %3307 = vmatprep.mubr.f32.mxu0 0.0
  %3308 = vmatmul.mubr.f32.gmra.mrb[0].mxu0 %v3238
  %v3309 = vpop.f32.mrb[0].mxu0
  %v3310 = vadd.f32 %v3235, %v3309
  %v3311 = vpop.f32.mrb[0].mxu0
  %3312 = vmatprep.mubr.f32.mxu0 0.0
  %3313 = vmatmul.mubr.f32.gmra.mrb[0].mxu0 %v3241
  %v3314 = vpop.f32.mrb[0].mxu0
  %v3315 = vadd.f32 %v3235, %v3314
  %v3316 = vpop.f32.mrb[0].mxu0
  %3317 = vdwg.mxu0
  %v3318 = vadd.f32 %v2204, %v3310
  %v3319 = vadd.f32 %v2205, %v3315
  %v3320 = vsel %vm83, %v3318, 0.0
  %3321 = vadd.xlane.f32.xlu0 %v3320
  %v3322 = vpop.xlane.xlu0 %3321
  %v3323 = vsel %vm83, %v3319, 0.0
  %3324 = vadd.xlane.f32.xlu0 %v3323
  %v3325 = vpop.xlane.xlu0 %3324
  %v3326 = vmul.f32 %v3322, %v1111
  %v3327 = vmul.f32 %v3325, %v1111
  %v3328 = vsub.f32 %v3318, %v3326
  %v3329 = vsub.f32 %v3319, %v3327
  %v3330 = vmul.f32 %v3328, %v3328
  %v3331 = vmul.f32 %v3329, %v3329
  %v3332 = vsel %vm83, %v3330, 0.0
  %3333 = vadd.xlane.f32.xlu0 %v3332
  %v3334 = vpop.xlane.xlu0 %3333
  %v3335 = vsel %vm83, %v3331, 0.0
  %3336 = vadd.xlane.f32.xlu0 %v3335
  %v3337 = vpop.xlane.xlu0 %3336
  %v3338 = vmul.f32 %v3334, %v1111
  %v3339 = vmul.f32 %v3337, %v1111
  %v3340 = vadd.f32 %v3338, 1e-05
  %v3341 = vadd.f32 %v3339, 1e-05
  %v3342 = vrsqrt.pop %v3340
  %v3343 = vrsqrt.pop %v3341
  %v3344 = vmul.f32 %v3328, %v3342
  %v3345 = vmul.f32 %v3329, %v3343
  %v3346 = vlaneseq
  %v3347 = vshrl.u32 %v3346, 7
  %v3348 = vsub.s32 4, %v3347
  %v3349 = vrot.slane %v78, %v3348
  %v3350 = vmul.f32 %v3344, %v3349
  %v3351 = vmul.f32 %v3345, %v3349
  %v3352 = vlaneseq
  %v3353 = vshrl.u32 %v3352, 7
  %v3354 = vsub.s32 5, %v3353
  %v3355 = vrot.slane %v78, %v3354
  %v3356 = vadd.f32 %v3350, %v3355
  %v3357 = vadd.f32 %v3351, %v3355
  %v3359 = vlaneseq
  %v3360 = vshrl.u32 %v3359, 7
  %v3361 = vsub.s32 0, %v3360
  %v3362 = vrot.slane %v68, %v3361
  %v3365 = vsel %vm83, %v3356, 0
  %v3368 = vsel %vm83, %v3357, 0
  %3370 = vmatprep.subr.mxu0 0.0
  %3371 = vmatpush1.msra.mxu0 %v64
  %3372 = vmatprep.subr.mxu0 0.0
  %3373 = vmatpush1.msra.mxu0 %v65
  %3374 = vmatprep.subr.mxu0 0.0
  %3375 = vmatpush1.msra.mxu0 %v66
  %3376 = vmatprep.subr.mxu0 0.0
  %3377 = vmatpush1.msra.mxu0 %v67
  %3378 = vmatprep.subr.mxu0 0.0
  %3379 = vmatpush1.msra.mxu0 0.0
  %3380 = vmatprep.subr.mxu0 0.0
  %3381 = vmatpush1.msra.mxu0 0.0
  %3382 = vmatprep.subr.mxu0 0.0
  %3383 = vmatpush1.msra.mxu0 0.0
  %3384 = vmatprep.subr.mxu0 0.0
  %3385 = vmatpush1.msra.mxu0 0.0
  %3386 = vmatprep.subr.mxu0 0.0
  %3387 = vmatpush1.msra.mxu0 0.0
  %3388 = vmatprep.subr.mxu0 0.0
  %3389 = vmatpush1.msra.mxu0 0.0
  %3390 = vmatprep.subr.mxu0 0.0
  %3391 = vmatpush1.msra.mxu0 0.0
  %3392 = vmatprep.subr.mxu0 0.0
  %3393 = vmatpush1.msra.mxu0 0.0
  %3394 = vmatprep.subr.mxu0 0.0
  %3395 = vmatpush1.msra.mxu0 0.0
  %3396 = vmatprep.subr.mxu0 0.0
  %3397 = vmatpush1.msra.mxu0 0.0
  %3398 = vmatprep.subr.mxu0 0.0
  %3399 = vmatpush1.msra.mxu0 0.0
  %3400 = vmatprep.subr.mxu0 0.0
  %3401 = vmatpush1.msra.mxu0 0.0
  %3402 = vmatprep.subr.mxu0 0.0
  %3403 = vmatpush1.msra.mxu0 0.0
  %3404 = vmatprep.subr.mxu0 0.0
  %3405 = vmatpush1.msra.mxu0 0.0
  %3406 = vmatprep.subr.mxu0 0.0
  %3407 = vmatpush1.msra.mxu0 0.0
  %3408 = vmatprep.subr.mxu0 0.0
  %3409 = vmatpush1.msra.mxu0 0.0
  %3410 = vmatprep.subr.mxu0 0.0
  %3411 = vmatpush1.msra.mxu0 0.0
  %3412 = vmatprep.subr.mxu0 0.0
  %3413 = vmatpush1.msra.mxu0 0.0
  %3414 = vmatprep.subr.mxu0 0.0
  %3415 = vmatpush1.msra.mxu0 0.0
  %3416 = vmatprep.subr.mxu0 0.0
  %3417 = vmatpush1.msra.mxu0 0.0
  %3418 = vmatprep.subr.mxu0 0.0
  %3419 = vmatpush1.msra.mxu0 0.0
  %3420 = vmatprep.subr.mxu0 0.0
  %3421 = vmatpush1.msra.mxu0 0.0
  %3422 = vmatprep.subr.mxu0 0.0
  %3423 = vmatpush1.msra.mxu0 0.0
  %3424 = vmatprep.subr.mxu0 0.0
  %3425 = vmatpush1.msra.mxu0 0.0
  %3426 = vmatprep.subr.mxu0 0.0
  %3427 = vmatpush1.msra.mxu0 0.0
  %3428 = vmatprep.subr.mxu0 0.0
  %3429 = vmatpush1.msra.mxu0 0.0
  %3430 = vmatprep.subr.mxu0 0.0
  %3431 = vmatpush1.msra.mxu0 0.0
  %3432 = vmatprep.subr.mxu0 0.0
  %3433 = vmatpush1.msra.mxu0 0.0
  %3434 = vmatprep.mubr.f32.mxu0 0.0
  %3435 = vmatmul.mubr.f32.gmra.mrb[0].mxu0 %v3365
  %v3436 = vpop.f32.mrb[0].mxu0
  %v3437 = vadd.f32 %v3362, %v3436
  %v3438 = vpop.f32.mrb[0].mxu0
  %3439 = vmatprep.mubr.f32.mxu0 0.0
  %3440 = vmatmul.mubr.f32.gmra.mrb[0].mxu0 %v3368
  %v3441 = vpop.f32.mrb[0].mxu0
  %v3442 = vadd.f32 %v3362, %v3441
  %v3443 = vpop.f32.mrb[0].mxu0
  %3444 = vdwg.mxu0
  %v3445 = vmax.f32 %v3437, 0.0
  %v3446 = vmax.f32 %v3442, 0.0
  %v3448 = vlaneseq
  %v3449 = vshrl.u32 %v3448, 7
  %v3450 = vsub.s32 0, %v3449
  %v3451 = vrot.slane %v77, %v3450
  %vm3453 = vcmask 523264
  %v3455 = vsel %vm3453, %v3445, 0
  %v3458 = vsel %vm3453, %v3446, 0
  %3460 = vmatprep.subr.mxu0 0.0
  %3461 = vmatpush1.msra.mxu0 %v69
  %3462 = vmatprep.subr.mxu0 0.0
  %3463 = vmatpush1.msra.mxu0 %v70
  %3464 = vmatprep.subr.mxu0 0.0
  %3465 = vmatpush1.msra.mxu0 %v71
  %3466 = vmatprep.subr.mxu0 0.0
  %3467 = vmatpush1.msra.mxu0 %v72
  %3468 = vmatprep.subr.mxu0 0.0
  %3469 = vmatpush1.msra.mxu0 %v73
  %3470 = vmatprep.subr.mxu0 0.0
  %3471 = vmatpush1.msra.mxu0 %v74
  %3472 = vmatprep.subr.mxu0 0.0
  %3473 = vmatpush1.msra.mxu0 %v75
  %3474 = vmatprep.subr.mxu0 0.0
  %3475 = vmatpush1.msra.mxu0 %v76
  %3476 = vmatprep.subr.mxu0 0.0
  %3477 = vmatpush1.msra.mxu0 0.0
  %3478 = vmatprep.subr.mxu0 0.0
  %3479 = vmatpush1.msra.mxu0 0.0
  %3480 = vmatprep.subr.mxu0 0.0
  %3481 = vmatpush1.msra.mxu0 0.0
  %3482 = vmatprep.subr.mxu0 0.0
  %3483 = vmatpush1.msra.mxu0 0.0
  %3484 = vmatprep.subr.mxu0 0.0
  %3485 = vmatpush1.msra.mxu0 0.0
  %3486 = vmatprep.subr.mxu0 0.0
  %3487 = vmatpush1.msra.mxu0 0.0
  %3488 = vmatprep.subr.mxu0 0.0
  %3489 = vmatpush1.msra.mxu0 0.0
  %3490 = vmatprep.subr.mxu0 0.0
  %3491 = vmatpush1.msra.mxu0 0.0
  %3492 = vmatprep.subr.mxu0 0.0
  %3493 = vmatpush1.msra.mxu0 0.0
  %3494 = vmatprep.subr.mxu0 0.0
  %3495 = vmatpush1.msra.mxu0 0.0
  %3496 = vmatprep.subr.mxu0 0.0
  %3497 = vmatpush1.msra.mxu0 0.0
  %3498 = vmatprep.subr.mxu0 0.0
  %3499 = vmatpush1.msra.mxu0 0.0
  %3500 = vmatprep.subr.mxu0 0.0
  %3501 = vmatpush1.msra.mxu0 0.0
  %3502 = vmatprep.subr.mxu0 0.0
  %3503 = vmatpush1.msra.mxu0 0.0
  %3504 = vmatprep.subr.mxu0 0.0
  %3505 = vmatpush1.msra.mxu0 0.0
  %3506 = vmatprep.subr.mxu0 0.0
  %3507 = vmatpush1.msra.mxu0 0.0
  %3508 = vmatprep.subr.mxu0 0.0
  %3509 = vmatpush1.msra.mxu0 0.0
  %3510 = vmatprep.subr.mxu0 0.0
  %3511 = vmatpush1.msra.mxu0 0.0
  %3512 = vmatprep.subr.mxu0 0.0
  %3513 = vmatpush1.msra.mxu0 0.0
  %3514 = vmatprep.subr.mxu0 0.0
  %3515 = vmatpush1.msra.mxu0 0.0
  %3516 = vmatprep.subr.mxu0 0.0
  %3517 = vmatpush1.msra.mxu0 0.0
  %3518 = vmatprep.subr.mxu0 0.0
  %3519 = vmatpush1.msra.mxu0 0.0
  %3520 = vmatprep.subr.mxu0 0.0
  %3521 = vmatpush1.msra.mxu0 0.0
  %3522 = vmatprep.subr.mxu0 0.0
  %3523 = vmatpush1.msra.mxu0 0.0
  %3524 = vmatprep.mubr.f32.mxu0 0.0
  %3525 = vmatmul.mubr.f32.gmra.mrb[0].mxu0 %v3455
  %v3526 = vpop.f32.mrb[0].mxu0
  %v3527 = vadd.f32 %v3451, %v3526
  %v3528 = vpop.f32.mrb[0].mxu0
  %3529 = vmatprep.mubr.f32.mxu0 0.0
  %3530 = vmatmul.mubr.f32.gmra.mrb[0].mxu0 %v3458
  %v3531 = vpop.f32.mrb[0].mxu0
  %v3532 = vadd.f32 %v3451, %v3531
  %v3533 = vpop.f32.mrb[0].mxu0
  %3534 = vdwg.mxu0
  %v3535 = vadd.f32 %v3356, %v3527
  %v3536 = vadd.f32 %v3357, %v3532
  %v3537 = vsel %vm83, %v3535, 0.0
  %3538 = vadd.xlane.f32.xlu0 %v3537
  %v3539 = vpop.xlane.xlu0 %3538
  %v3540 = vsel %vm83, %v3536, 0.0
  %3541 = vadd.xlane.f32.xlu0 %v3540
  %v3542 = vpop.xlane.xlu0 %3541
  %v3543 = vmul.f32 %v3539, %v1111
  %v3544 = vmul.f32 %v3542, %v1111
  %v3545 = vsub.f32 %v3535, %v3543
  %v3546 = vsub.f32 %v3536, %v3544
  %v3547 = vmul.f32 %v3545, %v3545
  %v3548 = vmul.f32 %v3546, %v3546
  %v3549 = vsel %vm83, %v3547, 0.0
  %3550 = vadd.xlane.f32.xlu0 %v3549
  %v3551 = vpop.xlane.xlu0 %3550
  %v3552 = vsel %vm83, %v3548, 0.0
  %3553 = vadd.xlane.f32.xlu0 %v3552
  %v3554 = vpop.xlane.xlu0 %3553
  %v3555 = vmul.f32 %v3551, %v1111
  %v3556 = vmul.f32 %v3554, %v1111
  %v3557 = vadd.f32 %v3555, 1e-05
  %v3558 = vadd.f32 %v3556, 1e-05
  %v3559 = vrsqrt.pop %v3557
  %v3560 = vrsqrt.pop %v3558
  %v3561 = vmul.f32 %v3545, %v3559
  %v3562 = vmul.f32 %v3546, %v3560
  %v3563 = vlaneseq
  %v3564 = vshrl.u32 %v3563, 7
  %v3565 = vsub.s32 6, %v3564
  %v3566 = vrot.slane %v78, %v3565
  %v3567 = vmul.f32 %v3561, %v3566
  %v3568 = vmul.f32 %v3562, %v3566
  %v3569 = vlaneseq
  %v3570 = vshrl.u32 %v3569, 7
  %v3571 = vsub.s32 7, %v3570
  %v3572 = vrot.slane %v78, %v3571
  %v3573 = vadd.f32 %v3567, %v3572
  %v3574 = vadd.f32 %v3568, %v3572
  %3575 = vst.msk [vmem:[%s12] sm:$0xff] %vm83, %v3573
  %3576 = vst.msk [vmem:[%s12 + $0x8] sm:$0xff] %vm83, %v3574
  // Predicated region
  $region50: #{decoder_layer.1} parent=0 // pred_check
    _
  $region51: #{decoder_layer.1} parent=0 // pred_check_branch
    %3578 = sbr.rel (0) target = $region53
  $region52: #{decoder_layer.1} parent=0 // pred_region
    _
  $region53: #{decoder_layer.1} parent=0 // pred_fallthru
    _
  // Predicated region
  $region54: #{decoder_layer.1} parent=0 // pred_check
    _
  $region55: #{decoder_layer.1} parent=0 // pred_check_branch
    %3580 = sbr.rel (0) target = $region57
  $region56: #{decoder_layer.1} parent=0 // pred_region
    _
  $region57: #{decoder_layer.1} parent=0 // pred_fallthru
    _

</llo_original>
